<compile_context>
chip_gen: v5e
topology: v5e:2x2
jax: 0.10.0
libtpu: 0.0.40
codegen_flags: <defaults>
</compile_context>

<pallas_src>
import math

import jax
import jax.numpy as jnp
from jax.experimental import pallas as pl
from jax.experimental.pallas import tpu as pltpu

# ---------------- config (small synthetic BERT) ----------------
VOCAB = 100
TYPE_VOCAB = 2
MAX_POS = 16
H = 32            # hidden size
N_LAYERS = 2
N_HEADS = 4
DH = H // N_HEADS
INTER = 64        # intermediate (FFN) size
NUM_LABELS = 2
LN_EPS = 1e-12    # BERT LayerNorm eps
OUT_PAD = 128     # lane-dense logits slab width


# ---------------- in-kernel helpers ----------------
def _layernorm(x, gamma, beta):
    # torch.nn.LayerNorm semantics: biased variance over last dim, eps inside sqrt
    mean = jnp.mean(x, axis=-1, keepdims=True)
    var = jnp.mean((x - mean) ** 2, axis=-1, keepdims=True)
    inv = jax.lax.rsqrt(var + LN_EPS)
    return (x - mean) * inv * gamma + beta


def _gelu(x):
    # HF BERT default hidden_act = exact (erf) gelu
    return 0.5 * x * (1.0 + jax.lax.erf(x * (1.0 / math.sqrt(2.0))))


# ---------------- fused kernel: one batch-block (BB sequences) per grid step ----------------
def bert_fused_kernel(x_ref, m_ref,
                      eg_ref, eb_ref,
                      wq_ref, bq_ref, wk_ref, bk_ref, wv_ref, bv_ref,
                      wo_ref, bo_ref, g1_ref, b1_ref,
                      wi_ref, bi_ref, wf_ref, bf_ref, g2_ref, b2_ref,
                      wp_ref, bp_ref, wc_ref, bc_ref,
                      o_ref):
    bb, seq, hidden = x_ref.shape                     # (BB, S, H)
    n_layers = wq_ref.shape[0]
    n_heads = wq_ref.shape[1]
    dh = wq_ref.shape[3]
    rows = bb * seq
    scale = 1.0 / math.sqrt(dh)

    # Embedding LayerNorm on flattened (rows, H) activations.
    x = _layernorm(x_ref[...].reshape(rows, hidden), eg_ref[...], eb_ref[...])

    for li in range(n_layers):                        # static unroll (toy L)
        # ---- head-batched Q/K/V projections: (heads, rows, H) x (heads, H, dh) ----
        xb = jnp.broadcast_to(x.astype(jnp.bfloat16), (n_heads, rows, hidden))
        q3 = (jnp.einsum('hrj,hjd->hrd', xb, wq_ref[li],
                         preferred_element_type=jnp.float32) + bq_ref[li]).astype(jnp.bfloat16)
        k3 = (jnp.einsum('hrj,hjd->hrd', xb, wk_ref[li],
                         preferred_element_type=jnp.float32) + bk_ref[li]).astype(jnp.bfloat16)
        v3 = (jnp.einsum('hrj,hjd->hrd', xb, wv_ref[li],
                         preferred_element_type=jnp.float32) + bv_ref[li]).astype(jnp.bfloat16)

        # ---- self-attention per sequence (head axis batched inside the einsums) ----
        attn_list = []
        for b in range(bb):
            r0 = b * seq
            qb = q3[:, r0:r0 + seq, :]                # (heads, S, dh) bf16
            kb = k3[:, r0:r0 + seq, :]
            vb = v3[:, r0:r0 + seq, :]
            bias = jnp.reshape((1.0 - m_ref[b]) * -10000.0, (1, 1, seq))
            s = jnp.einsum('hqd,hkd->hqk', qb, kb,
                           preferred_element_type=jnp.float32) * scale + bias
            s = s - jnp.max(s, axis=-1, keepdims=True)
            p = jnp.exp(s)
            p = p * pl.reciprocal(jnp.sum(p, axis=-1, keepdims=True), approx=True)
            ctx = jnp.einsum('hqk,hkd->hqd', p.astype(jnp.bfloat16), vb,
                             preferred_element_type=jnp.float32)      # (heads, S, dh)
            # Output projection done head-wise + summed (== concat(ctx) @ Wo).
            ao = jnp.einsum('hqd,hdo->hqo', ctx.astype(jnp.bfloat16), wo_ref[li],
                            preferred_element_type=jnp.float32)       # (heads, S, H)
            attn_b = ao[0]
            for hh in range(1, n_heads):
                attn_b = attn_b + ao[hh]
            attn_list.append(attn_b)
        attn = attn_list[0] if bb == 1 else jnp.concatenate(attn_list, axis=0)
        attn = attn + bo_ref[li]

        # ---- residual + LayerNorm, FFN (flattened rows, bf16 matmuls / f32 acc) ----
        h1 = _layernorm(attn + x, g1_ref[li], b1_ref[li])
        inter = _gelu(jnp.dot(h1.astype(jnp.bfloat16), wi_ref[li],
                              preferred_element_type=jnp.float32) + bi_ref[li])
        ffn = jnp.dot(inter.astype(jnp.bfloat16), wf_ref[li],
                      preferred_element_type=jnp.float32) + bf_ref[li]
        x = _layernorm(ffn + h1, g2_ref[li], b2_ref[li])

    # ---- pooler ([CLS] row of each sequence) + classifier (lane-dense, 128 wide) ----
    if bb == 1:
        cls = x[0:1, :]
    else:
        cls = jnp.concatenate([x[b * seq:b * seq + 1, :] for b in range(bb)], axis=0)
    pooled = jnp.tanh(jnp.dot(cls, wp_ref[...],
                              preferred_element_type=jnp.float32) + bp_ref[...])
    o_ref[0] = jnp.dot(pooled, wc_ref[...],
                       preferred_element_type=jnp.float32) + bc_ref[...]   # (BB, 128)


# ---------------- pallas_call wrapper ----------------
def _const_spec(arr):
    nd = arr.ndim
    return pl.BlockSpec(arr.shape, lambda i, _nd=nd: (0,) * _nd)


def bert_binary_classifier_forward(params, input_ids, attention_mask=None):
    # Returns classification logits of shape (B, NUM_LABELS).
    # TODO(synk): HF returns a SequenceClassifierOutput dataclass; we return logits only.
    B, S = input_ids.shape
    if attention_mask is None:
        attention_mask = jnp.ones((B, S), jnp.float32)
    attention_mask = attention_mask.astype(jnp.float32)

    # Embedding gathers stay in plain JAX (glue); sum of word + position + token-type.
    we = jnp.take(params["word_emb"], input_ids, axis=0)                    # (B,S,H)
    pe = params["pos_emb"][:S][None, :, :]                                  # (1,S,H)
    te = jnp.take(params["type_emb"],
                  jnp.zeros((B, S), jnp.int32), axis=0)                     # (B,S,H)
    emb_sum = (we + pe + te).astype(jnp.float32)
    mask3 = attention_mask.reshape(B, 1, S)

    # Batch blocking: <= 2 parallel grid steps (dual-TC v7x); BB sequences per step.
    n_blocks = 2 if B >= 2 else 1
    BB = -(-B // n_blocks)
    B_pad = BB * n_blocks
    if B_pad != B:
        emb_sum = jnp.pad(emb_sum, ((0, B_pad - B), (0, 0), (0, 0)))
        mask3 = jnp.pad(mask3, ((0, B_pad - B), (0, 0), (0, 0)))

    layers = params["layers"]

    def stack(name, dtype=jnp.float32):
        return jnp.stack([l[name] for l in layers], axis=0).astype(dtype)

    def head_w(name):   # (H, H) -> (L, heads, H, dh), bf16
        return jnp.stack(
            [jnp.transpose(l[name].reshape(H, N_HEADS, DH), (1, 0, 2)) for l in layers],
            axis=0).astype(jnp.bfloat16)

    def head_b(name):   # (1, H) -> (L, heads, 1, dh), f32
        return jnp.stack(
            [jnp.transpose(l[name].reshape(1, N_HEADS, DH), (1, 0, 2)) for l in layers],
            axis=0)

    wq = head_w("wq"); bq = head_b("bq")
    wk = head_w("wk"); bk = head_b("bk")
    wv = head_w("wv"); bv = head_b("bv")
    wo = jnp.stack([l["wo"].reshape(N_HEADS, DH, H) for l in layers],
                   axis=0).astype(jnp.bfloat16)                             # (L,heads,dh,H)
    bo = stack("bo")
    g1 = stack("g1"); b1 = stack("b1")
    wi = stack("wi", jnp.bfloat16); bi = stack("bi")
    wf = stack("wf", jnp.bfloat16); bf = stack("bf")
    g2 = stack("g2"); b2 = stack("b2")

    # Lane-dense classifier head: zero-pad (H, 2) -> (H, 128) so the final store is
    # a full-width vst; slice back to NUM_LABELS outside the kernel.
    wc_pad = jnp.zeros((H, OUT_PAD), jnp.float32).at[:, :NUM_LABELS].set(params["wc"])
    bc_pad = jnp.zeros((1, OUT_PAD), jnp.float32).at[:, :NUM_LABELS].set(params["bc"])

    weights = [params["emb_gamma"], params["emb_beta"],
               wq, bq, wk, bk, wv, bv, wo, bo, g1, b1,
               wi, bi, wf, bf, g2, b2,
               params["wp"], params["bp"], wc_pad, bc_pad]
    w_specs = [_const_spec(w) for w in weights]

    out = pl.pallas_call(
        bert_fused_kernel,
        out_shape=jax.ShapeDtypeStruct((n_blocks, BB, OUT_PAD), jnp.float32),
        grid_spec=pltpu.PrefetchScalarGridSpec(
            num_scalar_prefetch=0,
            grid=(n_blocks,),
            in_specs=[pl.BlockSpec((BB, S, H), lambda i: (i, 0, 0)),
                      pl.BlockSpec((BB, 1, S), lambda i: (i, 0, 0))] + w_specs,
            out_specs=pl.BlockSpec((1, BB, OUT_PAD), lambda i: (i, 0, 0))),
        compiler_params=pltpu.CompilerParams(
            dimension_semantics=("parallel",),
            vmem_limit_bytes=32 * 1024 * 1024),
    )(emb_sum, mask3, *weights)
    return out.reshape(B_pad, OUT_PAD)[:B, :NUM_LABELS]


# ---------------- parameters ----------------
def init_params(key):
    def dense(k, fan_in, fan_out):
        w = jax.random.normal(k, (fan_in, fan_out), jnp.float32) * 0.02
        b = jnp.zeros((1, fan_out), jnp.float32)
        return w, b

    keys = jax.random.split(key, 4 + N_LAYERS)
    params = {
        "word_emb": jax.random.normal(keys[0], (VOCAB, H), jnp.float32) * 0.02,
        "pos_emb": jax.random.normal(keys[1], (MAX_POS, H), jnp.float32) * 0.02,
        "type_emb": jax.random.normal(keys[2], (TYPE_VOCAB, H), jnp.float32) * 0.02,
        "emb_gamma": jnp.ones((1, H), jnp.float32),
        "emb_beta": jnp.zeros((1, H), jnp.float32),
        "layers": [],
    }
    for li in range(N_LAYERS):
        lk = jax.random.split(keys[3 + li], 6)
        wq, bq = dense(lk[0], H, H)
        wk, bk = dense(lk[1], H, H)
        wv, bv = dense(lk[2], H, H)
        wo, bo = dense(lk[3], H, H)
        wi, bi = dense(lk[4], H, INTER)
        wf, bf = dense(lk[5], INTER, H)
        params["layers"].append(dict(
            wq=wq, bq=bq, wk=wk, bk=bk, wv=wv, bv=bv, wo=wo, bo=bo,
            g1=jnp.ones((1, H), jnp.float32), b1=jnp.zeros((1, H), jnp.float32),
            wi=wi, bi=bi, wf=wf, bf=bf,
            g2=jnp.ones((1, H), jnp.float32), b2=jnp.zeros((1, H), jnp.float32)))
    pk = jax.random.split(keys[-1], 2)
    params["wp"], params["bp"] = dense(pk[0], H, H)
    params["wc"], params["bc"] = dense(pk[1], H, NUM_LABELS)
    return params


if __name__ == "__main__":
    key = jax.random.PRNGKey(0)
    pkey, ikey = jax.random.split(key)
    params = init_params(pkey)

    B, S = 2, 8
    input_ids = jax.random.randint(ikey, (B, S), 0, VOCAB, dtype=jnp.int32)
    attention_mask = jnp.array([[1, 1, 1, 1, 1, 1, 1, 1],
                                [1, 1, 1, 1, 1, 1, 0, 0]], jnp.float32)

    forward = jax.jit(bert_binary_classifier_forward)
    logits = forward(params, input_ids, attention_mask)
    logits = jax.block_until_ready(logits)
    assert logits.shape == (B, NUM_LABELS)
    assert bool(jnp.all(jnp.isfinite(logits)))
    print("KERNEL_OK")
</pallas_src>

<mosaic_0001>
module attributes {stable_mosaic.version = 11 : i64} {
  func.func @bert_fused_kernel(%arg0: i32, %arg1: memref<1x8x32xf32, #tpu.memory_space<vmem>>, %arg2: memref<1x1x8xf32, #tpu.memory_space<vmem>>, %arg3: memref<1x32xf32, #tpu.memory_space<vmem>>, %arg4: memref<1x32xf32, #tpu.memory_space<vmem>>, %arg5: memref<2x4x32x8xbf16, #tpu.memory_space<vmem>>, %arg6: memref<2x4x1x8xf32, #tpu.memory_space<vmem>>, %arg7: memref<2x4x32x8xbf16, #tpu.memory_space<vmem>>, %arg8: memref<2x4x1x8xf32, #tpu.memory_space<vmem>>, %arg9: memref<2x4x32x8xbf16, #tpu.memory_space<vmem>>, %arg10: memref<2x4x1x8xf32, #tpu.memory_space<vmem>>, %arg11: memref<2x4x8x32xbf16, #tpu.memory_space<vmem>>, %arg12: memref<2x1x32xf32, #tpu.memory_space<vmem>>, %arg13: memref<2x1x32xf32, #tpu.memory_space<vmem>>, %arg14: memref<2x1x32xf32, #tpu.memory_space<vmem>>, %arg15: memref<2x32x64xbf16, #tpu.memory_space<vmem>>, %arg16: memref<2x1x64xf32, #tpu.memory_space<vmem>>, %arg17: memref<2x64x32xbf16, #tpu.memory_space<vmem>>, %arg18: memref<2x1x32xf32, #tpu.memory_space<vmem>>, %arg19: memref<2x1x32xf32, #tpu.memory_space<vmem>>, %arg20: memref<2x1x32xf32, #tpu.memory_space<vmem>>, %arg21: memref<32x32xf32, #tpu.memory_space<vmem>>, %arg22: memref<1x32xf32, #tpu.memory_space<vmem>>, %arg23: memref<32x128xf32, #tpu.memory_space<vmem>>, %arg24: memref<1x128xf32, #tpu.memory_space<vmem>>, %arg25: memref<1x1x128xf32, #tpu.memory_space<vmem>>) attributes {dimension_semantics = [#tpu.dimension_semantics<parallel>], iteration_bounds = array<i64: 2>, scalar_prefetch = 0 : i64, scratch_operands = 0 : i64, tpu.core_type = #tpu.core_type<tc>, window_params = [{transform_indices = @transform_0, window_bounds = array<i64: 1, 8, 32>}, {transform_indices = @transform_1, window_bounds = array<i64: 1, 1, 8>}, {pipeline_mode = #tpu.pipeline_mode<synchronous>, transform_indices = @transform_2, window_bounds = array<i64: 1, 32>}, {pipeline_mode = #tpu.pipeline_mode<synchronous>, transform_indices = @transform_3, window_bounds = array<i64: 1, 32>}, {pipeline_mode = #tpu.pipeline_mode<synchronous>, transform_indices = @transform_4, window_bounds = array<i64: 2, 4, 32, 8>}, {pipeline_mode = #tpu.pipeline_mode<synchronous>, transform_indices = @transform_5, window_bounds = array<i64: 2, 4, 1, 8>}, {pipeline_mode = #tpu.pipeline_mode<synchronous>, transform_indices = @transform_6, window_bounds = array<i64: 2, 4, 32, 8>}, {pipeline_mode = #tpu.pipeline_mode<synchronous>, transform_indices = @transform_7, window_bounds = array<i64: 2, 4, 1, 8>}, {pipeline_mode = #tpu.pipeline_mode<synchronous>, transform_indices = @transform_8, window_bounds = array<i64: 2, 4, 32, 8>}, {pipeline_mode = #tpu.pipeline_mode<synchronous>, transform_indices = @transform_9, window_bounds = array<i64: 2, 4, 1, 8>}, {pipeline_mode = #tpu.pipeline_mode<synchronous>, transform_indices = @transform_10, window_bounds = array<i64: 2, 4, 8, 32>}, {pipeline_mode = #tpu.pipeline_mode<synchronous>, transform_indices = @transform_11, window_bounds = array<i64: 2, 1, 32>}, {pipeline_mode = #tpu.pipeline_mode<synchronous>, transform_indices = @transform_12, window_bounds = array<i64: 2, 1, 32>}, {pipeline_mode = #tpu.pipeline_mode<synchronous>, transform_indices = @transform_13, window_bounds = array<i64: 2, 1, 32>}, {pipeline_mode = #tpu.pipeline_mode<synchronous>, transform_indices = @transform_14, window_bounds = array<i64: 2, 32, 64>}, {pipeline_mode = #tpu.pipeline_mode<synchronous>, transform_indices = @transform_15, window_bounds = array<i64: 2, 1, 64>}, {pipeline_mode = #tpu.pipeline_mode<synchronous>, transform_indices = @transform_16, window_bounds = array<i64: 2, 64, 32>}, {pipeline_mode = #tpu.pipeline_mode<synchronous>, transform_indices = @transform_17, window_bounds = array<i64: 2, 1, 32>}, {pipeline_mode = #tpu.pipeline_mode<synchronous>, transform_indices = @transform_18, window_bounds = array<i64: 2, 1, 32>}, {pipeline_mode = #tpu.pipeline_mode<synchronous>, transform_indices = @transform_19, window_bounds = array<i64: 2, 1, 32>}, {pipeline_mode = #tpu.pipeline_mode<synchronous>, transform_indices = @transform_20, window_bounds = array<i64: 32, 32>}, {pipeline_mode = #tpu.pipeline_mode<synchronous>, transform_indices = @transform_21, window_bounds = array<i64: 1, 32>}, {pipeline_mode = #tpu.pipeline_mode<synchronous>, transform_indices = @transform_22, window_bounds = array<i64: 32, 128>}, {pipeline_mode = #tpu.pipeline_mode<synchronous>, transform_indices = @transform_23, window_bounds = array<i64: 1, 128>}, {transform_indices = @transform_24, window_bounds = array<i64: 1, 1, 128>}]} {
    %c0 = arith.constant 0 : index
    %c0_0 = arith.constant 0 : index
    %c0_1 = arith.constant 0 : index
    %0 = vector.load %arg1[%c0, %c0_0, %c0_1] : memref<1x8x32xf32, #tpu.memory_space<vmem>>, vector<1x8x32xf32>
    %1 = vector.shape_cast %0 : vector<1x8x32xf32> to vector<8x32xf32>
    %c0_2 = arith.constant 0 : index
    %c0_3 = arith.constant 0 : index
    %2 = vector.load %arg3[%c0_2, %c0_3] : memref<1x32xf32, #tpu.memory_space<vmem>>, vector<1x32xf32>
    %c0_4 = arith.constant 0 : index
    %c0_5 = arith.constant 0 : index
    %3 = vector.load %arg4[%c0_4, %c0_5] : memref<1x32xf32, #tpu.memory_space<vmem>>, vector<1x32xf32>
    %cst = arith.constant dense<0.000000e+00> : vector<8xf32>
    %4 = vector.multi_reduction <add>, %1, %cst [1] : vector<8x32xf32> to vector<8xf32>
    %5 = vector.shape_cast %4 : vector<8xf32> to vector<8x1xf32>
    %cst_6 = arith.constant 3.200000e+01 : f32
    %6 = vector.broadcast %cst_6 : f32 to vector<8x1xf32>
    %7 = arith.divf %5, %6 : vector<8x1xf32>
    %8 = vector.broadcast %7 : vector<8x1xf32> to vector<8x32xf32>
    %9 = arith.subf %1, %8 : vector<8x32xf32>
    %10 = arith.mulf %9, %9 : vector<8x32xf32>
    %cst_7 = arith.constant dense<0.000000e+00> : vector<8xf32>
    %11 = vector.multi_reduction <add>, %10, %cst_7 [1] : vector<8x32xf32> to vector<8xf32>
    %12 = vector.shape_cast %11 : vector<8xf32> to vector<8x1xf32>
    %cst_8 = arith.constant 3.200000e+01 : f32
    %13 = vector.broadcast %cst_8 : f32 to vector<8x1xf32>
    %14 = arith.divf %12, %13 : vector<8x1xf32>
    %cst_9 = arith.constant 9.99999996E-13 : f32
    %15 = vector.broadcast %cst_9 : f32 to vector<8x1xf32>
    %16 = arith.addf %14, %15 : vector<8x1xf32>
    %17 = math.rsqrt %16 : vector<8x1xf32>
    %18 = vector.broadcast %7 : vector<8x1xf32> to vector<8x32xf32>
    %19 = arith.subf %1, %18 : vector<8x32xf32>
    %20 = vector.broadcast %17 : vector<8x1xf32> to vector<8x32xf32>
    %21 = arith.mulf %19, %20 : vector<8x32xf32>
    %22 = vector.broadcast %2 : vector<1x32xf32> to vector<8x32xf32>
    %23 = arith.mulf %21, %22 : vector<8x32xf32>
    %24 = vector.broadcast %3 : vector<1x32xf32> to vector<8x32xf32>
    %25 = arith.addf %23, %24 : vector<8x32xf32>
    %26 = arith.truncf %25 : vector<8x32xf32> to vector<8x32xbf16>
    %27 = vector.shape_cast %26 : vector<8x32xbf16> to vector<1x8x32xbf16>
    %28 = vector.broadcast %27 : vector<1x8x32xbf16> to vector<4x8x32xbf16>
    %c0_10 = arith.constant 0 : index
    %c0_11 = arith.constant 0 : index
    %c0_12 = arith.constant 0 : index
    %c0_13 = arith.constant 0 : index
    %29 = vector.load %arg5[%c0_10, %c0_11, %c0_12, %c0_13] : memref<2x4x32x8xbf16, #tpu.memory_space<vmem>>, vector<1x4x32x8xbf16>
    %30 = vector.shape_cast %29 : vector<1x4x32x8xbf16> to vector<4x32x8xbf16>
    "tpu.trace_start"() <{level = 10 : i32, message = "hrj,hjd->hrd"}> : () -> ()
    %cst_14 = arith.constant dense<0.000000e+00> : vector<4x8x8xf32>
    %31 = tpu.matmul %28, %30, %cst_14 {dimension_numbers = #tpu.dot_dimension_numbers<[2], [1], [1], [2], [0, 0, 0, 1, 1, 2], [0], [0]>} : vector<4x8x32xbf16>, vector<4x32x8xbf16>, vector<4x8x8xf32> -> vector<4x8x8xf32>
    "tpu.trace_stop"() : () -> ()
    %c0_15 = arith.constant 0 : index
    %c0_16 = arith.constant 0 : index
    %c0_17 = arith.constant 0 : index
    %c0_18 = arith.constant 0 : index
    %32 = vector.load %arg6[%c0_15, %c0_16, %c0_17, %c0_18] : memref<2x4x1x8xf32, #tpu.memory_space<vmem>>, vector<1x4x1x8xf32>
    %33 = vector.shape_cast %32 : vector<1x4x1x8xf32> to vector<4x1x8xf32>
    %34 = vector.broadcast %33 : vector<4x1x8xf32> to vector<4x8x8xf32>
    %35 = arith.addf %31, %34 : vector<4x8x8xf32>
    %36 = arith.truncf %35 : vector<4x8x8xf32> to vector<4x8x8xbf16>
    %c0_19 = arith.constant 0 : index
    %c0_20 = arith.constant 0 : index
    %c0_21 = arith.constant 0 : index
    %c0_22 = arith.constant 0 : index
    %37 = vector.load %arg7[%c0_19, %c0_20, %c0_21, %c0_22] : memref<2x4x32x8xbf16, #tpu.memory_space<vmem>>, vector<1x4x32x8xbf16>
    %38 = vector.shape_cast %37 : vector<1x4x32x8xbf16> to vector<4x32x8xbf16>
    "tpu.trace_start"() <{level = 10 : i32, message = "hrj,hjd->hrd"}> : () -> ()
    %cst_23 = arith.constant dense<0.000000e+00> : vector<4x8x8xf32>
    %39 = tpu.matmul %28, %38, %cst_23 {dimension_numbers = #tpu.dot_dimension_numbers<[2], [1], [1], [2], [0, 0, 0, 1, 1, 2], [0], [0]>} : vector<4x8x32xbf16>, vector<4x32x8xbf16>, vector<4x8x8xf32> -> vector<4x8x8xf32>
    "tpu.trace_stop"() : () -> ()
    %c0_24 = arith.constant 0 : index
    %c0_25 = arith.constant 0 : index
    %c0_26 = arith.constant 0 : index
    %c0_27 = arith.constant 0 : index
    %40 = vector.load %arg8[%c0_24, %c0_25, %c0_26, %c0_27] : memref<2x4x1x8xf32, #tpu.memory_space<vmem>>, vector<1x4x1x8xf32>
    %41 = vector.shape_cast %40 : vector<1x4x1x8xf32> to vector<4x1x8xf32>
    %42 = vector.broadcast %41 : vector<4x1x8xf32> to vector<4x8x8xf32>
    %43 = arith.addf %39, %42 : vector<4x8x8xf32>
    %44 = arith.truncf %43 : vector<4x8x8xf32> to vector<4x8x8xbf16>
    %c0_28 = arith.constant 0 : index
    %c0_29 = arith.constant 0 : index
    %c0_30 = arith.constant 0 : index
    %c0_31 = arith.constant 0 : index
    %45 = vector.load %arg9[%c0_28, %c0_29, %c0_30, %c0_31] : memref<2x4x32x8xbf16, #tpu.memory_space<vmem>>, vector<1x4x32x8xbf16>
    %46 = vector.shape_cast %45 : vector<1x4x32x8xbf16> to vector<4x32x8xbf16>
    "tpu.trace_start"() <{level = 10 : i32, message = "hrj,hjd->hrd"}> : () -> ()
    %cst_32 = arith.constant dense<0.000000e+00> : vector<4x8x8xf32>
    %47 = tpu.matmul %28, %46, %cst_32 {dimension_numbers = #tpu.dot_dimension_numbers<[2], [1], [1], [2], [0, 0, 0, 1, 1, 2], [0], [0]>} : vector<4x8x32xbf16>, vector<4x32x8xbf16>, vector<4x8x8xf32> -> vector<4x8x8xf32>
    "tpu.trace_stop"() : () -> ()
    %c0_33 = arith.constant 0 : index
    %c0_34 = arith.constant 0 : index
    %c0_35 = arith.constant 0 : index
    %c0_36 = arith.constant 0 : index
    %48 = vector.load %arg10[%c0_33, %c0_34, %c0_35, %c0_36] : memref<2x4x1x8xf32, #tpu.memory_space<vmem>>, vector<1x4x1x8xf32>
    %49 = vector.shape_cast %48 : vector<1x4x1x8xf32> to vector<4x1x8xf32>
    %50 = vector.broadcast %49 : vector<4x1x8xf32> to vector<4x8x8xf32>
    %51 = arith.addf %47, %50 : vector<4x8x8xf32>
    %52 = arith.truncf %51 : vector<4x8x8xf32> to vector<4x8x8xbf16>
    %c0_37 = arith.constant 0 : index
    %c0_38 = arith.constant 0 : index
    %c0_39 = arith.constant 0 : index
    %53 = vector.load %arg2[%c0_37, %c0_38, %c0_39] : memref<1x1x8xf32, #tpu.memory_space<vmem>>, vector<1x1x8xf32>
    %54 = vector.shape_cast %53 : vector<1x1x8xf32> to vector<1x8xf32>
    %cst_40 = arith.constant 1.000000e+00 : f32
    %55 = vector.broadcast %cst_40 : f32 to vector<1x8xf32>
    %56 = arith.subf %55, %54 : vector<1x8xf32>
    %cst_41 = arith.constant -1.000000e+04 : f32
    %57 = vector.broadcast %cst_41 : f32 to vector<1x8xf32>
    %58 = arith.mulf %56, %57 : vector<1x8xf32>
    %59 = vector.shape_cast %58 : vector<1x8xf32> to vector<1x1x8xf32>
    "tpu.trace_start"() <{level = 10 : i32, message = "hqd,hkd->hqk"}> : () -> ()
    %cst_42 = arith.constant dense<0.000000e+00> : vector<4x8x8xf32>
    %60 = tpu.matmul %36, %44, %cst_42 {dimension_numbers = #tpu.dot_dimension_numbers<[2], [2], [1], [1], [0, 0, 0, 1, 1, 1], [0], [0]>} : vector<4x8x8xbf16>, vector<4x8x8xbf16>, vector<4x8x8xf32> -> vector<4x8x8xf32>
    "tpu.trace_stop"() : () -> ()
    %cst_43 = arith.constant 0.353553385 : f32
    %61 = vector.broadcast %cst_43 : f32 to vector<4x8x8xf32>
    %62 = arith.mulf %60, %61 : vector<4x8x8xf32>
    %63 = vector.broadcast %59 : vector<1x1x8xf32> to vector<4x8x8xf32>
    %64 = arith.addf %62, %63 : vector<4x8x8xf32>
    %cst_44 = arith.constant dense<0xFF800000> : vector<4x8xf32>
    %65 = vector.multi_reduction <maximumf>, %64, %cst_44 [2] : vector<4x8x8xf32> to vector<4x8xf32>
    %66 = vector.shape_cast %65 : vector<4x8xf32> to vector<4x8x1xf32>
    %67 = vector.broadcast %66 : vector<4x8x1xf32> to vector<4x8x8xf32>
    %68 = arith.subf %64, %67 : vector<4x8x8xf32>
    %69 = math.exp %68 : vector<4x8x8xf32>
    %cst_45 = arith.constant dense<0.000000e+00> : vector<4x8xf32>
    %70 = vector.multi_reduction <add>, %69, %cst_45 [2] : vector<4x8x8xf32> to vector<4x8xf32>
    %71 = vector.shape_cast %70 : vector<4x8xf32> to vector<4x8x1xf32>
    %72 = tpu.reciprocal %71 {approx = true} : vector<4x8x1xf32> -> vector<4x8x1xf32>
    %73 = vector.broadcast %72 : vector<4x8x1xf32> to vector<4x8x8xf32>
    %74 = arith.mulf %69, %73 : vector<4x8x8xf32>
    %75 = arith.truncf %74 : vector<4x8x8xf32> to vector<4x8x8xbf16>
    "tpu.trace_start"() <{level = 10 : i32, message = "hqk,hkd->hqd"}> : () -> ()
    %cst_46 = arith.constant dense<0.000000e+00> : vector<4x8x8xf32>
    %76 = tpu.matmul %75, %52, %cst_46 {dimension_numbers = #tpu.dot_dimension_numbers<[2], [1], [1], [2], [0, 0, 0, 1, 1, 2], [0], [0]>} : vector<4x8x8xbf16>, vector<4x8x8xbf16>, vector<4x8x8xf32> -> vector<4x8x8xf32>
    "tpu.trace_stop"() : () -> ()
    %77 = arith.truncf %76 : vector<4x8x8xf32> to vector<4x8x8xbf16>
    %c0_47 = arith.constant 0 : index
    %c0_48 = arith.constant 0 : index
    %c0_49 = arith.constant 0 : index
    %c0_50 = arith.constant 0 : index
    %78 = vector.load %arg11[%c0_47, %c0_48, %c0_49, %c0_50] : memref<2x4x8x32xbf16, #tpu.memory_space<vmem>>, vector<1x4x8x32xbf16>
    %79 = vector.shape_cast %78 : vector<1x4x8x32xbf16> to vector<4x8x32xbf16>
    "tpu.trace_start"() <{level = 10 : i32, message = "hqd,hdo->hqo"}> : () -> ()
    %cst_51 = arith.constant dense<0.000000e+00> : vector<4x8x32xf32>
    %80 = tpu.matmul %77, %79, %cst_51 {dimension_numbers = #tpu.dot_dimension_numbers<[2], [1], [1], [2], [0, 0, 0, 1, 1, 2], [0], [0]>} : vector<4x8x8xbf16>, vector<4x8x32xbf16>, vector<4x8x32xf32> -> vector<4x8x32xf32>
    "tpu.trace_stop"() : () -> ()
    %81 = vector.extract_strided_slice %80 {offsets = [0, 0, 0], sizes = [1, 8, 32], strides = [1, 1, 1]} : vector<4x8x32xf32> to vector<1x8x32xf32>
    %82 = vector.shape_cast %81 : vector<1x8x32xf32> to vector<8x32xf32>
    %83 = vector.extract_strided_slice %80 {offsets = [1, 0, 0], sizes = [1, 8, 32], strides = [1, 1, 1]} : vector<4x8x32xf32> to vector<1x8x32xf32>
    %84 = vector.shape_cast %83 : vector<1x8x32xf32> to vector<8x32xf32>
    %85 = arith.addf %82, %84 : vector<8x32xf32>
    %86 = vector.extract_strided_slice %80 {offsets = [2, 0, 0], sizes = [1, 8, 32], strides = [1, 1, 1]} : vector<4x8x32xf32> to vector<1x8x32xf32>
    %87 = vector.shape_cast %86 : vector<1x8x32xf32> to vector<8x32xf32>
    %88 = arith.addf %85, %87 : vector<8x32xf32>
    %89 = vector.extract_strided_slice %80 {offsets = [3, 0, 0], sizes = [1, 8, 32], strides = [1, 1, 1]} : vector<4x8x32xf32> to vector<1x8x32xf32>
    %90 = vector.shape_cast %89 : vector<1x8x32xf32> to vector<8x32xf32>
    %91 = arith.addf %88, %90 : vector<8x32xf32>
    %c0_52 = arith.constant 0 : index
    %c0_53 = arith.constant 0 : index
    %c0_54 = arith.constant 0 : index
    %92 = vector.load %arg12[%c0_52, %c0_53, %c0_54] : memref<2x1x32xf32, #tpu.memory_space<vmem>>, vector<1x1x32xf32>
    %93 = vector.shape_cast %92 : vector<1x1x32xf32> to vector<1x32xf32>
    %94 = vector.broadcast %93 : vector<1x32xf32> to vector<8x32xf32>
    %95 = arith.addf %91, %94 : vector<8x32xf32>
    %96 = arith.addf %95, %25 : vector<8x32xf32>
    %c0_55 = arith.constant 0 : index
    %c0_56 = arith.constant 0 : index
    %c0_57 = arith.constant 0 : index
    %97 = vector.load %arg13[%c0_55, %c0_56, %c0_57] : memref<2x1x32xf32, #tpu.memory_space<vmem>>, vector<1x1x32xf32>
    %98 = vector.shape_cast %97 : vector<1x1x32xf32> to vector<1x32xf32>
    %c0_58 = arith.constant 0 : index
    %c0_59 = arith.constant 0 : index
    %c0_60 = arith.constant 0 : index
    %99 = vector.load %arg14[%c0_58, %c0_59, %c0_60] : memref<2x1x32xf32, #tpu.memory_space<vmem>>, vector<1x1x32xf32>
    %100 = vector.shape_cast %99 : vector<1x1x32xf32> to vector<1x32xf32>
    %cst_61 = arith.constant dense<0.000000e+00> : vector<8xf32>
    %101 = vector.multi_reduction <add>, %96, %cst_61 [1] : vector<8x32xf32> to vector<8xf32>
    %102 = vector.shape_cast %101 : vector<8xf32> to vector<8x1xf32>
    %cst_62 = arith.constant 3.200000e+01 : f32
    %103 = vector.broadcast %cst_62 : f32 to vector<8x1xf32>
    %104 = arith.divf %102, %103 : vector<8x1xf32>
    %105 = vector.broadcast %104 : vector<8x1xf32> to vector<8x32xf32>
    %106 = arith.subf %96, %105 : vector<8x32xf32>
    %107 = arith.mulf %106, %106 : vector<8x32xf32>
    %cst_63 = arith.constant dense<0.000000e+00> : vector<8xf32>
    %108 = vector.multi_reduction <add>, %107, %cst_63 [1] : vector<8x32xf32> to vector<8xf32>
    %109 = vector.shape_cast %108 : vector<8xf32> to vector<8x1xf32>
    %cst_64 = arith.constant 3.200000e+01 : f32
    %110 = vector.broadcast %cst_64 : f32 to vector<8x1xf32>
    %111 = arith.divf %109, %110 : vector<8x1xf32>
    %cst_65 = arith.constant 9.99999996E-13 : f32
    %112 = vector.broadcast %cst_65 : f32 to vector<8x1xf32>
    %113 = arith.addf %111, %112 : vector<8x1xf32>
    %114 = math.rsqrt %113 : vector<8x1xf32>
    %115 = vector.broadcast %104 : vector<8x1xf32> to vector<8x32xf32>
    %116 = arith.subf %96, %115 : vector<8x32xf32>
    %117 = vector.broadcast %114 : vector<8x1xf32> to vector<8x32xf32>
    %118 = arith.mulf %116, %117 : vector<8x32xf32>
    %119 = vector.broadcast %98 : vector<1x32xf32> to vector<8x32xf32>
    %120 = arith.mulf %118, %119 : vector<8x32xf32>
    %121 = vector.broadcast %100 : vector<1x32xf32> to vector<8x32xf32>
    %122 = arith.addf %120, %121 : vector<8x32xf32>
    %123 = arith.truncf %122 : vector<8x32xf32> to vector<8x32xbf16>
    %c0_66 = arith.constant 0 : index
    %c0_67 = arith.constant 0 : index
    %c0_68 = arith.constant 0 : index
    %124 = vector.load %arg15[%c0_66, %c0_67, %c0_68] : memref<2x32x64xbf16, #tpu.memory_space<vmem>>, vector<1x32x64xbf16>
    %125 = vector.shape_cast %124 : vector<1x32x64xbf16> to vector<32x64xbf16>
    %cst_69 = arith.constant dense<0.000000e+00> : vector<8x64xf32>
    %126 = tpu.matmul %123, %125, %cst_69 {dimension_numbers = #tpu.dot_dimension_numbers<[1], [0], [0], [1], [0, 0, 1, 1], [], []>} : vector<8x32xbf16>, vector<32x64xbf16>, vector<8x64xf32> -> vector<8x64xf32>
    %c0_70 = arith.constant 0 : index
    %c0_71 = arith.constant 0 : index
    %c0_72 = arith.constant 0 : index
    %127 = vector.load %arg16[%c0_70, %c0_71, %c0_72] : memref<2x1x64xf32, #tpu.memory_space<vmem>>, vector<1x1x64xf32>
    %128 = vector.shape_cast %127 : vector<1x1x64xf32> to vector<1x64xf32>
    %129 = vector.broadcast %128 : vector<1x64xf32> to vector<8x64xf32>
    %130 = arith.addf %126, %129 : vector<8x64xf32>
    %cst_73 = arith.constant 5.000000e-01 : f32
    %131 = vector.broadcast %cst_73 : f32 to vector<8x64xf32>
    %132 = arith.mulf %131, %130 : vector<8x64xf32>
    %cst_74 = arith.constant 0.707106769 : f32
    %133 = vector.broadcast %cst_74 : f32 to vector<8x64xf32>
    %134 = arith.mulf %130, %133 : vector<8x64xf32>
    %135 = math.erf %134 : vector<8x64xf32>
    %cst_75 = arith.constant 1.000000e+00 : f32
    %136 = vector.broadcast %cst_75 : f32 to vector<8x64xf32>
    %137 = arith.addf %136, %135 : vector<8x64xf32>
    %138 = arith.mulf %132, %137 : vector<8x64xf32>
    %139 = arith.truncf %138 : vector<8x64xf32> to vector<8x64xbf16>
    %c0_76 = arith.constant 0 : index
    %c0_77 = arith.constant 0 : index
    %c0_78 = arith.constant 0 : index
    %140 = vector.load %arg17[%c0_76, %c0_77, %c0_78] : memref<2x64x32xbf16, #tpu.memory_space<vmem>>, vector<1x64x32xbf16>
    %141 = vector.shape_cast %140 : vector<1x64x32xbf16> to vector<64x32xbf16>
    %cst_79 = arith.constant dense<0.000000e+00> : vector<8x32xf32>
    %142 = tpu.matmul %139, %141, %cst_79 {dimension_numbers = #tpu.dot_dimension_numbers<[1], [0], [0], [1], [0, 0, 1, 1], [], []>} : vector<8x64xbf16>, vector<64x32xbf16>, vector<8x32xf32> -> vector<8x32xf32>
    %c0_80 = arith.constant 0 : index
    %c0_81 = arith.constant 0 : index
    %c0_82 = arith.constant 0 : index
    %143 = vector.load %arg18[%c0_80, %c0_81, %c0_82] : memref<2x1x32xf32, #tpu.memory_space<vmem>>, vector<1x1x32xf32>
    %144 = vector.shape_cast %143 : vector<1x1x32xf32> to vector<1x32xf32>
    %145 = vector.broadcast %144 : vector<1x32xf32> to vector<8x32xf32>
    %146 = arith.addf %142, %145 : vector<8x32xf32>
    %147 = arith.addf %146, %122 : vector<8x32xf32>
    %c0_83 = arith.constant 0 : index
    %c0_84 = arith.constant 0 : index
    %c0_85 = arith.constant 0 : index
    %148 = vector.load %arg19[%c0_83, %c0_84, %c0_85] : memref<2x1x32xf32, #tpu.memory_space<vmem>>, vector<1x1x32xf32>
    %149 = vector.shape_cast %148 : vector<1x1x32xf32> to vector<1x32xf32>
    %c0_86 = arith.constant 0 : index
    %c0_87 = arith.constant 0 : index
    %c0_88 = arith.constant 0 : index
    %150 = vector.load %arg20[%c0_86, %c0_87, %c0_88] : memref<2x1x32xf32, #tpu.memory_space<vmem>>, vector<1x1x32xf32>
    %151 = vector.shape_cast %150 : vector<1x1x32xf32> to vector<1x32xf32>
    %cst_89 = arith.constant dense<0.000000e+00> : vector<8xf32>
    %152 = vector.multi_reduction <add>, %147, %cst_89 [1] : vector<8x32xf32> to vector<8xf32>
    %153 = vector.shape_cast %152 : vector<8xf32> to vector<8x1xf32>
    %cst_90 = arith.constant 3.200000e+01 : f32
    %154 = vector.broadcast %cst_90 : f32 to vector<8x1xf32>
    %155 = arith.divf %153, %154 : vector<8x1xf32>
    %156 = vector.broadcast %155 : vector<8x1xf32> to vector<8x32xf32>
    %157 = arith.subf %147, %156 : vector<8x32xf32>
    %158 = arith.mulf %157, %157 : vector<8x32xf32>
    %cst_91 = arith.constant dense<0.000000e+00> : vector<8xf32>
    %159 = vector.multi_reduction <add>, %158, %cst_91 [1] : vector<8x32xf32> to vector<8xf32>
    %160 = vector.shape_cast %159 : vector<8xf32> to vector<8x1xf32>
    %cst_92 = arith.constant 3.200000e+01 : f32
    %161 = vector.broadcast %cst_92 : f32 to vector<8x1xf32>
    %162 = arith.divf %160, %161 : vector<8x1xf32>
    %cst_93 = arith.constant 9.99999996E-13 : f32
    %163 = vector.broadcast %cst_93 : f32 to vector<8x1xf32>
    %164 = arith.addf %162, %163 : vector<8x1xf32>
    %165 = math.rsqrt %164 : vector<8x1xf32>
    %166 = vector.broadcast %155 : vector<8x1xf32> to vector<8x32xf32>
    %167 = arith.subf %147, %166 : vector<8x32xf32>
    %168 = vector.broadcast %165 : vector<8x1xf32> to vector<8x32xf32>
    %169 = arith.mulf %167, %168 : vector<8x32xf32>
    %170 = vector.broadcast %149 : vector<1x32xf32> to vector<8x32xf32>
    %171 = arith.mulf %169, %170 : vector<8x32xf32>
    %172 = vector.broadcast %151 : vector<1x32xf32> to vector<8x32xf32>
    %173 = arith.addf %171, %172 : vector<8x32xf32>
    %174 = arith.truncf %173 : vector<8x32xf32> to vector<8x32xbf16>
    %175 = vector.shape_cast %174 : vector<8x32xbf16> to vector<1x8x32xbf16>
    %176 = vector.broadcast %175 : vector<1x8x32xbf16> to vector<4x8x32xbf16>
    %c1 = arith.constant 1 : index
    %c0_94 = arith.constant 0 : index
    %c0_95 = arith.constant 0 : index
    %c0_96 = arith.constant 0 : index
    %177 = vector.load %arg5[%c1, %c0_94, %c0_95, %c0_96] : memref<2x4x32x8xbf16, #tpu.memory_space<vmem>>, vector<1x4x32x8xbf16>
    %178 = vector.shape_cast %177 : vector<1x4x32x8xbf16> to vector<4x32x8xbf16>
    "tpu.trace_start"() <{level = 10 : i32, message = "hrj,hjd->hrd"}> : () -> ()
    %cst_97 = arith.constant dense<0.000000e+00> : vector<4x8x8xf32>
    %179 = tpu.matmul %176, %178, %cst_97 {dimension_numbers = #tpu.dot_dimension_numbers<[2], [1], [1], [2], [0, 0, 0, 1, 1, 2], [0], [0]>} : vector<4x8x32xbf16>, vector<4x32x8xbf16>, vector<4x8x8xf32> -> vector<4x8x8xf32>
    "tpu.trace_stop"() : () -> ()
    %c1_98 = arith.constant 1 : index
    %c0_99 = arith.constant 0 : index
    %c0_100 = arith.constant 0 : index
    %c0_101 = arith.constant 0 : index
    %180 = vector.load %arg6[%c1_98, %c0_99, %c0_100, %c0_101] : memref<2x4x1x8xf32, #tpu.memory_space<vmem>>, vector<1x4x1x8xf32>
    %181 = vector.shape_cast %180 : vector<1x4x1x8xf32> to vector<4x1x8xf32>
    %182 = vector.broadcast %181 : vector<4x1x8xf32> to vector<4x8x8xf32>
    %183 = arith.addf %179, %182 : vector<4x8x8xf32>
    %184 = arith.truncf %183 : vector<4x8x8xf32> to vector<4x8x8xbf16>
    %c1_102 = arith.constant 1 : index
    %c0_103 = arith.constant 0 : index
    %c0_104 = arith.constant 0 : index
    %c0_105 = arith.constant 0 : index
    %185 = vector.load %arg7[%c1_102, %c0_103, %c0_104, %c0_105] : memref<2x4x32x8xbf16, #tpu.memory_space<vmem>>, vector<1x4x32x8xbf16>
    %186 = vector.shape_cast %185 : vector<1x4x32x8xbf16> to vector<4x32x8xbf16>
    "tpu.trace_start"() <{level = 10 : i32, message = "hrj,hjd->hrd"}> : () -> ()
    %cst_106 = arith.constant dense<0.000000e+00> : vector<4x8x8xf32>
    %187 = tpu.matmul %176, %186, %cst_106 {dimension_numbers = #tpu.dot_dimension_numbers<[2], [1], [1], [2], [0, 0, 0, 1, 1, 2], [0], [0]>} : vector<4x8x32xbf16>, vector<4x32x8xbf16>, vector<4x8x8xf32> -> vector<4x8x8xf32>
    "tpu.trace_stop"() : () -> ()
    %c1_107 = arith.constant 1 : index
    %c0_108 = arith.constant 0 : index
    %c0_109 = arith.constant 0 : index
    %c0_110 = arith.constant 0 : index
    %188 = vector.load %arg8[%c1_107, %c0_108, %c0_109, %c0_110] : memref<2x4x1x8xf32, #tpu.memory_space<vmem>>, vector<1x4x1x8xf32>
    %189 = vector.shape_cast %188 : vector<1x4x1x8xf32> to vector<4x1x8xf32>
    %190 = vector.broadcast %189 : vector<4x1x8xf32> to vector<4x8x8xf32>
    %191 = arith.addf %187, %190 : vector<4x8x8xf32>
    %192 = arith.truncf %191 : vector<4x8x8xf32> to vector<4x8x8xbf16>
    %c1_111 = arith.constant 1 : index
    %c0_112 = arith.constant 0 : index
    %c0_113 = arith.constant 0 : index
    %c0_114 = arith.constant 0 : index
    %193 = vector.load %arg9[%c1_111, %c0_112, %c0_113, %c0_114] : memref<2x4x32x8xbf16, #tpu.memory_space<vmem>>, vector<1x4x32x8xbf16>
    %194 = vector.shape_cast %193 : vector<1x4x32x8xbf16> to vector<4x32x8xbf16>
    "tpu.trace_start"() <{level = 10 : i32, message = "hrj,hjd->hrd"}> : () -> ()
    %cst_115 = arith.constant dense<0.000000e+00> : vector<4x8x8xf32>
    %195 = tpu.matmul %176, %194, %cst_115 {dimension_numbers = #tpu.dot_dimension_numbers<[2], [1], [1], [2], [0, 0, 0, 1, 1, 2], [0], [0]>} : vector<4x8x32xbf16>, vector<4x32x8xbf16>, vector<4x8x8xf32> -> vector<4x8x8xf32>
    "tpu.trace_stop"() : () -> ()
    %c1_116 = arith.constant 1 : index
    %c0_117 = arith.constant 0 : index
    %c0_118 = arith.constant 0 : index
    %c0_119 = arith.constant 0 : index
    %196 = vector.load %arg10[%c1_116, %c0_117, %c0_118, %c0_119] : memref<2x4x1x8xf32, #tpu.memory_space<vmem>>, vector<1x4x1x8xf32>
    %197 = vector.shape_cast %196 : vector<1x4x1x8xf32> to vector<4x1x8xf32>
    %198 = vector.broadcast %197 : vector<4x1x8xf32> to vector<4x8x8xf32>
    %199 = arith.addf %195, %198 : vector<4x8x8xf32>
    %200 = arith.truncf %199 : vector<4x8x8xf32> to vector<4x8x8xbf16>
    %c0_120 = arith.constant 0 : index
    %c0_121 = arith.constant 0 : index
    %c0_122 = arith.constant 0 : index
    %201 = vector.load %arg2[%c0_120, %c0_121, %c0_122] : memref<1x1x8xf32, #tpu.memory_space<vmem>>, vector<1x1x8xf32>
    %202 = vector.shape_cast %201 : vector<1x1x8xf32> to vector<1x8xf32>
    %cst_123 = arith.constant 1.000000e+00 : f32
    %203 = vector.broadcast %cst_123 : f32 to vector<1x8xf32>
    %204 = arith.subf %203, %202 : vector<1x8xf32>
    %cst_124 = arith.constant -1.000000e+04 : f32
    %205 = vector.broadcast %cst_124 : f32 to vector<1x8xf32>
    %206 = arith.mulf %204, %205 : vector<1x8xf32>
    %207 = vector.shape_cast %206 : vector<1x8xf32> to vector<1x1x8xf32>
    "tpu.trace_start"() <{level = 10 : i32, message = "hqd,hkd->hqk"}> : () -> ()
    %cst_125 = arith.constant dense<0.000000e+00> : vector<4x8x8xf32>
    %208 = tpu.matmul %184, %192, %cst_125 {dimension_numbers = #tpu.dot_dimension_numbers<[2], [2], [1], [1], [0, 0, 0, 1, 1, 1], [0], [0]>} : vector<4x8x8xbf16>, vector<4x8x8xbf16>, vector<4x8x8xf32> -> vector<4x8x8xf32>
    "tpu.trace_stop"() : () -> ()
    %cst_126 = arith.constant 0.353553385 : f32
    %209 = vector.broadcast %cst_126 : f32 to vector<4x8x8xf32>
    %210 = arith.mulf %208, %209 : vector<4x8x8xf32>
    %211 = vector.broadcast %207 : vector<1x1x8xf32> to vector<4x8x8xf32>
    %212 = arith.addf %210, %211 : vector<4x8x8xf32>
    %cst_127 = arith.constant dense<0xFF800000> : vector<4x8xf32>
    %213 = vector.multi_reduction <maximumf>, %212, %cst_127 [2] : vector<4x8x8xf32> to vector<4x8xf32>
    %214 = vector.shape_cast %213 : vector<4x8xf32> to vector<4x8x1xf32>
    %215 = vector.broadcast %214 : vector<4x8x1xf32> to vector<4x8x8xf32>
    %216 = arith.subf %212, %215 : vector<4x8x8xf32>
    %217 = math.exp %216 : vector<4x8x8xf32>
    %cst_128 = arith.constant dense<0.000000e+00> : vector<4x8xf32>
    %218 = vector.multi_reduction <add>, %217, %cst_128 [2] : vector<4x8x8xf32> to vector<4x8xf32>
    %219 = vector.shape_cast %218 : vector<4x8xf32> to vector<4x8x1xf32>
    %220 = tpu.reciprocal %219 {approx = true} : vector<4x8x1xf32> -> vector<4x8x1xf32>
    %221 = vector.broadcast %220 : vector<4x8x1xf32> to vector<4x8x8xf32>
    %222 = arith.mulf %217, %221 : vector<4x8x8xf32>
    %223 = arith.truncf %222 : vector<4x8x8xf32> to vector<4x8x8xbf16>
    "tpu.trace_start"() <{level = 10 : i32, message = "hqk,hkd->hqd"}> : () -> ()
    %cst_129 = arith.constant dense<0.000000e+00> : vector<4x8x8xf32>
    %224 = tpu.matmul %223, %200, %cst_129 {dimension_numbers = #tpu.dot_dimension_numbers<[2], [1], [1], [2], [0, 0, 0, 1, 1, 2], [0], [0]>} : vector<4x8x8xbf16>, vector<4x8x8xbf16>, vector<4x8x8xf32> -> vector<4x8x8xf32>
    "tpu.trace_stop"() : () -> ()
    %225 = arith.truncf %224 : vector<4x8x8xf32> to vector<4x8x8xbf16>
    %c1_130 = arith.constant 1 : index
    %c0_131 = arith.constant 0 : index
    %c0_132 = arith.constant 0 : index
    %c0_133 = arith.constant 0 : index
    %226 = vector.load %arg11[%c1_130, %c0_131, %c0_132, %c0_133] : memref<2x4x8x32xbf16, #tpu.memory_space<vmem>>, vector<1x4x8x32xbf16>
    %227 = vector.shape_cast %226 : vector<1x4x8x32xbf16> to vector<4x8x32xbf16>
    "tpu.trace_start"() <{level = 10 : i32, message = "hqd,hdo->hqo"}> : () -> ()
    %cst_134 = arith.constant dense<0.000000e+00> : vector<4x8x32xf32>
    %228 = tpu.matmul %225, %227, %cst_134 {dimension_numbers = #tpu.dot_dimension_numbers<[2], [1], [1], [2], [0, 0, 0, 1, 1, 2], [0], [0]>} : vector<4x8x8xbf16>, vector<4x8x32xbf16>, vector<4x8x32xf32> -> vector<4x8x32xf32>
    "tpu.trace_stop"() : () -> ()
    %229 = vector.extract_strided_slice %228 {offsets = [0, 0, 0], sizes = [1, 8, 32], strides = [1, 1, 1]} : vector<4x8x32xf32> to vector<1x8x32xf32>
    %230 = vector.shape_cast %229 : vector<1x8x32xf32> to vector<8x32xf32>
    %231 = vector.extract_strided_slice %228 {offsets = [1, 0, 0], sizes = [1, 8, 32], strides = [1, 1, 1]} : vector<4x8x32xf32> to vector<1x8x32xf32>
    %232 = vector.shape_cast %231 : vector<1x8x32xf32> to vector<8x32xf32>
    %233 = arith.addf %230, %232 : vector<8x32xf32>
    %234 = vector.extract_strided_slice %228 {offsets = [2, 0, 0], sizes = [1, 8, 32], strides = [1, 1, 1]} : vector<4x8x32xf32> to vector<1x8x32xf32>
    %235 = vector.shape_cast %234 : vector<1x8x32xf32> to vector<8x32xf32>
    %236 = arith.addf %233, %235 : vector<8x32xf32>
    %237 = vector.extract_strided_slice %228 {offsets = [3, 0, 0], sizes = [1, 8, 32], strides = [1, 1, 1]} : vector<4x8x32xf32> to vector<1x8x32xf32>
    %238 = vector.shape_cast %237 : vector<1x8x32xf32> to vector<8x32xf32>
    %239 = arith.addf %236, %238 : vector<8x32xf32>
    %c1_135 = arith.constant 1 : index
    %c0_136 = arith.constant 0 : index
    %c0_137 = arith.constant 0 : index
    %240 = vector.load %arg12[%c1_135, %c0_136, %c0_137] : memref<2x1x32xf32, #tpu.memory_space<vmem>>, vector<1x1x32xf32>
    %241 = vector.shape_cast %240 : vector<1x1x32xf32> to vector<1x32xf32>
    %242 = vector.broadcast %241 : vector<1x32xf32> to vector<8x32xf32>
    %243 = arith.addf %239, %242 : vector<8x32xf32>
    %244 = arith.addf %243, %173 : vector<8x32xf32>
    %c1_138 = arith.constant 1 : index
    %c0_139 = arith.constant 0 : index
    %c0_140 = arith.constant 0 : index
    %245 = vector.load %arg13[%c1_138, %c0_139, %c0_140] : memref<2x1x32xf32, #tpu.memory_space<vmem>>, vector<1x1x32xf32>
    %246 = vector.shape_cast %245 : vector<1x1x32xf32> to vector<1x32xf32>
    %c1_141 = arith.constant 1 : index
    %c0_142 = arith.constant 0 : index
    %c0_143 = arith.constant 0 : index
    %247 = vector.load %arg14[%c1_141, %c0_142, %c0_143] : memref<2x1x32xf32, #tpu.memory_space<vmem>>, vector<1x1x32xf32>
    %248 = vector.shape_cast %247 : vector<1x1x32xf32> to vector<1x32xf32>
    %cst_144 = arith.constant dense<0.000000e+00> : vector<8xf32>
    %249 = vector.multi_reduction <add>, %244, %cst_144 [1] : vector<8x32xf32> to vector<8xf32>
    %250 = vector.shape_cast %249 : vector<8xf32> to vector<8x1xf32>
    %cst_145 = arith.constant 3.200000e+01 : f32
    %251 = vector.broadcast %cst_145 : f32 to vector<8x1xf32>
    %252 = arith.divf %250, %251 : vector<8x1xf32>
    %253 = vector.broadcast %252 : vector<8x1xf32> to vector<8x32xf32>
    %254 = arith.subf %244, %253 : vector<8x32xf32>
    %255 = arith.mulf %254, %254 : vector<8x32xf32>
    %cst_146 = arith.constant dense<0.000000e+00> : vector<8xf32>
    %256 = vector.multi_reduction <add>, %255, %cst_146 [1] : vector<8x32xf32> to vector<8xf32>
    %257 = vector.shape_cast %256 : vector<8xf32> to vector<8x1xf32>
    %cst_147 = arith.constant 3.200000e+01 : f32
    %258 = vector.broadcast %cst_147 : f32 to vector<8x1xf32>
    %259 = arith.divf %257, %258 : vector<8x1xf32>
    %cst_148 = arith.constant 9.99999996E-13 : f32
    %260 = vector.broadcast %cst_148 : f32 to vector<8x1xf32>
    %261 = arith.addf %259, %260 : vector<8x1xf32>
    %262 = math.rsqrt %261 : vector<8x1xf32>
    %263 = vector.broadcast %252 : vector<8x1xf32> to vector<8x32xf32>
    %264 = arith.subf %244, %263 : vector<8x32xf32>
    %265 = vector.broadcast %262 : vector<8x1xf32> to vector<8x32xf32>
    %266 = arith.mulf %264, %265 : vector<8x32xf32>
    %267 = vector.broadcast %246 : vector<1x32xf32> to vector<8x32xf32>
    %268 = arith.mulf %266, %267 : vector<8x32xf32>
    %269 = vector.broadcast %248 : vector<1x32xf32> to vector<8x32xf32>
    %270 = arith.addf %268, %269 : vector<8x32xf32>
    %271 = arith.truncf %270 : vector<8x32xf32> to vector<8x32xbf16>
    %c1_149 = arith.constant 1 : index
    %c0_150 = arith.constant 0 : index
    %c0_151 = arith.constant 0 : index
    %272 = vector.load %arg15[%c1_149, %c0_150, %c0_151] : memref<2x32x64xbf16, #tpu.memory_space<vmem>>, vector<1x32x64xbf16>
    %273 = vector.shape_cast %272 : vector<1x32x64xbf16> to vector<32x64xbf16>
    %cst_152 = arith.constant dense<0.000000e+00> : vector<8x64xf32>
    %274 = tpu.matmul %271, %273, %cst_152 {dimension_numbers = #tpu.dot_dimension_numbers<[1], [0], [0], [1], [0, 0, 1, 1], [], []>} : vector<8x32xbf16>, vector<32x64xbf16>, vector<8x64xf32> -> vector<8x64xf32>
    %c1_153 = arith.constant 1 : index
    %c0_154 = arith.constant 0 : index
    %c0_155 = arith.constant 0 : index
    %275 = vector.load %arg16[%c1_153, %c0_154, %c0_155] : memref<2x1x64xf32, #tpu.memory_space<vmem>>, vector<1x1x64xf32>
    %276 = vector.shape_cast %275 : vector<1x1x64xf32> to vector<1x64xf32>
    %277 = vector.broadcast %276 : vector<1x64xf32> to vector<8x64xf32>
    %278 = arith.addf %274, %277 : vector<8x64xf32>
    %cst_156 = arith.constant 5.000000e-01 : f32
    %279 = vector.broadcast %cst_156 : f32 to vector<8x64xf32>
    %280 = arith.mulf %279, %278 : vector<8x64xf32>
    %cst_157 = arith.constant 0.707106769 : f32
    %281 = vector.broadcast %cst_157 : f32 to vector<8x64xf32>
    %282 = arith.mulf %278, %281 : vector<8x64xf32>
    %283 = math.erf %282 : vector<8x64xf32>
    %cst_158 = arith.constant 1.000000e+00 : f32
    %284 = vector.broadcast %cst_158 : f32 to vector<8x64xf32>
    %285 = arith.addf %284, %283 : vector<8x64xf32>
    %286 = arith.mulf %280, %285 : vector<8x64xf32>
    %287 = arith.truncf %286 : vector<8x64xf32> to vector<8x64xbf16>
    %c1_159 = arith.constant 1 : index
    %c0_160 = arith.constant 0 : index
    %c0_161 = arith.constant 0 : index
    %288 = vector.load %arg17[%c1_159, %c0_160, %c0_161] : memref<2x64x32xbf16, #tpu.memory_space<vmem>>, vector<1x64x32xbf16>
    %289 = vector.shape_cast %288 : vector<1x64x32xbf16> to vector<64x32xbf16>
    %cst_162 = arith.constant dense<0.000000e+00> : vector<8x32xf32>
    %290 = tpu.matmul %287, %289, %cst_162 {dimension_numbers = #tpu.dot_dimension_numbers<[1], [0], [0], [1], [0, 0, 1, 1], [], []>} : vector<8x64xbf16>, vector<64x32xbf16>, vector<8x32xf32> -> vector<8x32xf32>
    %c1_163 = arith.constant 1 : index
    %c0_164 = arith.constant 0 : index
    %c0_165 = arith.constant 0 : index
    %291 = vector.load %arg18[%c1_163, %c0_164, %c0_165] : memref<2x1x32xf32, #tpu.memory_space<vmem>>, vector<1x1x32xf32>
    %292 = vector.shape_cast %291 : vector<1x1x32xf32> to vector<1x32xf32>
    %293 = vector.broadcast %292 : vector<1x32xf32> to vector<8x32xf32>
    %294 = arith.addf %290, %293 : vector<8x32xf32>
    %295 = arith.addf %294, %270 : vector<8x32xf32>
    %c1_166 = arith.constant 1 : index
    %c0_167 = arith.constant 0 : index
    %c0_168 = arith.constant 0 : index
    %296 = vector.load %arg19[%c1_166, %c0_167, %c0_168] : memref<2x1x32xf32, #tpu.memory_space<vmem>>, vector<1x1x32xf32>
    %297 = vector.shape_cast %296 : vector<1x1x32xf32> to vector<1x32xf32>
    %c1_169 = arith.constant 1 : index
    %c0_170 = arith.constant 0 : index
    %c0_171 = arith.constant 0 : index
    %298 = vector.load %arg20[%c1_169, %c0_170, %c0_171] : memref<2x1x32xf32, #tpu.memory_space<vmem>>, vector<1x1x32xf32>
    %299 = vector.shape_cast %298 : vector<1x1x32xf32> to vector<1x32xf32>
    %cst_172 = arith.constant dense<0.000000e+00> : vector<8xf32>
    %300 = vector.multi_reduction <add>, %295, %cst_172 [1] : vector<8x32xf32> to vector<8xf32>
    %301 = vector.shape_cast %300 : vector<8xf32> to vector<8x1xf32>
    %cst_173 = arith.constant 3.200000e+01 : f32
    %302 = vector.broadcast %cst_173 : f32 to vector<8x1xf32>
    %303 = arith.divf %301, %302 : vector<8x1xf32>
    %304 = vector.broadcast %303 : vector<8x1xf32> to vector<8x32xf32>
    %305 = arith.subf %295, %304 : vector<8x32xf32>
    %306 = arith.mulf %305, %305 : vector<8x32xf32>
    %cst_174 = arith.constant dense<0.000000e+00> : vector<8xf32>
    %307 = vector.multi_reduction <add>, %306, %cst_174 [1] : vector<8x32xf32> to vector<8xf32>
    %308 = vector.shape_cast %307 : vector<8xf32> to vector<8x1xf32>
    %cst_175 = arith.constant 3.200000e+01 : f32
    %309 = vector.broadcast %cst_175 : f32 to vector<8x1xf32>
    %310 = arith.divf %308, %309 : vector<8x1xf32>
    %cst_176 = arith.constant 9.99999996E-13 : f32
    %311 = vector.broadcast %cst_176 : f32 to vector<8x1xf32>
    %312 = arith.addf %310, %311 : vector<8x1xf32>
    %313 = math.rsqrt %312 : vector<8x1xf32>
    %314 = vector.broadcast %303 : vector<8x1xf32> to vector<8x32xf32>
    %315 = arith.subf %295, %314 : vector<8x32xf32>
    %316 = vector.broadcast %313 : vector<8x1xf32> to vector<8x32xf32>
    %317 = arith.mulf %315, %316 : vector<8x32xf32>
    %318 = vector.broadcast %297 : vector<1x32xf32> to vector<8x32xf32>
    %319 = arith.mulf %317, %318 : vector<8x32xf32>
    %320 = vector.broadcast %299 : vector<1x32xf32> to vector<8x32xf32>
    %321 = arith.addf %319, %320 : vector<8x32xf32>
    %322 = vector.extract_strided_slice %321 {offsets = [0, 0], sizes = [1, 32], strides = [1, 1]} : vector<8x32xf32> to vector<1x32xf32>
    %c0_177 = arith.constant 0 : index
    %c0_178 = arith.constant 0 : index
    %323 = vector.load %arg21[%c0_177, %c0_178] : memref<32x32xf32, #tpu.memory_space<vmem>>, vector<32x32xf32>
    %cst_179 = arith.constant dense<0.000000e+00> : vector<1x32xf32>
    %324 = tpu.matmul %322, %323, %cst_179 {dimension_numbers = #tpu.dot_dimension_numbers<[1], [0], [0], [1], [0, 0, 1, 1], [], []>} : vector<1x32xf32>, vector<32x32xf32>, vector<1x32xf32> -> vector<1x32xf32>
    %c0_180 = arith.constant 0 : index
    %c0_181 = arith.constant 0 : index
    %325 = vector.load %arg22[%c0_180, %c0_181] : memref<1x32xf32, #tpu.memory_space<vmem>>, vector<1x32xf32>
    %326 = arith.addf %324, %325 : vector<1x32xf32>
    %327 = math.tanh %326 : vector<1x32xf32>
    %c0_182 = arith.constant 0 : index
    %c0_183 = arith.constant 0 : index
    %328 = vector.load %arg23[%c0_182, %c0_183] : memref<32x128xf32, #tpu.memory_space<vmem>>, vector<32x128xf32>
    %cst_184 = arith.constant dense<0.000000e+00> : vector<1x128xf32>
    %329 = tpu.matmul %327, %328, %cst_184 {dimension_numbers = #tpu.dot_dimension_numbers<[1], [0], [0], [1], [0, 0, 1, 1], [], []>} : vector<1x32xf32>, vector<32x128xf32>, vector<1x128xf32> -> vector<1x128xf32>
    %c0_185 = arith.constant 0 : index
    %c0_186 = arith.constant 0 : index
    %330 = vector.load %arg24[%c0_185, %c0_186] : memref<1x128xf32, #tpu.memory_space<vmem>>, vector<1x128xf32>
    %331 = arith.addf %329, %330 : vector<1x128xf32>
    %c0_187 = arith.constant 0 : index
    %c0_188 = arith.constant 0 : index
    %c0_189 = arith.constant 0 : index
    %332 = vector.load %arg25[%c0_187, %c0_188, %c0_189] : memref<1x1x128xf32, #tpu.memory_space<vmem>>, vector<1x1x128xf32>
    %333 = vector.shape_cast %332 : vector<1x1x128xf32> to vector<1x128xf32>
    %334 = vector.shape_cast %331 : vector<1x128xf32> to vector<1x1x128xf32>
    tpu.vector_store %arg25[%c0_187, %c0_188, %c0_189], %334 {strides = array<i32>} : memref<1x1x128xf32, #tpu.memory_space<vmem>>, vector<1x1x128xf32>,
    return
  }
  func.func @transform_0(%arg0: i32) -> (i32, i32, i32) {
    %c0_i32 = arith.constant 0 : i32
    %c0_i32_0 = arith.constant 0 : i32
    %c0_i32_1 = arith.constant 0 : i32
    return %arg0, %c0_i32, %c0_i32_0 : i32, i32, i32
  }
  func.func @transform_1(%arg0: i32) -> (i32, i32, i32) {
    %c0_i32 = arith.constant 0 : i32
    %c0_i32_0 = arith.constant 0 : i32
    %c0_i32_1 = arith.constant 0 : i32
    return %arg0, %c0_i32, %c0_i32_0 : i32, i32, i32
  }
  func.func @transform_2(%arg0: i32) -> (i32, i32) {
    %c0_i32 = arith.constant 0 : i32
    %c0_i32_0 = arith.constant 0 : i32
    %c0_i32_1 = arith.constant 0 : i32
    return %c0_i32, %c0_i32_0 : i32, i32
  }
  func.func @transform_3(%arg0: i32) -> (i32, i32) {
    %c0_i32 = arith.constant 0 : i32
    %c0_i32_0 = arith.constant 0 : i32
    %c0_i32_1 = arith.constant 0 : i32
    return %c0_i32, %c0_i32_0 : i32, i32
  }
  func.func @transform_4(%arg0: i32) -> (i32, i32, i32, i32) {
    %c0_i32 = arith.constant 0 : i32
    %c0_i32_0 = arith.constant 0 : i32
    %c0_i32_1 = arith.constant 0 : i32
    %c0_i32_2 = arith.constant 0 : i32
    %c0_i32_3 = arith.constant 0 : i32
    return %c0_i32, %c0_i32_0, %c0_i32_1, %c0_i32_2 : i32, i32, i32, i32
  }
  func.func @transform_5(%arg0: i32) -> (i32, i32, i32, i32) {
    %c0_i32 = arith.constant 0 : i32
    %c0_i32_0 = arith.constant 0 : i32
    %c0_i32_1 = arith.constant 0 : i32
    %c0_i32_2 = arith.constant 0 : i32
    %c0_i32_3 = arith.constant 0 : i32
    return %c0_i32, %c0_i32_0, %c0_i32_1, %c0_i32_2 : i32, i32, i32, i32
  }
  func.func @transform_6(%arg0: i32) -> (i32, i32, i32, i32) {
    %c0_i32 = arith.constant 0 : i32
    %c0_i32_0 = arith.constant 0 : i32
    %c0_i32_1 = arith.constant 0 : i32
    %c0_i32_2 = arith.constant 0 : i32
    %c0_i32_3 = arith.constant 0 : i32
    return %c0_i32, %c0_i32_0, %c0_i32_1, %c0_i32_2 : i32, i32, i32, i32
  }
  func.func @transform_7(%arg0: i32) -> (i32, i32, i32, i32) {
    %c0_i32 = arith.constant 0 : i32
    %c0_i32_0 = arith.constant 0 : i32
    %c0_i32_1 = arith.constant 0 : i32
    %c0_i32_2 = arith.constant 0 : i32
    %c0_i32_3 = arith.constant 0 : i32
    return %c0_i32, %c0_i32_0, %c0_i32_1, %c0_i32_2 : i32, i32, i32, i32
  }
  func.func @transform_8(%arg0: i32) -> (i32, i32, i32, i32) {
    %c0_i32 = arith.constant 0 : i32
    %c0_i32_0 = arith.constant 0 : i32
    %c0_i32_1 = arith.constant 0 : i32
    %c0_i32_2 = arith.constant 0 : i32
    %c0_i32_3 = arith.constant 0 : i32
    return %c0_i32, %c0_i32_0, %c0_i32_1, %c0_i32_2 : i32, i32, i32, i32
  }
  func.func @transform_9(%arg0: i32) -> (i32, i32, i32, i32) {
    %c0_i32 = arith.constant 0 : i32
    %c0_i32_0 = arith.constant 0 : i32
    %c0_i32_1 = arith.constant 0 : i32
    %c0_i32_2 = arith.constant 0 : i32
    %c0_i32_3 = arith.constant 0 : i32
    return %c0_i32, %c0_i32_0, %c0_i32_1, %c0_i32_2 : i32, i32, i32, i32
  }
  func.func @transform_10(%arg0: i32) -> (i32, i32, i32, i32) {
    %c0_i32 = arith.constant 0 : i32
    %c0_i32_0 = arith.constant 0 : i32
    %c0_i32_1 = arith.constant 0 : i32
    %c0_i32_2 = arith.constant 0 : i32
    %c0_i32_3 = arith.constant 0 : i32
    return %c0_i32, %c0_i32_0, %c0_i32_1, %c0_i32_2 : i32, i32, i32, i32
  }
  func.func @transform_11(%arg0: i32) -> (i32, i32, i32) {
    %c0_i32 = arith.constant 0 : i32
    %c0_i32_0 = arith.constant 0 : i32
    %c0_i32_1 = arith.constant 0 : i32
    %c0_i32_2 = arith.constant 0 : i32
    return %c0_i32, %c0_i32_0, %c0_i32_1 : i32, i32, i32
  }
  func.func @transform_12(%arg0: i32) -> (i32, i32, i32) {
    %c0_i32 = arith.constant 0 : i32
    %c0_i32_0 = arith.constant 0 : i32
    %c0_i32_1 = arith.constant 0 : i32
    %c0_i32_2 = arith.constant 0 : i32
    return %c0_i32, %c0_i32_0, %c0_i32_1 : i32, i32, i32
  }
  func.func @transform_13(%arg0: i32) -> (i32, i32, i32) {
    %c0_i32 = arith.constant 0 : i32
    %c0_i32_0 = arith.constant 0 : i32
    %c0_i32_1 = arith.constant 0 : i32
    %c0_i32_2 = arith.constant 0 : i32
    return %c0_i32, %c0_i32_0, %c0_i32_1 : i32, i32, i32
  }
  func.func @transform_14(%arg0: i32) -> (i32, i32, i32) {
    %c0_i32 = arith.constant 0 : i32
    %c0_i32_0 = arith.constant 0 : i32
    %c0_i32_1 = arith.constant 0 : i32
    %c0_i32_2 = arith.constant 0 : i32
    return %c0_i32, %c0_i32_0, %c0_i32_1 : i32, i32, i32
  }
  func.func @transform_15(%arg0: i32) -> (i32, i32, i32) {
    %c0_i32 = arith.constant 0 : i32
    %c0_i32_0 = arith.constant 0 : i32
    %c0_i32_1 = arith.constant 0 : i32
    %c0_i32_2 = arith.constant 0 : i32
    return %c0_i32, %c0_i32_0, %c0_i32_1 : i32, i32, i32
  }
  func.func @transform_16(%arg0: i32) -> (i32, i32, i32) {
    %c0_i32 = arith.constant 0 : i32
    %c0_i32_0 = arith.constant 0 : i32
    %c0_i32_1 = arith.constant 0 : i32
    %c0_i32_2 = arith.constant 0 : i32
    return %c0_i32, %c0_i32_0, %c0_i32_1 : i32, i32, i32
  }
  func.func @transform_17(%arg0: i32) -> (i32, i32, i32) {
    %c0_i32 = arith.constant 0 : i32
    %c0_i32_0 = arith.constant 0 : i32
    %c0_i32_1 = arith.constant 0 : i32
    %c0_i32_2 = arith.constant 0 : i32
    return %c0_i32, %c0_i32_0, %c0_i32_1 : i32, i32, i32
  }
  func.func @transform_18(%arg0: i32) -> (i32, i32, i32) {
    %c0_i32 = arith.constant 0 : i32
    %c0_i32_0 = arith.constant 0 : i32
    %c0_i32_1 = arith.constant 0 : i32
    %c0_i32_2 = arith.constant 0 : i32
    return %c0_i32, %c0_i32_0, %c0_i32_1 : i32, i32, i32
  }
  func.func @transform_19(%arg0: i32) -> (i32, i32, i32) {
    %c0_i32 = arith.constant 0 : i32
    %c0_i32_0 = arith.constant 0 : i32
    %c0_i32_1 = arith.constant 0 : i32
    %c0_i32_2 = arith.constant 0 : i32
    return %c0_i32, %c0_i32_0, %c0_i32_1 : i32, i32, i32
  }
  func.func @transform_20(%arg0: i32) -> (i32, i32) {
    %c0_i32 = arith.constant 0 : i32
    %c0_i32_0 = arith.constant 0 : i32
    %c0_i32_1 = arith.constant 0 : i32
    return %c0_i32, %c0_i32_0 : i32, i32
  }
  func.func @transform_21(%arg0: i32) -> (i32, i32) {
    %c0_i32 = arith.constant 0 : i32
    %c0_i32_0 = arith.constant 0 : i32
    %c0_i32_1 = arith.constant 0 : i32
    return %c0_i32, %c0_i32_0 : i32, i32
  }
  func.func @transform_22(%arg0: i32) -> (i32, i32) {
    %c0_i32 = arith.constant 0 : i32
    %c0_i32_0 = arith.constant 0 : i32
    %c0_i32_1 = arith.constant 0 : i32
    return %c0_i32, %c0_i32_0 : i32, i32
  }
  func.func @transform_23(%arg0: i32) -> (i32, i32) {
    %c0_i32 = arith.constant 0 : i32
    %c0_i32_0 = arith.constant 0 : i32
    %c0_i32_1 = arith.constant 0 : i32
    return %c0_i32, %c0_i32_0 : i32, i32
  }
  func.func @transform_24(%arg0: i32) -> (i32, i32, i32) {
    %c0_i32 = arith.constant 0 : i32
    %c0_i32_0 = arith.constant 0 : i32
    %c0_i32_1 = arith.constant 0 : i32
    return %arg0, %c0_i32, %c0_i32_0 : i32, i32, i32
  }
}

</mosaic_0001>

<llo_original>
// kernel: bert_binary_classifier_forward.1
$region0: #{bert_binary_classifier_forward.1}
  #allocation0 [shape = 'u32[]', space=smem, size = 0x4, offset = 0x4, fixed_abs, tag = 'smem constant byte address 0x4 - core index']
  #allocation1 [shape = 'u32[72,128]{1,0:T(1,128)}', space=vmem, size = 0x9000, scoped, tag = 'internal scratch']
  %s0 = inlined_call_operand.vmem [shape: f32[2,8,32], index: 0, kind: input, shape index: {}]
  %s1 = inlined_call_operand.vmem [shape: f32[2,1,8], index: 1, kind: input, shape index: {}]
  %s2 = inlined_call_operand.vmem [shape: f32[1,32], index: 2, kind: input, shape index: {}]
  %s3 = inlined_call_operand.vmem [shape: f32[1,32], index: 3, kind: input, shape index: {}]
  %s4 = inlined_call_operand.vmem [shape: bf16[2,4,32,8], index: 4, kind: input, shape index: {}]
  %s5 = inlined_call_operand.vmem [shape: f32[2,4,1,8], index: 5, kind: input, shape index: {}]
  %s6 = inlined_call_operand.vmem [shape: bf16[2,4,32,8], index: 6, kind: input, shape index: {}]
  %s7 = inlined_call_operand.vmem [shape: f32[2,4,1,8], index: 7, kind: input, shape index: {}]
  %s8 = inlined_call_operand.vmem [shape: bf16[2,4,32,8], index: 8, kind: input, shape index: {}]
  %s9 = inlined_call_operand.vmem [shape: f32[2,4,1,8], index: 9, kind: input, shape index: {}]
  %s10 = inlined_call_operand.vmem [shape: bf16[2,4,8,32], index: 10, kind: input, shape index: {}]
  %s11 = inlined_call_operand.vmem [shape: f32[2,1,32], index: 11, kind: input, shape index: {}]
  %s12 = inlined_call_operand.vmem [shape: f32[2,1,32], index: 12, kind: input, shape index: {}]
  %s13 = inlined_call_operand.vmem [shape: f32[2,1,32], index: 13, kind: input, shape index: {}]
  %s14 = inlined_call_operand.vmem [shape: bf16[2,32,64], index: 14, kind: input, shape index: {}]
  %s15 = inlined_call_operand.vmem [shape: f32[2,1,64], index: 15, kind: input, shape index: {}]
  %s16 = inlined_call_operand.vmem [shape: bf16[2,64,32], index: 16, kind: input, shape index: {}]
  %s17 = inlined_call_operand.vmem [shape: f32[2,1,32], index: 17, kind: input, shape index: {}]
  %s18 = inlined_call_operand.vmem [shape: f32[2,1,32], index: 18, kind: input, shape index: {}]
  %s19 = inlined_call_operand.vmem [shape: f32[2,1,32], index: 19, kind: input, shape index: {}]
  %s20 = inlined_call_operand.vmem [shape: f32[32,32], index: 20, kind: input, shape index: {}]
  %s21 = inlined_call_operand.vmem [shape: f32[1,32], index: 21, kind: input, shape index: {}]
  %s22 = inlined_call_operand.vmem [shape: f32[32,128], index: 22, kind: input, shape index: {}]
  %s23 = inlined_call_operand.vmem [shape: f32[1,128], index: 23, kind: input, shape index: {}]
  %s24 = inlined_call_operand.hbm [shape: f32[2,1,128], index: 24, kind: output, shape index: {}]
  %s25 = sld [smem:[#allocation0]]
  $region129: #{bert_binary_classifier_forward.1} parent=0
    _
  %s27 = ssub.s32 1, %s25
  %s28 = scalar_select 0, %s27, %s25
  $region1: #{bert_binary_classifier_forward.1} parent=0
    #allocation2 [shape = 'u8[1024]{0}', space=vmem, size = 0x400, scoped, tag = 'output window, operand 0']
    #allocation3 [shape = 's32[2]{0}', space=sflag, size = 0x8, scoped, tag = 'scoped memory for bert_binary_classifier_forward.1']
    %29 = vsyncpa [#allocation3], 0
    %s30 = scalar_lea.sflag [#allocation3], 1
    %31 = vsyncpa %s30, 0
    loop: start=0, step=1, limit=4
    $region2: #{bert_binary_classifier_forward.1} parent=1 // loop_pre_header
      _
    $region3: #{bert_binary_classifier_forward.1} parent=1 // loop_header
      %s33 = sphi 0, %s37
      %p34 = scmp.ge.s32.totalorder %s33, 4
      %s43 = sphi 0, %s45
      %s46 = sphi 0, %s43
      %s47 = sphi 0, %s46
      %s63 = sphi 0, %s47
      %s69 = sphi 0, %s71
      %s72 = sphi 0, %s69
      %s73 = sphi 0, %s72
      %s89 = sphi 0, %s73
      %s93 = sphi 0, %s93
      %s95 = sphi 0, %s93
      %s96 = sphi 0, %s95
      %s110 = sphi 0, %s96
      %s114 = sphi 0, %s114
      %s116 = sphi 0, %s114
      %s117 = sphi 0, %s116
      %s131 = sphi 0, %s117
      %s135 = sphi 0, %s135
      %s137 = sphi 0, %s135
      %s138 = sphi 0, %s137
      %s152 = sphi 0, %s138
      %s156 = sphi 0, %s156
      %s158 = sphi 0, %s156
      %s159 = sphi 0, %s158
      %s173 = sphi 0, %s159
      %s177 = sphi 0, %s177
      %s179 = sphi 0, %s177
      %s180 = sphi 0, %s179
      %s194 = sphi 0, %s180
      %s198 = sphi 0, %s198
      %s200 = sphi 0, %s198
      %s201 = sphi 0, %s200
      %s215 = sphi 0, %s201
      %s219 = sphi 0, %s219
      %s221 = sphi 0, %s219
      %s222 = sphi 0, %s221
      %s236 = sphi 0, %s222
      %s240 = sphi 0, %s240
      %s242 = sphi 0, %s240
      %s243 = sphi 0, %s242
      %s257 = sphi 0, %s243
      %s261 = sphi 0, %s261
      %s263 = sphi 0, %s261
      %s264 = sphi 0, %s263
      %s278 = sphi 0, %s264
      %s282 = sphi 0, %s282
      %s284 = sphi 0, %s282
      %s285 = sphi 0, %s284
      %s299 = sphi 0, %s285
      %s303 = sphi 0, %s303
      %s305 = sphi 0, %s303
      %s306 = sphi 0, %s305
      %s320 = sphi 0, %s306
      %s324 = sphi 0, %s324
      %s326 = sphi 0, %s324
      %s327 = sphi 0, %s326
      %s341 = sphi 0, %s327
      %s345 = sphi 0, %s345
      %s347 = sphi 0, %s345
      %s348 = sphi 0, %s347
      %s362 = sphi 0, %s348
      %s366 = sphi 0, %s366
      %s368 = sphi 0, %s366
      %s369 = sphi 0, %s368
      %s383 = sphi 0, %s369
      %s387 = sphi 0, %s387
      %s389 = sphi 0, %s387
      %s390 = sphi 0, %s389
      %s404 = sphi 0, %s390
      %s408 = sphi 0, %s408
      %s410 = sphi 0, %s408
      %s411 = sphi 0, %s410
      %s425 = sphi 0, %s411
      %s429 = sphi 0, %s429
      %s431 = sphi 0, %s429
      %s432 = sphi 0, %s431
      %s446 = sphi 0, %s432
      %s450 = sphi 0, %s450
      %s452 = sphi 0, %s450
      %s453 = sphi 0, %s452
      %s467 = sphi 0, %s453
      %s471 = sphi 0, %s471
      %s473 = sphi 0, %s471
      %s474 = sphi 0, %s473
      %s488 = sphi 0, %s474
      %s492 = sphi 0, %s492
      %s494 = sphi 0, %s492
      %s495 = sphi 0, %s494
      %s509 = sphi 0, %s495
      %s513 = sphi 0, %s513
      %s515 = sphi 0, %s513
      %s516 = sphi 0, %s515
      %s530 = sphi 0, %s516
      %s534 = sphi 0, %s534
      %s536 = sphi 0, %s534
      %s537 = sphi 0, %s536
      %s551 = sphi 0, %s537
      %s557 = sphi 0, %s559
      %s560 = sphi 0, %s557
      %s561 = sphi 0, %s560
      %s577 = sphi 0, %s561
    $region4: #{bert_binary_classifier_forward.1} parent=1 // loop_header_branch
      %36 = sbr.rel (%p34) target = $region8
    $region5: #{bert_binary_classifier_forward.1} parent=1 // loop_body
      %s38 = ssub.s32 %s33, 1
      %s39 = ssub.s32 %s33, 2
      %s40 = sadd.s32 %s33, 1
      %s41 = ssub.s32 %s33, %s40
      %p42 = scmp.eq.s32.totalorder %s41, 0
      %s44 = sadd.s32 %s43, 1
      %s45 = scalar_select %p42, %s43, %s44
      %p48 = pneg %p42
      %p49 = scmp.eq.s32.totalorder %s33, 1
      %p50 = por %p48, %p49
      %p51 = scmp.ne.s32.totalorder %s43, %s46
      %p52 = scmp.eq.s32.totalorder %s33, 0
      %p53 = por %p51, %p52
      %p54 = scmp.ne.s32.totalorder %s43, %s46
      %p55 = scmp.eq.s32.totalorder %s38, 1
      %p56 = por %p54, %p55
      %p57 = scmp.ne.s32.totalorder %s46, %s47
      %p58 = scmp.eq.s32.totalorder %s38, 0
      %p59 = por %p57, %p58
      %p60 = scmp.ne.s32.totalorder %s46, %s47
      %p61 = scmp.eq.s32.totalorder %s39, 1
      %p62 = por %p60, %p61
      %p64 = scmp.ne.s32.totalorder %s47, %s63
      %p65 = scmp.eq.s32.totalorder %s39, 0
      %p66 = por %p64, %p65
      %s67 = ssub.s32 %s33, %s40
      %p68 = scmp.eq.s32.totalorder %s67, 0
      %s70 = sadd.s32 %s69, 1
      %s71 = scalar_select %p68, %s69, %s70
      %p74 = pneg %p68
      %p75 = scmp.eq.s32.totalorder %s33, 1
      %p76 = por %p74, %p75
      %p77 = scmp.ne.s32.totalorder %s69, %s72
      %p78 = scmp.eq.s32.totalorder %s33, 0
      %p79 = por %p77, %p78
      %p80 = scmp.ne.s32.totalorder %s69, %s72
      %p81 = scmp.eq.s32.totalorder %s38, 1
      %p82 = por %p80, %p81
      %p83 = scmp.ne.s32.totalorder %s72, %s73
      %p84 = scmp.eq.s32.totalorder %s38, 0
      %p85 = por %p83, %p84
      %p86 = scmp.ne.s32.totalorder %s72, %s73
      %p87 = scmp.eq.s32.totalorder %s39, 1
      %p88 = por %p86, %p87
      %p90 = scmp.ne.s32.totalorder %s73, %s89
      %p91 = scmp.eq.s32.totalorder %s39, 0
      %p92 = por %p90, %p91
      %s94 = sadd.s32 %s93, 1
      %p97 = scmp.eq.s32.totalorder %s33, 1
      %p98 = scmp.ne.s32.totalorder %s93, %s95
      %p99 = scmp.eq.s32.totalorder %s33, 0
      %p100 = por %p98, %p99
      %p101 = scmp.ne.s32.totalorder %s93, %s95
      %p102 = scmp.eq.s32.totalorder %s38, 1
      %p103 = por %p101, %p102
      %p104 = scmp.ne.s32.totalorder %s95, %s96
      %p105 = scmp.eq.s32.totalorder %s38, 0
      %p106 = por %p104, %p105
      %p107 = scmp.ne.s32.totalorder %s95, %s96
      %p108 = scmp.eq.s32.totalorder %s39, 1
      %p109 = por %p107, %p108
      %p111 = scmp.ne.s32.totalorder %s96, %s110
      %p112 = scmp.eq.s32.totalorder %s39, 0
      %p113 = por %p111, %p112
      %s115 = sadd.s32 %s114, 1
      %p118 = scmp.eq.s32.totalorder %s33, 1
      %p119 = scmp.ne.s32.totalorder %s114, %s116
      %p120 = scmp.eq.s32.totalorder %s33, 0
      %p121 = por %p119, %p120
      %p122 = scmp.ne.s32.totalorder %s114, %s116
      %p123 = scmp.eq.s32.totalorder %s38, 1
      %p124 = por %p122, %p123
      %p125 = scmp.ne.s32.totalorder %s116, %s117
      %p126 = scmp.eq.s32.totalorder %s38, 0
      %p127 = por %p125, %p126
      %p128 = scmp.ne.s32.totalorder %s116, %s117
      %p129 = scmp.eq.s32.totalorder %s39, 1
      %p130 = por %p128, %p129
      %p132 = scmp.ne.s32.totalorder %s117, %s131
      %p133 = scmp.eq.s32.totalorder %s39, 0
      %p134 = por %p132, %p133
      %s136 = sadd.s32 %s135, 1
      %p139 = scmp.eq.s32.totalorder %s33, 1
      %p140 = scmp.ne.s32.totalorder %s135, %s137
      %p141 = scmp.eq.s32.totalorder %s33, 0
      %p142 = por %p140, %p141
      %p143 = scmp.ne.s32.totalorder %s135, %s137
      %p144 = scmp.eq.s32.totalorder %s38, 1
      %p145 = por %p143, %p144
      %p146 = scmp.ne.s32.totalorder %s137, %s138
      %p147 = scmp.eq.s32.totalorder %s38, 0
      %p148 = por %p146, %p147
      %p149 = scmp.ne.s32.totalorder %s137, %s138
      %p150 = scmp.eq.s32.totalorder %s39, 1
      %p151 = por %p149, %p150
      %p153 = scmp.ne.s32.totalorder %s138, %s152
      %p154 = scmp.eq.s32.totalorder %s39, 0
      %p155 = por %p153, %p154
      %s157 = sadd.s32 %s156, 1
      %p160 = scmp.eq.s32.totalorder %s33, 1
      %p161 = scmp.ne.s32.totalorder %s156, %s158
      %p162 = scmp.eq.s32.totalorder %s33, 0
      %p163 = por %p161, %p162
      %p164 = scmp.ne.s32.totalorder %s156, %s158
      %p165 = scmp.eq.s32.totalorder %s38, 1
      %p166 = por %p164, %p165
      %p167 = scmp.ne.s32.totalorder %s158, %s159
      %p168 = scmp.eq.s32.totalorder %s38, 0
      %p169 = por %p167, %p168
      %p170 = scmp.ne.s32.totalorder %s158, %s159
      %p171 = scmp.eq.s32.totalorder %s39, 1
      %p172 = por %p170, %p171
      %p174 = scmp.ne.s32.totalorder %s159, %s173
      %p175 = scmp.eq.s32.totalorder %s39, 0
      %p176 = por %p174, %p175
      %s178 = sadd.s32 %s177, 1
      %p181 = scmp.eq.s32.totalorder %s33, 1
      %p182 = scmp.ne.s32.totalorder %s177, %s179
      %p183 = scmp.eq.s32.totalorder %s33, 0
      %p184 = por %p182, %p183
      %p185 = scmp.ne.s32.totalorder %s177, %s179
      %p186 = scmp.eq.s32.totalorder %s38, 1
      %p187 = por %p185, %p186
      %p188 = scmp.ne.s32.totalorder %s179, %s180
      %p189 = scmp.eq.s32.totalorder %s38, 0
      %p190 = por %p188, %p189
      %p191 = scmp.ne.s32.totalorder %s179, %s180
      %p192 = scmp.eq.s32.totalorder %s39, 1
      %p193 = por %p191, %p192
      %p195 = scmp.ne.s32.totalorder %s180, %s194
      %p196 = scmp.eq.s32.totalorder %s39, 0
      %p197 = por %p195, %p196
      %s199 = sadd.s32 %s198, 1
      %p202 = scmp.eq.s32.totalorder %s33, 1
      %p203 = scmp.ne.s32.totalorder %s198, %s200
      %p204 = scmp.eq.s32.totalorder %s33, 0
      %p205 = por %p203, %p204
      %p206 = scmp.ne.s32.totalorder %s198, %s200
      %p207 = scmp.eq.s32.totalorder %s38, 1
      %p208 = por %p206, %p207
      %p209 = scmp.ne.s32.totalorder %s200, %s201
      %p210 = scmp.eq.s32.totalorder %s38, 0
      %p211 = por %p209, %p210
      %p212 = scmp.ne.s32.totalorder %s200, %s201
      %p213 = scmp.eq.s32.totalorder %s39, 1
      %p214 = por %p212, %p213
      %p216 = scmp.ne.s32.totalorder %s201, %s215
      %p217 = scmp.eq.s32.totalorder %s39, 0
      %p218 = por %p216, %p217
      %s220 = sadd.s32 %s219, 1
      %p223 = scmp.eq.s32.totalorder %s33, 1
      %p224 = scmp.ne.s32.totalorder %s219, %s221
      %p225 = scmp.eq.s32.totalorder %s33, 0
      %p226 = por %p224, %p225
      %p227 = scmp.ne.s32.totalorder %s219, %s221
      %p228 = scmp.eq.s32.totalorder %s38, 1
      %p229 = por %p227, %p228
      %p230 = scmp.ne.s32.totalorder %s221, %s222
      %p231 = scmp.eq.s32.totalorder %s38, 0
      %p232 = por %p230, %p231
      %p233 = scmp.ne.s32.totalorder %s221, %s222
      %p234 = scmp.eq.s32.totalorder %s39, 1
      %p235 = por %p233, %p234
      %p237 = scmp.ne.s32.totalorder %s222, %s236
      %p238 = scmp.eq.s32.totalorder %s39, 0
      %p239 = por %p237, %p238
      %s241 = sadd.s32 %s240, 1
      %p244 = scmp.eq.s32.totalorder %s33, 1
      %p245 = scmp.ne.s32.totalorder %s240, %s242
      %p246 = scmp.eq.s32.totalorder %s33, 0
      %p247 = por %p245, %p246
      %p248 = scmp.ne.s32.totalorder %s240, %s242
      %p249 = scmp.eq.s32.totalorder %s38, 1
      %p250 = por %p248, %p249
      %p251 = scmp.ne.s32.totalorder %s242, %s243
      %p252 = scmp.eq.s32.totalorder %s38, 0
      %p253 = por %p251, %p252
      %p254 = scmp.ne.s32.totalorder %s242, %s243
      %p255 = scmp.eq.s32.totalorder %s39, 1
      %p256 = por %p254, %p255
      %p258 = scmp.ne.s32.totalorder %s243, %s257
      %p259 = scmp.eq.s32.totalorder %s39, 0
      %p260 = por %p258, %p259
      %s262 = sadd.s32 %s261, 1
      %p265 = scmp.eq.s32.totalorder %s33, 1
      %p266 = scmp.ne.s32.totalorder %s261, %s263
      %p267 = scmp.eq.s32.totalorder %s33, 0
      %p268 = por %p266, %p267
      %p269 = scmp.ne.s32.totalorder %s261, %s263
      %p270 = scmp.eq.s32.totalorder %s38, 1
      %p271 = por %p269, %p270
      %p272 = scmp.ne.s32.totalorder %s263, %s264
      %p273 = scmp.eq.s32.totalorder %s38, 0
      %p274 = por %p272, %p273
      %p275 = scmp.ne.s32.totalorder %s263, %s264
      %p276 = scmp.eq.s32.totalorder %s39, 1
      %p277 = por %p275, %p276
      %p279 = scmp.ne.s32.totalorder %s264, %s278
      %p280 = scmp.eq.s32.totalorder %s39, 0
      %p281 = por %p279, %p280
      %s283 = sadd.s32 %s282, 1
      %p286 = scmp.eq.s32.totalorder %s33, 1
      %p287 = scmp.ne.s32.totalorder %s282, %s284
      %p288 = scmp.eq.s32.totalorder %s33, 0
      %p289 = por %p287, %p288
      %p290 = scmp.ne.s32.totalorder %s282, %s284
      %p291 = scmp.eq.s32.totalorder %s38, 1
      %p292 = por %p290, %p291
      %p293 = scmp.ne.s32.totalorder %s284, %s285
      %p294 = scmp.eq.s32.totalorder %s38, 0
      %p295 = por %p293, %p294
      %p296 = scmp.ne.s32.totalorder %s284, %s285
      %p297 = scmp.eq.s32.totalorder %s39, 1
      %p298 = por %p296, %p297
      %p300 = scmp.ne.s32.totalorder %s285, %s299
      %p301 = scmp.eq.s32.totalorder %s39, 0
      %p302 = por %p300, %p301
      %s304 = sadd.s32 %s303, 1
      %p307 = scmp.eq.s32.totalorder %s33, 1
      %p308 = scmp.ne.s32.totalorder %s303, %s305
      %p309 = scmp.eq.s32.totalorder %s33, 0
      %p310 = por %p308, %p309
      %p311 = scmp.ne.s32.totalorder %s303, %s305
      %p312 = scmp.eq.s32.totalorder %s38, 1
      %p313 = por %p311, %p312
      %p314 = scmp.ne.s32.totalorder %s305, %s306
      %p315 = scmp.eq.s32.totalorder %s38, 0
      %p316 = por %p314, %p315
      %p317 = scmp.ne.s32.totalorder %s305, %s306
      %p318 = scmp.eq.s32.totalorder %s39, 1
      %p319 = por %p317, %p318
      %p321 = scmp.ne.s32.totalorder %s306, %s320
      %p322 = scmp.eq.s32.totalorder %s39, 0
      %p323 = por %p321, %p322
      %s325 = sadd.s32 %s324, 1
      %p328 = scmp.eq.s32.totalorder %s33, 1
      %p329 = scmp.ne.s32.totalorder %s324, %s326
      %p330 = scmp.eq.s32.totalorder %s33, 0
      %p331 = por %p329, %p330
      %p332 = scmp.ne.s32.totalorder %s324, %s326
      %p333 = scmp.eq.s32.totalorder %s38, 1
      %p334 = por %p332, %p333
      %p335 = scmp.ne.s32.totalorder %s326, %s327
      %p336 = scmp.eq.s32.totalorder %s38, 0
      %p337 = por %p335, %p336
      %p338 = scmp.ne.s32.totalorder %s326, %s327
      %p339 = scmp.eq.s32.totalorder %s39, 1
      %p340 = por %p338, %p339
      %p342 = scmp.ne.s32.totalorder %s327, %s341
      %p343 = scmp.eq.s32.totalorder %s39, 0
      %p344 = por %p342, %p343
      %s346 = sadd.s32 %s345, 1
      %p349 = scmp.eq.s32.totalorder %s33, 1
      %p350 = scmp.ne.s32.totalorder %s345, %s347
      %p351 = scmp.eq.s32.totalorder %s33, 0
      %p352 = por %p350, %p351
      %p353 = scmp.ne.s32.totalorder %s345, %s347
      %p354 = scmp.eq.s32.totalorder %s38, 1
      %p355 = por %p353, %p354
      %p356 = scmp.ne.s32.totalorder %s347, %s348
      %p357 = scmp.eq.s32.totalorder %s38, 0
      %p358 = por %p356, %p357
      %p359 = scmp.ne.s32.totalorder %s347, %s348
      %p360 = scmp.eq.s32.totalorder %s39, 1
      %p361 = por %p359, %p360
      %p363 = scmp.ne.s32.totalorder %s348, %s362
      %p364 = scmp.eq.s32.totalorder %s39, 0
      %p365 = por %p363, %p364
      %s367 = sadd.s32 %s366, 1
      %p370 = scmp.eq.s32.totalorder %s33, 1
      %p371 = scmp.ne.s32.totalorder %s366, %s368
      %p372 = scmp.eq.s32.totalorder %s33, 0
      %p373 = por %p371, %p372
      %p374 = scmp.ne.s32.totalorder %s366, %s368
      %p375 = scmp.eq.s32.totalorder %s38, 1
      %p376 = por %p374, %p375
      %p377 = scmp.ne.s32.totalorder %s368, %s369
      %p378 = scmp.eq.s32.totalorder %s38, 0
      %p379 = por %p377, %p378
      %p380 = scmp.ne.s32.totalorder %s368, %s369
      %p381 = scmp.eq.s32.totalorder %s39, 1
      %p382 = por %p380, %p381
      %p384 = scmp.ne.s32.totalorder %s369, %s383
      %p385 = scmp.eq.s32.totalorder %s39, 0
      %p386 = por %p384, %p385
      %s388 = sadd.s32 %s387, 1
      %p391 = scmp.eq.s32.totalorder %s33, 1
      %p392 = scmp.ne.s32.totalorder %s387, %s389
      %p393 = scmp.eq.s32.totalorder %s33, 0
      %p394 = por %p392, %p393
      %p395 = scmp.ne.s32.totalorder %s387, %s389
      %p396 = scmp.eq.s32.totalorder %s38, 1
      %p397 = por %p395, %p396
      %p398 = scmp.ne.s32.totalorder %s389, %s390
      %p399 = scmp.eq.s32.totalorder %s38, 0
      %p400 = por %p398, %p399
      %p401 = scmp.ne.s32.totalorder %s389, %s390
      %p402 = scmp.eq.s32.totalorder %s39, 1
      %p403 = por %p401, %p402
      %p405 = scmp.ne.s32.totalorder %s390, %s404
      %p406 = scmp.eq.s32.totalorder %s39, 0
      %p407 = por %p405, %p406
      %s409 = sadd.s32 %s408, 1
      %p412 = scmp.eq.s32.totalorder %s33, 1
      %p413 = scmp.ne.s32.totalorder %s408, %s410
      %p414 = scmp.eq.s32.totalorder %s33, 0
      %p415 = por %p413, %p414
      %p416 = scmp.ne.s32.totalorder %s408, %s410
      %p417 = scmp.eq.s32.totalorder %s38, 1
      %p418 = por %p416, %p417
      %p419 = scmp.ne.s32.totalorder %s410, %s411
      %p420 = scmp.eq.s32.totalorder %s38, 0
      %p421 = por %p419, %p420
      %p422 = scmp.ne.s32.totalorder %s410, %s411
      %p423 = scmp.eq.s32.totalorder %s39, 1
      %p424 = por %p422, %p423
      %p426 = scmp.ne.s32.totalorder %s411, %s425
      %p427 = scmp.eq.s32.totalorder %s39, 0
      %p428 = por %p426, %p427
      %s430 = sadd.s32 %s429, 1
      %p433 = scmp.eq.s32.totalorder %s33, 1
      %p434 = scmp.ne.s32.totalorder %s429, %s431
      %p435 = scmp.eq.s32.totalorder %s33, 0
      %p436 = por %p434, %p435
      %p437 = scmp.ne.s32.totalorder %s429, %s431
      %p438 = scmp.eq.s32.totalorder %s38, 1
      %p439 = por %p437, %p438
      %p440 = scmp.ne.s32.totalorder %s431, %s432
      %p441 = scmp.eq.s32.totalorder %s38, 0
      %p442 = por %p440, %p441
      %p443 = scmp.ne.s32.totalorder %s431, %s432
      %p444 = scmp.eq.s32.totalorder %s39, 1
      %p445 = por %p443, %p444
      %p447 = scmp.ne.s32.totalorder %s432, %s446
      %p448 = scmp.eq.s32.totalorder %s39, 0
      %p449 = por %p447, %p448
      %s451 = sadd.s32 %s450, 1
      %p454 = scmp.eq.s32.totalorder %s33, 1
      %p455 = scmp.ne.s32.totalorder %s450, %s452
      %p456 = scmp.eq.s32.totalorder %s33, 0
      %p457 = por %p455, %p456
      %p458 = scmp.ne.s32.totalorder %s450, %s452
      %p459 = scmp.eq.s32.totalorder %s38, 1
      %p460 = por %p458, %p459
      %p461 = scmp.ne.s32.totalorder %s452, %s453
      %p462 = scmp.eq.s32.totalorder %s38, 0
      %p463 = por %p461, %p462
      %p464 = scmp.ne.s32.totalorder %s452, %s453
      %p465 = scmp.eq.s32.totalorder %s39, 1
      %p466 = por %p464, %p465
      %p468 = scmp.ne.s32.totalorder %s453, %s467
      %p469 = scmp.eq.s32.totalorder %s39, 0
      %p470 = por %p468, %p469
      %s472 = sadd.s32 %s471, 1
      %p475 = scmp.eq.s32.totalorder %s33, 1
      %p476 = scmp.ne.s32.totalorder %s471, %s473
      %p477 = scmp.eq.s32.totalorder %s33, 0
      %p478 = por %p476, %p477
      %p479 = scmp.ne.s32.totalorder %s471, %s473
      %p480 = scmp.eq.s32.totalorder %s38, 1
      %p481 = por %p479, %p480
      %p482 = scmp.ne.s32.totalorder %s473, %s474
      %p483 = scmp.eq.s32.totalorder %s38, 0
      %p484 = por %p482, %p483
      %p485 = scmp.ne.s32.totalorder %s473, %s474
      %p486 = scmp.eq.s32.totalorder %s39, 1
      %p487 = por %p485, %p486
      %p489 = scmp.ne.s32.totalorder %s474, %s488
      %p490 = scmp.eq.s32.totalorder %s39, 0
      %p491 = por %p489, %p490
      %s493 = sadd.s32 %s492, 1
      %p496 = scmp.eq.s32.totalorder %s33, 1
      %p497 = scmp.ne.s32.totalorder %s492, %s494
      %p498 = scmp.eq.s32.totalorder %s33, 0
      %p499 = por %p497, %p498
      %p500 = scmp.ne.s32.totalorder %s492, %s494
      %p501 = scmp.eq.s32.totalorder %s38, 1
      %p502 = por %p500, %p501
      %p503 = scmp.ne.s32.totalorder %s494, %s495
      %p504 = scmp.eq.s32.totalorder %s38, 0
      %p505 = por %p503, %p504
      %p506 = scmp.ne.s32.totalorder %s494, %s495
      %p507 = scmp.eq.s32.totalorder %s39, 1
      %p508 = por %p506, %p507
      %p510 = scmp.ne.s32.totalorder %s495, %s509
      %p511 = scmp.eq.s32.totalorder %s39, 0
      %p512 = por %p510, %p511
      %s514 = sadd.s32 %s513, 1
      %p517 = scmp.eq.s32.totalorder %s33, 1
      %p518 = scmp.ne.s32.totalorder %s513, %s515
      %p519 = scmp.eq.s32.totalorder %s33, 0
      %p520 = por %p518, %p519
      %p521 = scmp.ne.s32.totalorder %s513, %s515
      %p522 = scmp.eq.s32.totalorder %s38, 1
      %p523 = por %p521, %p522
      %p524 = scmp.ne.s32.totalorder %s515, %s516
      %p525 = scmp.eq.s32.totalorder %s38, 0
      %p526 = por %p524, %p525
      %p527 = scmp.ne.s32.totalorder %s515, %s516
      %p528 = scmp.eq.s32.totalorder %s39, 1
      %p529 = por %p527, %p528
      %p531 = scmp.ne.s32.totalorder %s516, %s530
      %p532 = scmp.eq.s32.totalorder %s39, 0
      %p533 = por %p531, %p532
      %s535 = sadd.s32 %s534, 1
      %p538 = scmp.eq.s32.totalorder %s33, 1
      %p539 = scmp.ne.s32.totalorder %s534, %s536
      %p540 = scmp.eq.s32.totalorder %s33, 0
      %p541 = por %p539, %p540
      %p542 = scmp.ne.s32.totalorder %s534, %s536
      %p543 = scmp.eq.s32.totalorder %s38, 1
      %p544 = por %p542, %p543
      %p545 = scmp.ne.s32.totalorder %s536, %s537
      %p546 = scmp.eq.s32.totalorder %s38, 0
      %p547 = por %p545, %p546
      %p548 = scmp.ne.s32.totalorder %s536, %s537
      %p549 = scmp.eq.s32.totalorder %s39, 1
      %p550 = por %p548, %p549
      %p552 = scmp.ne.s32.totalorder %s537, %s551
      %p553 = scmp.eq.s32.totalorder %s39, 0
      %p554 = por %p552, %p553
      %s555 = ssub.s32 %s33, %s40
      %p556 = scmp.eq.s32.totalorder %s555, 0
      %s558 = sadd.s32 %s557, 1
      %s559 = scalar_select %p556, %s557, %s558
      %p562 = pneg %p556
      %p563 = scmp.eq.s32.totalorder %s33, 1
      %p564 = por %p562, %p563
      %p565 = scmp.ne.s32.totalorder %s557, %s560
      %p566 = scmp.eq.s32.totalorder %s33, 0
      %p567 = por %p565, %p566
      %p568 = scmp.ne.s32.totalorder %s557, %s560
      %p569 = scmp.eq.s32.totalorder %s38, 1
      %p570 = por %p568, %p569
      %p571 = scmp.ne.s32.totalorder %s560, %s561
      %p572 = scmp.eq.s32.totalorder %s38, 0
      %p573 = por %p571, %p572
      %p574 = scmp.ne.s32.totalorder %s560, %s561
      %p575 = scmp.eq.s32.totalorder %s39, 1
      %p576 = por %p574, %p575
      %p578 = scmp.ne.s32.totalorder %s561, %s577
      %p579 = scmp.eq.s32.totalorder %s39, 0
      %p580 = por %p578, %p579
      %p581 = scmp.le.s32.totalorder 1, %s33
      %p582 = scmp.lt.s32.totalorder %s33, 3
      %p583 = pnand %p581, %p582
      %p584 = pneg %p583
      // Predicated region
      $region9: #{bert_binary_classifier_forward.1} parent=5 // pred_check
        _
      $region10: #{bert_binary_classifier_forward.1} parent=5 // pred_check_branch
        %586 = sbr.rel (%p583) target = $region12
      $region11: #{bert_binary_classifier_forward.1} parent=5 // pred_region
        %s587 = ssub.s32 %s33, 1
        // Predicated region
        $region13: #{bert_binary_classifier_forward.1} parent=11 // pred_check
          %p588 = pneg %p106
        $region14: #{bert_binary_classifier_forward.1} parent=11 // pred_check_branch
          %590 = sbr.rel (%p588) target = $region16
        $region15: #{bert_binary_classifier_forward.1} parent=11 // pred_region
          _
        $region16: #{bert_binary_classifier_forward.1} parent=11 // pred_fallthru
          _
        // Predicated region
        $region17: #{bert_binary_classifier_forward.1} parent=11 // pred_check
          %p591 = pneg %p127
        $region18: #{bert_binary_classifier_forward.1} parent=11 // pred_check_branch
          %593 = sbr.rel (%p591) target = $region20
        $region19: #{bert_binary_classifier_forward.1} parent=11 // pred_region
          _
        $region20: #{bert_binary_classifier_forward.1} parent=11 // pred_fallthru
          _
        // Predicated region
        $region21: #{bert_binary_classifier_forward.1} parent=11 // pred_check
          %p594 = pneg %p148
        $region22: #{bert_binary_classifier_forward.1} parent=11 // pred_check_branch
          %596 = sbr.rel (%p594) target = $region24
        $region23: #{bert_binary_classifier_forward.1} parent=11 // pred_region
          _
        $region24: #{bert_binary_classifier_forward.1} parent=11 // pred_fallthru
          _
        // Predicated region
        $region25: #{bert_binary_classifier_forward.1} parent=11 // pred_check
          %p597 = pneg %p169
        $region26: #{bert_binary_classifier_forward.1} parent=11 // pred_check_branch
          %599 = sbr.rel (%p597) target = $region28
        $region27: #{bert_binary_classifier_forward.1} parent=11 // pred_region
          _
        $region28: #{bert_binary_classifier_forward.1} parent=11 // pred_fallthru
          _
        // Predicated region
        $region29: #{bert_binary_classifier_forward.1} parent=11 // pred_check
          %p600 = pneg %p190
        $region30: #{bert_binary_classifier_forward.1} parent=11 // pred_check_branch
          %602 = sbr.rel (%p600) target = $region32
        $region31: #{bert_binary_classifier_forward.1} parent=11 // pred_region
          _
        $region32: #{bert_binary_classifier_forward.1} parent=11 // pred_fallthru
          _
        // Predicated region
        $region33: #{bert_binary_classifier_forward.1} parent=11 // pred_check
          %p603 = pneg %p211
        $region34: #{bert_binary_classifier_forward.1} parent=11 // pred_check_branch
          %605 = sbr.rel (%p603) target = $region36
        $region35: #{bert_binary_classifier_forward.1} parent=11 // pred_region
          _
        $region36: #{bert_binary_classifier_forward.1} parent=11 // pred_fallthru
          _
        // Predicated region
        $region37: #{bert_binary_classifier_forward.1} parent=11 // pred_check
          %p606 = pneg %p232
        $region38: #{bert_binary_classifier_forward.1} parent=11 // pred_check_branch
          %608 = sbr.rel (%p606) target = $region40
        $region39: #{bert_binary_classifier_forward.1} parent=11 // pred_region
          _
        $region40: #{bert_binary_classifier_forward.1} parent=11 // pred_fallthru
          _
        // Predicated region
        $region41: #{bert_binary_classifier_forward.1} parent=11 // pred_check
          %p609 = pneg %p253
        $region42: #{bert_binary_classifier_forward.1} parent=11 // pred_check_branch
          %611 = sbr.rel (%p609) target = $region44
        $region43: #{bert_binary_classifier_forward.1} parent=11 // pred_region
          _
        $region44: #{bert_binary_classifier_forward.1} parent=11 // pred_fallthru
          _
        // Predicated region
        $region45: #{bert_binary_classifier_forward.1} parent=11 // pred_check
          %p612 = pneg %p274
        $region46: #{bert_binary_classifier_forward.1} parent=11 // pred_check_branch
          %614 = sbr.rel (%p612) target = $region48
        $region47: #{bert_binary_classifier_forward.1} parent=11 // pred_region
          _
        $region48: #{bert_binary_classifier_forward.1} parent=11 // pred_fallthru
          _
        // Predicated region
        $region49: #{bert_binary_classifier_forward.1} parent=11 // pred_check
          %p615 = pneg %p295
        $region50: #{bert_binary_classifier_forward.1} parent=11 // pred_check_branch
          %617 = sbr.rel (%p615) target = $region52
        $region51: #{bert_binary_classifier_forward.1} parent=11 // pred_region
          _
        $region52: #{bert_binary_classifier_forward.1} parent=11 // pred_fallthru
          _
        // Predicated region
        $region53: #{bert_binary_classifier_forward.1} parent=11 // pred_check
          %p618 = pneg %p316
        $region54: #{bert_binary_classifier_forward.1} parent=11 // pred_check_branch
          %620 = sbr.rel (%p618) target = $region56
        $region55: #{bert_binary_classifier_forward.1} parent=11 // pred_region
          _
        $region56: #{bert_binary_classifier_forward.1} parent=11 // pred_fallthru
          _
        // Predicated region
        $region57: #{bert_binary_classifier_forward.1} parent=11 // pred_check
          %p621 = pneg %p337
        $region58: #{bert_binary_classifier_forward.1} parent=11 // pred_check_branch
          %623 = sbr.rel (%p621) target = $region60
        $region59: #{bert_binary_classifier_forward.1} parent=11 // pred_region
          _
        $region60: #{bert_binary_classifier_forward.1} parent=11 // pred_fallthru
          _
        // Predicated region
        $region61: #{bert_binary_classifier_forward.1} parent=11 // pred_check
          %p624 = pneg %p358
        $region62: #{bert_binary_classifier_forward.1} parent=11 // pred_check_branch
          %626 = sbr.rel (%p624) target = $region64
        $region63: #{bert_binary_classifier_forward.1} parent=11 // pred_region
          _
        $region64: #{bert_binary_classifier_forward.1} parent=11 // pred_fallthru
          _
        // Predicated region
        $region65: #{bert_binary_classifier_forward.1} parent=11 // pred_check
          %p627 = pneg %p379
        $region66: #{bert_binary_classifier_forward.1} parent=11 // pred_check_branch
          %629 = sbr.rel (%p627) target = $region68
        $region67: #{bert_binary_classifier_forward.1} parent=11 // pred_region
          _
        $region68: #{bert_binary_classifier_forward.1} parent=11 // pred_fallthru
          _
        // Predicated region
        $region69: #{bert_binary_classifier_forward.1} parent=11 // pred_check
          %p630 = pneg %p400
        $region70: #{bert_binary_classifier_forward.1} parent=11 // pred_check_branch
          %632 = sbr.rel (%p630) target = $region72
        $region71: #{bert_binary_classifier_forward.1} parent=11 // pred_region
          _
        $region72: #{bert_binary_classifier_forward.1} parent=11 // pred_fallthru
          _
        // Predicated region
        $region73: #{bert_binary_classifier_forward.1} parent=11 // pred_check
          %p633 = pneg %p421
        $region74: #{bert_binary_classifier_forward.1} parent=11 // pred_check_branch
          %635 = sbr.rel (%p633) target = $region76
        $region75: #{bert_binary_classifier_forward.1} parent=11 // pred_region
          _
        $region76: #{bert_binary_classifier_forward.1} parent=11 // pred_fallthru
          _
        // Predicated region
        $region77: #{bert_binary_classifier_forward.1} parent=11 // pred_check
          %p636 = pneg %p442
        $region78: #{bert_binary_classifier_forward.1} parent=11 // pred_check_branch
          %638 = sbr.rel (%p636) target = $region80
        $region79: #{bert_binary_classifier_forward.1} parent=11 // pred_region
          _
        $region80: #{bert_binary_classifier_forward.1} parent=11 // pred_fallthru
          _
        // Predicated region
        $region81: #{bert_binary_classifier_forward.1} parent=11 // pred_check
          %p639 = pneg %p463
        $region82: #{bert_binary_classifier_forward.1} parent=11 // pred_check_branch
          %641 = sbr.rel (%p639) target = $region84
        $region83: #{bert_binary_classifier_forward.1} parent=11 // pred_region
          _
        $region84: #{bert_binary_classifier_forward.1} parent=11 // pred_fallthru
          _
        // Predicated region
        $region85: #{bert_binary_classifier_forward.1} parent=11 // pred_check
          %p642 = pneg %p484
        $region86: #{bert_binary_classifier_forward.1} parent=11 // pred_check_branch
          %644 = sbr.rel (%p642) target = $region88
        $region87: #{bert_binary_classifier_forward.1} parent=11 // pred_region
          _
        $region88: #{bert_binary_classifier_forward.1} parent=11 // pred_fallthru
          _
        // Predicated region
        $region89: #{bert_binary_classifier_forward.1} parent=11 // pred_check
          %p645 = pneg %p505
        $region90: #{bert_binary_classifier_forward.1} parent=11 // pred_check_branch
          %647 = sbr.rel (%p645) target = $region92
        $region91: #{bert_binary_classifier_forward.1} parent=11 // pred_region
          _
        $region92: #{bert_binary_classifier_forward.1} parent=11 // pred_fallthru
          _
        // Predicated region
        $region93: #{bert_binary_classifier_forward.1} parent=11 // pred_check
          %p648 = pneg %p526
        $region94: #{bert_binary_classifier_forward.1} parent=11 // pred_check_branch
          %650 = sbr.rel (%p648) target = $region96
        $region95: #{bert_binary_classifier_forward.1} parent=11 // pred_region
          _
        $region96: #{bert_binary_classifier_forward.1} parent=11 // pred_fallthru
          _
        // Predicated region
        $region97: #{bert_binary_classifier_forward.1} parent=11 // pred_check
          %p651 = pneg %p547
        $region98: #{bert_binary_classifier_forward.1} parent=11 // pred_check_branch
          %653 = sbr.rel (%p651) target = $region100
        $region99: #{bert_binary_classifier_forward.1} parent=11 // pred_region
          _
        $region100: #{bert_binary_classifier_forward.1} parent=11 // pred_fallthru
          _
      $region12: #{bert_binary_classifier_forward.1} parent=5 // pred_fallthru
        _
      %p654 = scmp.lt.s32.totalorder %s33, 2
      // Predicated region
      $region101: #{bert_binary_classifier_forward.1} parent=5 // pred_check
        %p655 = pneg %p654
      $region102: #{bert_binary_classifier_forward.1} parent=5 // pred_check_branch
        %657 = sbr.rel (%p655) target = $region104
      $region103: #{bert_binary_classifier_forward.1} parent=5 // pred_region
        // Predicated region
        $region105: #{bert_binary_classifier_forward.1} parent=103 // pred_check
          %p658 = pneg %p53
        $region106: #{bert_binary_classifier_forward.1} parent=103 // pred_check_branch
          %660 = sbr.rel (%p658) target = $region108
        $region107: #{bert_binary_classifier_forward.1} parent=103 // pred_region
          %p661 = scmp.lt.s32.totalorder %s33, 1
          %s662 = scalar_select %p661, %s33, 1
          %s663 = smul.addr %s662, 8
          %s664 = scalar_lea.vmem %s0, %s663
        $region108: #{bert_binary_classifier_forward.1} parent=103 // pred_fallthru
          _
        // Predicated region
        $region109: #{bert_binary_classifier_forward.1} parent=103 // pred_check
          %p665 = pneg %p79
        $region110: #{bert_binary_classifier_forward.1} parent=103 // pred_check_branch
          %667 = sbr.rel (%p665) target = $region112
        $region111: #{bert_binary_classifier_forward.1} parent=103 // pred_region
          %p668 = scmp.lt.s32.totalorder %s33, 1
          %s669 = scalar_select %p668, %s33, 1
          %s670 = scalar_lea.vmem %s1, %s669
        $region112: #{bert_binary_classifier_forward.1} parent=103 // pred_fallthru
          _
      $region104: #{bert_binary_classifier_forward.1} parent=5 // pred_fallthru
        _
      %p671 = scmp.le.s32.totalorder 1, %s33
      %p672 = scmp.lt.s32.totalorder %s33, 3
      %p673 = pnand %p671, %p672
      %p674 = pneg %p673
      // Predicated region
      $region113: #{bert_binary_classifier_forward.1} parent=5 // pred_check
        _
      $region114: #{bert_binary_classifier_forward.1} parent=5 // pred_check_branch
        %676 = sbr.rel (%p673) target = $region116
      $region115: #{bert_binary_classifier_forward.1} parent=5 // pred_region
        %s677 = ssub.s32 %s33, 1
        %p678 = scmp.lt.s32.totalorder %s38, 1
        %s679 = scalar_select %p678, %s38, 1
        %s680 = smul.addr %s679, 8
        %s681 = scalar_lea.vmem %s0, %s680
        %p682 = pneg %p59
        %p683 = pneg %p56
        %p684 = scmp.lt.s32.totalorder %s38, 1
        %s685 = scalar_select %p684, %s38, 1
        %s686 = scalar_lea.vmem %s1, %s685
        %p687 = pneg %p85
        %p688 = pneg %p82
        %p689 = pneg %p106
        %p690 = pneg %p103
        %p691 = pneg %p127
        %p692 = pneg %p124
        %p693 = pneg %p148
        %p694 = pneg %p145
        %p695 = pneg %p169
        %p696 = pneg %p166
        %p697 = pneg %p190
        %p698 = pneg %p187
        %p699 = pneg %p211
        %p700 = pneg %p208
        %p701 = pneg %p232
        %p702 = pneg %p229
        %p703 = pneg %p253
        %p704 = pneg %p250
        %p705 = pneg %p274
        %p706 = pneg %p271
        %p707 = pneg %p295
        %p708 = pneg %p292
        %p709 = pneg %p316
        %p710 = pneg %p313
        %p711 = pneg %p337
        %p712 = pneg %p334
        %p713 = pneg %p358
        %p714 = pneg %p355
        %p715 = pneg %p379
        %p716 = pneg %p376
        %p717 = pneg %p400
        %p718 = pneg %p397
        %p719 = pneg %p421
        %p720 = pneg %p418
        %p721 = pneg %p442
        %p722 = pneg %p439
        %p723 = pneg %p463
        %p724 = pneg %p460
        %p725 = pneg %p484
        %p726 = pneg %p481
        %p727 = pneg %p505
        %p728 = pneg %p502
        %p729 = pneg %p526
        %p730 = pneg %p523
        %p731 = pneg %p547
        %p732 = pneg %p544
        %p733 = pneg %p573
        %p734 = pneg %p570
        %s735 = sand.u32 %s560, 1
        %s736 = scalar_lea.sflag [#allocation3], %s735
        %s737 = sand.u32 %s560, 1
        %s738 = scalar_lea.vmem [#allocation2], %s737
        %p739 = scmp.lt.s32.totalorder %s38, 1
        %s740 = scalar_select %p739, %s38, 1
        %s741 = smul.addr %s740, 8
        %s742 = scalar_lea.vmem %s0, %s741
        %p743 = scmp.lt.s32.totalorder %s38, 1
        %s744 = scalar_select %p743, %s38, 1
        %s745 = scalar_lea.vmem %s1, %s744
        %v747 = vld [vmem:[%s742] sm:$0xff]
        %v748 = vld [vmem:[%s2] sm:$0x1]
        %v749 = vld [vmem:[%s3] sm:$0x1]
        %vm750 = vcmask 261120
        %v751 = vsel %vm750, %v747, 0.0
        %752 = vadd.xlane.f32.xlu0 %v751
        %v753 = vpop.xlane.xlu0 %752
        %v754 = vrcp.pop 32.0
        %v755 = vmul.f32 32.0, %v754
        %v756 = vsub.f32 1.0, %v755
        %v757 = vmul.f32 %v754, %v756
        %v758 = vadd.f32 %v754, %v757
        %vm759 = vweird.f32 %v754
        %v760 = vsel %vm759, %v754, %v758
        %v761 = vmul.f32 %v753, %v760
        %v762 = vsub.f32 %v747, %v761
        %v763 = vmul.f32 %v762, %v762
        %v764 = vsel %vm750, %v763, 0.0
        %765 = vadd.xlane.f32.xlu0 %v764
        %v766 = vpop.xlane.xlu0 %765
        %v767 = vmul.f32 %v766, %v760
        %v768 = vadd.f32 %v767, 1e-12
        %v769 = vrsqrt.pop %v768
        %v770 = vmul.f32 %v769, %v768
        %v771 = vmul.f32 %v770, %v769
        %v772 = vmul.f32 0.5, %v771
        %v773 = vsub.f32 1.5, %v772
        %v774 = vmul.f32 %v769, %v773
        %vm775 = vweird.f32 %v768
        %vm776 = vweird.f32 %v769
        %vm777 = vmor %vm775, %vm776
        %v778 = vsel %vm777, %v769, %v774
        %v779 = vmul.f32 %v762, %v778
        %v781 = vperm.slane %v748, 0
        %v783 = vmul.f32 %v779, %v781
        %v785 = vperm.slane %v749, 0
        %v787 = vadd.f32 %v783, %v785
        %v788 = vpack.c.bf16 %v787, %v787
        %v789 = vld [vmem:[%s4] sm:$0xf]
        %v790 = vld [vmem:[%s4 + $0x4] sm:$0xf]
        %v791 = vld [vmem:[%s4 + $0x8] sm:$0xf]
        %v792 = vld [vmem:[%s4 + $0xc] sm:$0xf]
        %v793 = vld [vmem:[%s4 + $0x10] sm:$0xf]
        %v794 = vld [vmem:[%s4 + $0x14] sm:$0xf]
        %v795 = vld [vmem:[%s4 + $0x18] sm:$0xf]
        %v796 = vld [vmem:[%s4 + $0x1c] sm:$0xf]
        %v797 = vld [vmem:[%s4 + $0x20] sm:$0xf]
        %v798 = vld [vmem:[%s4 + $0x24] sm:$0xf]
        %v799 = vld [vmem:[%s4 + $0x28] sm:$0xf]
        %v800 = vld [vmem:[%s4 + $0x2c] sm:$0xf]
        %v801 = vld [vmem:[%s4 + $0x30] sm:$0xf]
        %v802 = vld [vmem:[%s4 + $0x34] sm:$0xf]
        %v803 = vld [vmem:[%s4 + $0x38] sm:$0xf]
        %v804 = vld [vmem:[%s4 + $0x3c] sm:$0xf]
        %v805 = vld [vmem:[%s5] sm:$0x1]
        %v806 = vld [vmem:[%s5 + $0x1] sm:$0x1]
        %v807 = vld [vmem:[%s5 + $0x2] sm:$0x1]
        %v808 = vld [vmem:[%s5 + $0x3] sm:$0x1]
        %v813 = vperm.slane %v805, 0
        %v814 = vperm.slane %v806, 0
        %v815 = vperm.slane %v807, 0
        %v816 = vperm.slane %v808, 0
        %v825 = vunpack.c.l.b16 %v789
        %v826 = vunpack.c.l.b16 %v790
        %v827 = vunpack.c.l.b16 %v791
        %v828 = vunpack.c.l.b16 %v792
        %v829 = vpack.c.b16 %v826, %v825
        %v830 = vpack.c.b16 %v828, %v827
        %v834 = vsel %vm750, %v788, 0
        %836 = vmatpush.bf16.msra.mxu0 0
        %837 = vmatpush.bf16.msra.mxu0 0
        %838 = vmatpush.bf16.msra.mxu0 0
        %839 = vmatpush.bf16.msra.mxu0 0
        %840 = vmatpush.bf16.msra.mxu0 0
        %841 = vmatpush.bf16.msra.mxu0 0
        %842 = vmatpush.bf16.msra.mxu0 %v830
        %843 = vmatpush.bf16.msra.mxu0 %v829
        %844 = vmatmul.bf16.gmra.mxu0 %v834
        %v845 = vpop.f32.mrf.mxu0
        %v846 = vadd.f32 %v813, %v845
        %v847 = vpop.f32.mrf.mxu0
        %848 = vdwg.mxu0
        %v853 = vunpack.c.l.b16 %v793
        %v854 = vunpack.c.l.b16 %v794
        %v855 = vunpack.c.l.b16 %v795
        %v856 = vunpack.c.l.b16 %v796
        %v857 = vpack.c.b16 %v854, %v853
        %v858 = vpack.c.b16 %v856, %v855
        %861 = vmatpush.bf16.msra.mxu0 0
        %862 = vmatpush.bf16.msra.mxu0 0
        %863 = vmatpush.bf16.msra.mxu0 0
        %864 = vmatpush.bf16.msra.mxu0 0
        %865 = vmatpush.bf16.msra.mxu0 0
        %866 = vmatpush.bf16.msra.mxu0 0
        %867 = vmatpush.bf16.msra.mxu0 %v858
        %868 = vmatpush.bf16.msra.mxu0 %v857
        %869 = vmatmul.bf16.gmra.mxu0 %v834
        %v870 = vpop.f32.mrf.mxu0
        %v871 = vadd.f32 %v814, %v870
        %v872 = vpop.f32.mrf.mxu0
        %873 = vdwg.mxu0
        %v878 = vunpack.c.l.b16 %v797
        %v879 = vunpack.c.l.b16 %v798
        %v880 = vunpack.c.l.b16 %v799
        %v881 = vunpack.c.l.b16 %v800
        %v882 = vpack.c.b16 %v879, %v878
        %v883 = vpack.c.b16 %v881, %v880
        %886 = vmatpush.bf16.msra.mxu0 0
        %887 = vmatpush.bf16.msra.mxu0 0
        %888 = vmatpush.bf16.msra.mxu0 0
        %889 = vmatpush.bf16.msra.mxu0 0
        %890 = vmatpush.bf16.msra.mxu0 0
        %891 = vmatpush.bf16.msra.mxu0 0
        %892 = vmatpush.bf16.msra.mxu0 %v883
        %893 = vmatpush.bf16.msra.mxu0 %v882
        %894 = vmatmul.bf16.gmra.mxu0 %v834
        %v895 = vpop.f32.mrf.mxu0
        %v896 = vadd.f32 %v815, %v895
        %v897 = vpop.f32.mrf.mxu0
        %898 = vdwg.mxu0
        %v903 = vunpack.c.l.b16 %v801
        %v904 = vunpack.c.l.b16 %v802
        %v905 = vunpack.c.l.b16 %v803
        %v906 = vunpack.c.l.b16 %v804
        %v907 = vpack.c.b16 %v904, %v903
        %v908 = vpack.c.b16 %v906, %v905
        %911 = vmatpush.bf16.msra.mxu0 0
        %912 = vmatpush.bf16.msra.mxu0 0
        %913 = vmatpush.bf16.msra.mxu0 0
        %914 = vmatpush.bf16.msra.mxu0 0
        %915 = vmatpush.bf16.msra.mxu0 0
        %916 = vmatpush.bf16.msra.mxu0 0
        %917 = vmatpush.bf16.msra.mxu0 %v908
        %918 = vmatpush.bf16.msra.mxu0 %v907
        %919 = vmatmul.bf16.gmra.mxu0 %v834
        %v920 = vpop.f32.mrf.mxu0
        %v921 = vadd.f32 %v816, %v920
        %v922 = vpop.f32.mrf.mxu0
        %923 = vdwg.mxu0
        %v924 = vpack.c.bf16 %v846, %v846
        %v925 = vpack.c.bf16 %v871, %v871
        %v926 = vpack.c.bf16 %v896, %v896
        %v927 = vpack.c.bf16 %v921, %v921
        %v928 = vld [vmem:[%s6] sm:$0xf]
        %v929 = vld [vmem:[%s6 + $0x4] sm:$0xf]
        %v930 = vld [vmem:[%s6 + $0x8] sm:$0xf]
        %v931 = vld [vmem:[%s6 + $0xc] sm:$0xf]
        %v932 = vld [vmem:[%s6 + $0x10] sm:$0xf]
        %v933 = vld [vmem:[%s6 + $0x14] sm:$0xf]
        %v934 = vld [vmem:[%s6 + $0x18] sm:$0xf]
        %v935 = vld [vmem:[%s6 + $0x1c] sm:$0xf]
        %v936 = vld [vmem:[%s6 + $0x20] sm:$0xf]
        %v937 = vld [vmem:[%s6 + $0x24] sm:$0xf]
        %v938 = vld [vmem:[%s6 + $0x28] sm:$0xf]
        %v939 = vld [vmem:[%s6 + $0x2c] sm:$0xf]
        %v940 = vld [vmem:[%s6 + $0x30] sm:$0xf]
        %v941 = vld [vmem:[%s6 + $0x34] sm:$0xf]
        %v942 = vld [vmem:[%s6 + $0x38] sm:$0xf]
        %v943 = vld [vmem:[%s6 + $0x3c] sm:$0xf]
        %v944 = vld [vmem:[%s7] sm:$0x1]
        %v945 = vld [vmem:[%s7 + $0x1] sm:$0x1]
        %v946 = vld [vmem:[%s7 + $0x2] sm:$0x1]
        %v947 = vld [vmem:[%s7 + $0x3] sm:$0x1]
        %v952 = vperm.slane %v944, 0
        %v953 = vperm.slane %v945, 0
        %v954 = vperm.slane %v946, 0
        %v955 = vperm.slane %v947, 0
        %v964 = vunpack.c.l.b16 %v928
        %v965 = vunpack.c.l.b16 %v929
        %v966 = vunpack.c.l.b16 %v930
        %v967 = vunpack.c.l.b16 %v931
        %v968 = vpack.c.b16 %v965, %v964
        %v969 = vpack.c.b16 %v967, %v966
        %972 = vmatpush.bf16.msra.mxu0 0
        %973 = vmatpush.bf16.msra.mxu0 0
        %974 = vmatpush.bf16.msra.mxu0 0
        %975 = vmatpush.bf16.msra.mxu0 0
        %976 = vmatpush.bf16.msra.mxu0 0
        %977 = vmatpush.bf16.msra.mxu0 0
        %978 = vmatpush.bf16.msra.mxu0 %v969
        %979 = vmatpush.bf16.msra.mxu0 %v968
        %980 = vmatmul.bf16.gmra.mxu0 %v834
        %v981 = vpop.f32.mrf.mxu0
        %v982 = vadd.f32 %v952, %v981
        %v983 = vpop.f32.mrf.mxu0
        %984 = vdwg.mxu0
        %v989 = vunpack.c.l.b16 %v932
        %v990 = vunpack.c.l.b16 %v933
        %v991 = vunpack.c.l.b16 %v934
        %v992 = vunpack.c.l.b16 %v935
        %v993 = vpack.c.b16 %v990, %v989
        %v994 = vpack.c.b16 %v992, %v991
        %997 = vmatpush.bf16.msra.mxu0 0
        %998 = vmatpush.bf16.msra.mxu0 0
        %999 = vmatpush.bf16.msra.mxu0 0
        %1000 = vmatpush.bf16.msra.mxu0 0
        %1001 = vmatpush.bf16.msra.mxu0 0
        %1002 = vmatpush.bf16.msra.mxu0 0
        %1003 = vmatpush.bf16.msra.mxu0 %v994
        %1004 = vmatpush.bf16.msra.mxu0 %v993
        %1005 = vmatmul.bf16.gmra.mxu0 %v834
        %v1006 = vpop.f32.mrf.mxu0
        %v1007 = vadd.f32 %v953, %v1006
        %v1008 = vpop.f32.mrf.mxu0
        %1009 = vdwg.mxu0
        %v1014 = vunpack.c.l.b16 %v936
        %v1015 = vunpack.c.l.b16 %v937
        %v1016 = vunpack.c.l.b16 %v938
        %v1017 = vunpack.c.l.b16 %v939
        %v1018 = vpack.c.b16 %v1015, %v1014
        %v1019 = vpack.c.b16 %v1017, %v1016
        %1022 = vmatpush.bf16.msra.mxu0 0
        %1023 = vmatpush.bf16.msra.mxu0 0
        %1024 = vmatpush.bf16.msra.mxu0 0
        %1025 = vmatpush.bf16.msra.mxu0 0
        %1026 = vmatpush.bf16.msra.mxu0 0
        %1027 = vmatpush.bf16.msra.mxu0 0
        %1028 = vmatpush.bf16.msra.mxu0 %v1019
        %1029 = vmatpush.bf16.msra.mxu0 %v1018
        %1030 = vmatmul.bf16.gmra.mxu0 %v834
        %v1031 = vpop.f32.mrf.mxu0
        %v1032 = vadd.f32 %v954, %v1031
        %v1033 = vpop.f32.mrf.mxu0
        %1034 = vdwg.mxu0
        %v1039 = vunpack.c.l.b16 %v940
        %v1040 = vunpack.c.l.b16 %v941
        %v1041 = vunpack.c.l.b16 %v942
        %v1042 = vunpack.c.l.b16 %v943
        %v1043 = vpack.c.b16 %v1040, %v1039
        %v1044 = vpack.c.b16 %v1042, %v1041
        %1047 = vmatpush.bf16.msra.mxu0 0
        %1048 = vmatpush.bf16.msra.mxu0 0
        %1049 = vmatpush.bf16.msra.mxu0 0
        %1050 = vmatpush.bf16.msra.mxu0 0
        %1051 = vmatpush.bf16.msra.mxu0 0
        %1052 = vmatpush.bf16.msra.mxu0 0
        %1053 = vmatpush.bf16.msra.mxu0 %v1044
        %1054 = vmatpush.bf16.msra.mxu0 %v1043
        %1055 = vmatmul.bf16.gmra.mxu0 %v834
        %v1056 = vpop.f32.mrf.mxu0
        %v1057 = vadd.f32 %v955, %v1056
        %v1058 = vpop.f32.mrf.mxu0
        %1059 = vdwg.mxu0
        %v1060 = vpack.c.bf16 %v982, %v982
        %v1061 = vpack.c.bf16 %v1007, %v1007
        %v1062 = vpack.c.bf16 %v1032, %v1032
        %v1063 = vpack.c.bf16 %v1057, %v1057
        %v1064 = vld [vmem:[%s8] sm:$0xf]
        %v1065 = vld [vmem:[%s8 + $0x4] sm:$0xf]
        %v1066 = vld [vmem:[%s8 + $0x8] sm:$0xf]
        %v1067 = vld [vmem:[%s8 + $0xc] sm:$0xf]
        %v1068 = vld [vmem:[%s8 + $0x10] sm:$0xf]
        %v1069 = vld [vmem:[%s8 + $0x14] sm:$0xf]
        %v1070 = vld [vmem:[%s8 + $0x18] sm:$0xf]
        %v1071 = vld [vmem:[%s8 + $0x1c] sm:$0xf]
        %v1072 = vld [vmem:[%s8 + $0x20] sm:$0xf]
        %v1073 = vld [vmem:[%s8 + $0x24] sm:$0xf]
        %v1074 = vld [vmem:[%s8 + $0x28] sm:$0xf]
        %v1075 = vld [vmem:[%s8 + $0x2c] sm:$0xf]
        %v1076 = vld [vmem:[%s8 + $0x30] sm:$0xf]
        %v1077 = vld [vmem:[%s8 + $0x34] sm:$0xf]
        %v1078 = vld [vmem:[%s8 + $0x38] sm:$0xf]
        %v1079 = vld [vmem:[%s8 + $0x3c] sm:$0xf]
        %v1080 = vld [vmem:[%s9] sm:$0x1]
        %v1081 = vld [vmem:[%s9 + $0x1] sm:$0x1]
        %v1082 = vld [vmem:[%s9 + $0x2] sm:$0x1]
        %v1083 = vld [vmem:[%s9 + $0x3] sm:$0x1]
        %v1088 = vperm.slane %v1080, 0
        %v1089 = vperm.slane %v1081, 0
        %v1090 = vperm.slane %v1082, 0
        %v1091 = vperm.slane %v1083, 0
        %v1100 = vunpack.c.l.b16 %v1064
        %v1101 = vunpack.c.l.b16 %v1065
        %v1102 = vunpack.c.l.b16 %v1066
        %v1103 = vunpack.c.l.b16 %v1067
        %v1104 = vpack.c.b16 %v1101, %v1100
        %v1105 = vpack.c.b16 %v1103, %v1102
        %1108 = vmatpush.bf16.msra.mxu0 0
        %1109 = vmatpush.bf16.msra.mxu0 0
        %1110 = vmatpush.bf16.msra.mxu0 0
        %1111 = vmatpush.bf16.msra.mxu0 0
        %1112 = vmatpush.bf16.msra.mxu0 0
        %1113 = vmatpush.bf16.msra.mxu0 0
        %1114 = vmatpush.bf16.msra.mxu0 %v1105
        %1115 = vmatpush.bf16.msra.mxu0 %v1104
        %1116 = vmatmul.bf16.gmra.mxu0 %v834
        %v1117 = vpop.f32.mrf.mxu0
        %v1118 = vadd.f32 %v1088, %v1117
        %v1119 = vpop.f32.mrf.mxu0
        %1120 = vdwg.mxu0
        %v1125 = vunpack.c.l.b16 %v1068
        %v1126 = vunpack.c.l.b16 %v1069
        %v1127 = vunpack.c.l.b16 %v1070
        %v1128 = vunpack.c.l.b16 %v1071
        %v1129 = vpack.c.b16 %v1126, %v1125
        %v1130 = vpack.c.b16 %v1128, %v1127
        %1133 = vmatpush.bf16.msra.mxu0 0
        %1134 = vmatpush.bf16.msra.mxu0 0
        %1135 = vmatpush.bf16.msra.mxu0 0
        %1136 = vmatpush.bf16.msra.mxu0 0
        %1137 = vmatpush.bf16.msra.mxu0 0
        %1138 = vmatpush.bf16.msra.mxu0 0
        %1139 = vmatpush.bf16.msra.mxu0 %v1130
        %1140 = vmatpush.bf16.msra.mxu0 %v1129
        %1141 = vmatmul.bf16.gmra.mxu0 %v834
        %v1142 = vpop.f32.mrf.mxu0
        %v1143 = vadd.f32 %v1089, %v1142
        %v1144 = vpop.f32.mrf.mxu0
        %1145 = vdwg.mxu0
        %v1150 = vunpack.c.l.b16 %v1072
        %v1151 = vunpack.c.l.b16 %v1073
        %v1152 = vunpack.c.l.b16 %v1074
        %v1153 = vunpack.c.l.b16 %v1075
        %v1154 = vpack.c.b16 %v1151, %v1150
        %v1155 = vpack.c.b16 %v1153, %v1152
        %1158 = vmatpush.bf16.msra.mxu0 0
        %1159 = vmatpush.bf16.msra.mxu0 0
        %1160 = vmatpush.bf16.msra.mxu0 0
        %1161 = vmatpush.bf16.msra.mxu0 0
        %1162 = vmatpush.bf16.msra.mxu0 0
        %1163 = vmatpush.bf16.msra.mxu0 0
        %1164 = vmatpush.bf16.msra.mxu0 %v1155
        %1165 = vmatpush.bf16.msra.mxu0 %v1154
        %1166 = vmatmul.bf16.gmra.mxu0 %v834
        %v1167 = vpop.f32.mrf.mxu0
        %v1168 = vadd.f32 %v1090, %v1167
        %v1169 = vpop.f32.mrf.mxu0
        %1170 = vdwg.mxu0
        %v1175 = vunpack.c.l.b16 %v1076
        %v1176 = vunpack.c.l.b16 %v1077
        %v1177 = vunpack.c.l.b16 %v1078
        %v1178 = vunpack.c.l.b16 %v1079
        %v1179 = vpack.c.b16 %v1176, %v1175
        %v1180 = vpack.c.b16 %v1178, %v1177
        %1183 = vmatpush.bf16.msra.mxu0 0
        %1184 = vmatpush.bf16.msra.mxu0 0
        %1185 = vmatpush.bf16.msra.mxu0 0
        %1186 = vmatpush.bf16.msra.mxu0 0
        %1187 = vmatpush.bf16.msra.mxu0 0
        %1188 = vmatpush.bf16.msra.mxu0 0
        %1189 = vmatpush.bf16.msra.mxu0 %v1180
        %1190 = vmatpush.bf16.msra.mxu0 %v1179
        %1191 = vmatmul.bf16.gmra.mxu0 %v834
        %v1192 = vpop.f32.mrf.mxu0
        %v1193 = vadd.f32 %v1091, %v1192
        %v1194 = vpop.f32.mrf.mxu0
        %1195 = vdwg.mxu0
        %v1196 = vpack.c.bf16 %v1118, %v1118
        %v1197 = vpack.c.bf16 %v1143, %v1143
        %v1198 = vpack.c.bf16 %v1168, %v1168
        %v1199 = vpack.c.bf16 %v1193, %v1193
        %v1200 = vld [vmem:[%s745] sm:$0x1]
        %v1201 = vsub.f32 1.0, %v1200
        %v1202 = vmul.f32 %v1201, -10000.0
        %vm1203 = vcmask 64512
        %v1205 = vsel %vm1203, %v924, 0
        %v1208 = vsel %vm1203, %v1060, 0
        %1210 = vmatpush.bf16.xpose.msra.mxu0 0
        %1211 = vmatpush.bf16.xpose.msra.mxu0 0
        %1212 = vmatpush.bf16.xpose.msra.mxu0 0
        %1213 = vmatpush.bf16.xpose.msra.mxu0 0
        %1214 = vmatpush.bf16.xpose.msra.mxu0 0
        %1215 = vmatpush.bf16.xpose.msra.mxu0 0
        %1216 = vmatpush.bf16.xpose.msra.mxu0 0
        %1217 = vmatpush.bf16.xpose.msra.mxu0 %v1208
        %1218 = vmatmul.bf16.gmra.mxu0 %v1205
        %v1219 = vpop.f32.mrf.mxu0
        %v1220 = vadd.f32 0.0, %v1219
        %v1221 = vpop.f32.mrf.mxu0
        %1222 = vdwg.mxu0
        %v1224 = vsel %vm1203, %v925, 0
        %v1227 = vsel %vm1203, %v1061, 0
        %1229 = vmatpush.bf16.xpose.msra.mxu0 0
        %1230 = vmatpush.bf16.xpose.msra.mxu0 0
        %1231 = vmatpush.bf16.xpose.msra.mxu0 0
        %1232 = vmatpush.bf16.xpose.msra.mxu0 0
        %1233 = vmatpush.bf16.xpose.msra.mxu0 0
        %1234 = vmatpush.bf16.xpose.msra.mxu0 0
        %1235 = vmatpush.bf16.xpose.msra.mxu0 0
        %1236 = vmatpush.bf16.xpose.msra.mxu0 %v1227
        %1237 = vmatmul.bf16.gmra.mxu0 %v1224
        %v1238 = vpop.f32.mrf.mxu0
        %v1239 = vadd.f32 0.0, %v1238
        %v1240 = vpop.f32.mrf.mxu0
        %1241 = vdwg.mxu0
        %v1243 = vsel %vm1203, %v926, 0
        %v1246 = vsel %vm1203, %v1062, 0
        %1248 = vmatpush.bf16.xpose.msra.mxu0 0
        %1249 = vmatpush.bf16.xpose.msra.mxu0 0
        %1250 = vmatpush.bf16.xpose.msra.mxu0 0
        %1251 = vmatpush.bf16.xpose.msra.mxu0 0
        %1252 = vmatpush.bf16.xpose.msra.mxu0 0
        %1253 = vmatpush.bf16.xpose.msra.mxu0 0
        %1254 = vmatpush.bf16.xpose.msra.mxu0 0
        %1255 = vmatpush.bf16.xpose.msra.mxu0 %v1246
        %1256 = vmatmul.bf16.gmra.mxu0 %v1243
        %v1257 = vpop.f32.mrf.mxu0
        %v1258 = vadd.f32 0.0, %v1257
        %v1259 = vpop.f32.mrf.mxu0
        %1260 = vdwg.mxu0
        %v1262 = vsel %vm1203, %v927, 0
        %v1265 = vsel %vm1203, %v1063, 0
        %1267 = vmatpush.bf16.xpose.msra.mxu0 0
        %1268 = vmatpush.bf16.xpose.msra.mxu0 0
        %1269 = vmatpush.bf16.xpose.msra.mxu0 0
        %1270 = vmatpush.bf16.xpose.msra.mxu0 0
        %1271 = vmatpush.bf16.xpose.msra.mxu0 0
        %1272 = vmatpush.bf16.xpose.msra.mxu0 0
        %1273 = vmatpush.bf16.xpose.msra.mxu0 0
        %1274 = vmatpush.bf16.xpose.msra.mxu0 %v1265
        %1275 = vmatmul.bf16.gmra.mxu0 %v1262
        %v1276 = vpop.f32.mrf.mxu0
        %v1277 = vadd.f32 0.0, %v1276
        %v1278 = vpop.f32.mrf.mxu0
        %1279 = vdwg.mxu0
        %v1280 = vmul.f32 %v1220, 0.35355338
        %v1281 = vmul.f32 %v1239, 0.35355338
        %v1282 = vmul.f32 %v1258, 0.35355338
        %v1283 = vmul.f32 %v1277, 0.35355338
        %v1285 = vperm.slane %v1202, 0
        %v1287 = vadd.f32 %v1280, %v1285
        %v1288 = vadd.f32 %v1281, %v1285
        %v1289 = vadd.f32 %v1282, %v1285
        %v1290 = vadd.f32 %v1283, %v1285
        %v1291 = vsel %vm1203, %v1287, -inf
        %1292 = vmax.xlane.f32.xlu0 %v1291
        %v1293 = vpop.xlane.xlu0 %1292
        %v1294 = vsel %vm1203, %v1288, -inf
        %1295 = vmax.xlane.f32.xlu0 %v1294
        %v1296 = vpop.xlane.xlu0 %1295
        %v1297 = vsel %vm1203, %v1289, -inf
        %1298 = vmax.xlane.f32.xlu0 %v1297
        %v1299 = vpop.xlane.xlu0 %1298
        %v1300 = vsel %vm1203, %v1290, -inf
        %1301 = vmax.xlane.f32.xlu0 %v1300
        %v1302 = vpop.xlane.xlu0 %1301
        %v1303 = vsub.f32 %v1287, %v1293
        %v1304 = vsub.f32 %v1288, %v1296
        %v1305 = vsub.f32 %v1289, %v1299
        %v1306 = vsub.f32 %v1290, %v1302
        %v1307 = vmul.f32 %v1303, 1.442695
        %v1308 = vpow.pop %v1307
        %v1309 = vmul.f32 %v1304, 1.442695
        %v1310 = vpow.pop %v1309
        %v1311 = vmul.f32 %v1305, 1.442695
        %v1312 = vpow.pop %v1311
        %v1313 = vmul.f32 %v1306, 1.442695
        %v1314 = vpow.pop %v1313
        %v1315 = vsel %vm1203, %v1308, 0.0
        %1316 = vadd.xlane.f32.xlu0 %v1315
        %v1317 = vpop.xlane.xlu0 %1316
        %v1318 = vsel %vm1203, %v1310, 0.0
        %1319 = vadd.xlane.f32.xlu0 %v1318
        %v1320 = vpop.xlane.xlu0 %1319
        %v1321 = vsel %vm1203, %v1312, 0.0
        %1322 = vadd.xlane.f32.xlu0 %v1321
        %v1323 = vpop.xlane.xlu0 %1322
        %v1324 = vsel %vm1203, %v1314, 0.0
        %1325 = vadd.xlane.f32.xlu0 %v1324
        %v1326 = vpop.xlane.xlu0 %1325
        %v1327 = vrcp.pop %v1317
        %v1328 = vrcp.pop %v1320
        %v1329 = vrcp.pop %v1323
        %v1330 = vrcp.pop %v1326
        %v1331 = vmul.f32 %v1308, %v1327
        %v1332 = vmul.f32 %v1310, %v1328
        %v1333 = vmul.f32 %v1312, %v1329
        %v1334 = vmul.f32 %v1314, %v1330
        %v1335 = vpack.c.bf16 %v1331, %v1331
        %v1336 = vpack.c.bf16 %v1332, %v1332
        %v1337 = vpack.c.bf16 %v1333, %v1333
        %v1338 = vpack.c.bf16 %v1334, %v1334
        %v1340 = vsel %vm1203, %v1335, 0
        %vm1342 = vcmask 1043456
        %v1344 = vsel %vm1342, %v1196, 0
        %1346 = vmatpush.bf16.msra.mxu0 0
        %1347 = vmatpush.bf16.msra.mxu0 0
        %1348 = vmatpush.bf16.msra.mxu0 0
        %1349 = vmatpush.bf16.msra.mxu0 0
        %1350 = vmatpush.bf16.msra.mxu0 0
        %1351 = vmatpush.bf16.msra.mxu0 0
        %1352 = vmatpush.bf16.msra.mxu0 0
        %1353 = vmatpush.bf16.msra.mxu0 %v1344
        %1354 = vmatmul.bf16.gmra.mxu0 %v1340
        %v1355 = vpop.f32.mrf.mxu0
        %v1356 = vadd.f32 0.0, %v1355
        %v1357 = vpop.f32.mrf.mxu0
        %1358 = vdwg.mxu0
        %v1360 = vsel %vm1203, %v1336, 0
        %v1363 = vsel %vm1342, %v1197, 0
        %1365 = vmatpush.bf16.msra.mxu0 0
        %1366 = vmatpush.bf16.msra.mxu0 0
        %1367 = vmatpush.bf16.msra.mxu0 0
        %1368 = vmatpush.bf16.msra.mxu0 0
        %1369 = vmatpush.bf16.msra.mxu0 0
        %1370 = vmatpush.bf16.msra.mxu0 0
        %1371 = vmatpush.bf16.msra.mxu0 0
        %1372 = vmatpush.bf16.msra.mxu0 %v1363
        %1373 = vmatmul.bf16.gmra.mxu0 %v1360
        %v1374 = vpop.f32.mrf.mxu0
        %v1375 = vadd.f32 0.0, %v1374
        %v1376 = vpop.f32.mrf.mxu0
        %1377 = vdwg.mxu0
        %v1379 = vsel %vm1203, %v1337, 0
        %v1382 = vsel %vm1342, %v1198, 0
        %1384 = vmatpush.bf16.msra.mxu0 0
        %1385 = vmatpush.bf16.msra.mxu0 0
        %1386 = vmatpush.bf16.msra.mxu0 0
        %1387 = vmatpush.bf16.msra.mxu0 0
        %1388 = vmatpush.bf16.msra.mxu0 0
        %1389 = vmatpush.bf16.msra.mxu0 0
        %1390 = vmatpush.bf16.msra.mxu0 0
        %1391 = vmatpush.bf16.msra.mxu0 %v1382
        %1392 = vmatmul.bf16.gmra.mxu0 %v1379
        %v1393 = vpop.f32.mrf.mxu0
        %v1394 = vadd.f32 0.0, %v1393
        %v1395 = vpop.f32.mrf.mxu0
        %1396 = vdwg.mxu0
        %v1398 = vsel %vm1203, %v1338, 0
        %v1401 = vsel %vm1342, %v1199, 0
        %1403 = vmatpush.bf16.msra.mxu0 0
        %1404 = vmatpush.bf16.msra.mxu0 0
        %1405 = vmatpush.bf16.msra.mxu0 0
        %1406 = vmatpush.bf16.msra.mxu0 0
        %1407 = vmatpush.bf16.msra.mxu0 0
        %1408 = vmatpush.bf16.msra.mxu0 0
        %1409 = vmatpush.bf16.msra.mxu0 0
        %1410 = vmatpush.bf16.msra.mxu0 %v1401
        %1411 = vmatmul.bf16.gmra.mxu0 %v1398
        %v1412 = vpop.f32.mrf.mxu0
        %v1413 = vadd.f32 0.0, %v1412
        %v1414 = vpop.f32.mrf.mxu0
        %1415 = vdwg.mxu0
        %v1416 = vpack.c.bf16 %v1356, %v1356
        %v1417 = vpack.c.bf16 %v1375, %v1375
        %v1418 = vpack.c.bf16 %v1394, %v1394
        %v1419 = vpack.c.bf16 %v1413, %v1413
        %v1420 = vld [vmem:[%s10] sm:$0xf]
        %v1421 = vld [vmem:[%s10 + $0x4] sm:$0xf]
        %v1422 = vld [vmem:[%s10 + $0x8] sm:$0xf]
        %v1423 = vld [vmem:[%s10 + $0xc] sm:$0xf]
        %v1425 = vsel %vm1203, %v1416, 0
        %v1428 = vsel %vm1342, %v1420, 0
        %1430 = vmatpush.bf16.msra.mxu0 0
        %1431 = vmatpush.bf16.msra.mxu0 0
        %1432 = vmatpush.bf16.msra.mxu0 0
        %1433 = vmatpush.bf16.msra.mxu0 0
        %1434 = vmatpush.bf16.msra.mxu0 0
        %1435 = vmatpush.bf16.msra.mxu0 0
        %1436 = vmatpush.bf16.msra.mxu0 0
        %1437 = vmatpush.bf16.msra.mxu0 %v1428
        %1438 = vmatmul.bf16.gmra.mxu0 %v1425
        %v1439 = vpop.f32.mrf.mxu0
        %v1440 = vadd.f32 0.0, %v1439
        %v1441 = vpop.f32.mrf.mxu0
        %1442 = vdwg.mxu0
        %v1444 = vsel %vm1203, %v1417, 0
        %v1447 = vsel %vm1342, %v1421, 0
        %1449 = vmatpush.bf16.msra.mxu0 0
        %1450 = vmatpush.bf16.msra.mxu0 0
        %1451 = vmatpush.bf16.msra.mxu0 0
        %1452 = vmatpush.bf16.msra.mxu0 0
        %1453 = vmatpush.bf16.msra.mxu0 0
        %1454 = vmatpush.bf16.msra.mxu0 0
        %1455 = vmatpush.bf16.msra.mxu0 0
        %1456 = vmatpush.bf16.msra.mxu0 %v1447
        %1457 = vmatmul.bf16.gmra.mxu0 %v1444
        %v1458 = vpop.f32.mrf.mxu0
        %v1459 = vadd.f32 0.0, %v1458
        %v1460 = vpop.f32.mrf.mxu0
        %1461 = vdwg.mxu0
        %v1463 = vsel %vm1203, %v1418, 0
        %v1466 = vsel %vm1342, %v1422, 0
        %1468 = vmatpush.bf16.msra.mxu0 0
        %1469 = vmatpush.bf16.msra.mxu0 0
        %1470 = vmatpush.bf16.msra.mxu0 0
        %1471 = vmatpush.bf16.msra.mxu0 0
        %1472 = vmatpush.bf16.msra.mxu0 0
        %1473 = vmatpush.bf16.msra.mxu0 0
        %1474 = vmatpush.bf16.msra.mxu0 0
        %1475 = vmatpush.bf16.msra.mxu0 %v1466
        %1476 = vmatmul.bf16.gmra.mxu0 %v1463
        %v1477 = vpop.f32.mrf.mxu0
        %v1478 = vadd.f32 0.0, %v1477
        %v1479 = vpop.f32.mrf.mxu0
        %1480 = vdwg.mxu0
        %v1482 = vsel %vm1203, %v1419, 0
        %v1485 = vsel %vm1342, %v1423, 0
        %1487 = vmatpush.bf16.msra.mxu0 0
        %1488 = vmatpush.bf16.msra.mxu0 0
        %1489 = vmatpush.bf16.msra.mxu0 0
        %1490 = vmatpush.bf16.msra.mxu0 0
        %1491 = vmatpush.bf16.msra.mxu0 0
        %1492 = vmatpush.bf16.msra.mxu0 0
        %1493 = vmatpush.bf16.msra.mxu0 0
        %1494 = vmatpush.bf16.msra.mxu0 %v1485
        %1495 = vmatmul.bf16.gmra.mxu0 %v1482
        %v1496 = vpop.f32.mrf.mxu0
        %v1497 = vadd.f32 0.0, %v1496
        %v1498 = vpop.f32.mrf.mxu0
        %1499 = vdwg.mxu0
        %v1500 = vadd.f32 %v1440, %v1459
        %v1501 = vadd.f32 %v1500, %v1478
        %v1502 = vadd.f32 %v1501, %v1497
        %v1503 = vld [vmem:[%s11] sm:$0x1]
        %v1505 = vperm.slane %v1503, 0
        %v1507 = vadd.f32 %v1502, %v1505
        %v1508 = vadd.f32 %v1507, %v787
        %v1509 = vld [vmem:[%s12] sm:$0x1]
        %v1510 = vld [vmem:[%s13] sm:$0x1]
        %v1511 = vsel %vm750, %v1508, 0.0
        %1512 = vadd.xlane.f32.xlu0 %v1511
        %v1513 = vpop.xlane.xlu0 %1512
        %v1514 = vmul.f32 %v1513, %v760
        %v1515 = vsub.f32 %v1508, %v1514
        %v1516 = vmul.f32 %v1515, %v1515
        %v1517 = vsel %vm750, %v1516, 0.0
        %1518 = vadd.xlane.f32.xlu0 %v1517
        %v1519 = vpop.xlane.xlu0 %1518
        %v1520 = vmul.f32 %v1519, %v760
        %v1521 = vadd.f32 %v1520, 1e-12
        %v1522 = vrsqrt.pop %v1521
        %v1523 = vmul.f32 %v1522, %v1521
        %v1524 = vmul.f32 %v1523, %v1522
        %v1525 = vmul.f32 0.5, %v1524
        %v1526 = vsub.f32 1.5, %v1525
        %v1527 = vmul.f32 %v1522, %v1526
        %vm1528 = vweird.f32 %v1521
        %vm1529 = vweird.f32 %v1522
        %vm1530 = vmor %vm1528, %vm1529
        %v1531 = vsel %vm1530, %v1522, %v1527
        %v1532 = vmul.f32 %v1515, %v1531
        %v1534 = vperm.slane %v1509, 0
        %v1536 = vmul.f32 %v1532, %v1534
        %v1538 = vperm.slane %v1510, 0
        %v1540 = vadd.f32 %v1536, %v1538
        %v1541 = vpack.c.bf16 %v1540, %v1540
        %v1542 = vld [vmem:[%s14] sm:$0xf]
        %v1543 = vld [vmem:[%s14 + $0x4] sm:$0xf]
        %v1544 = vld [vmem:[%s14 + $0x8] sm:$0xf]
        %v1545 = vld [vmem:[%s14 + $0xc] sm:$0xf]
        %v1546 = vld [vmem:[%s15] sm:$0x1]
        %v1548 = vperm.slane %v1546, 0
        %v1554 = vunpack.c.l.b16 %v1542
        %v1555 = vunpack.c.l.b16 %v1543
        %v1556 = vunpack.c.l.b16 %v1544
        %v1557 = vunpack.c.l.b16 %v1545
        %v1558 = vpack.c.b16 %v1555, %v1554
        %v1559 = vpack.c.b16 %v1557, %v1556
        %v1563 = vsel %vm750, %v1541, 0
        %1565 = vmatpush.bf16.msra.mxu0 0
        %1566 = vmatpush.bf16.msra.mxu0 0
        %1567 = vmatpush.bf16.msra.mxu0 0
        %1568 = vmatpush.bf16.msra.mxu0 0
        %1569 = vmatpush.bf16.msra.mxu0 0
        %1570 = vmatpush.bf16.msra.mxu0 0
        %1571 = vmatpush.bf16.msra.mxu0 %v1559
        %1572 = vmatpush.bf16.msra.mxu0 %v1558
        %1573 = vmatmul.bf16.gmra.mxu0 %v1563
        %v1574 = vpop.f32.mrf.mxu0
        %v1575 = vadd.f32 %v1548, %v1574
        %v1576 = vpop.f32.mrf.mxu0
        %1577 = vdwg.mxu0
        %v1578 = vmul.f32 %v1575, 0.5
        %v1579 = vmul.f32 %v1575, 0.70710677
        %v1580 = vmul.f32 %v1579, %v1579
        %v1581 = vmin.f32 16.0, %v1580
        %v1582 = vmul.f32 %v1581, 2.1237322e-06
        %v1583 = vadd.f32 %v1582, 0.00028619796
        %v1584 = vmul.f32 %v1581, %v1583
        %v1585 = vadd.f32 %v1584, 0.0036580483
        %v1586 = vmul.f32 %v1581, %v1585
        %v1587 = vadd.f32 %v1586, 0.05243302
        %v1588 = vmul.f32 %v1581, %v1587
        %v1589 = vadd.f32 %v1588, 0.18741608
        %v1590 = vmul.f32 %v1581, %v1589
        %v1591 = vadd.f32 %v1590, 1.1283791
        %v1592 = vmul.f32 %v1579, %v1591
        %v1593 = vmul.f32 %v1581, 3.8918573e-05
        %v1594 = vadd.f32 %v1593, 0.001143296
        %v1595 = vmul.f32 %v1581, %v1594
        %v1596 = vadd.f32 %v1595, 0.014752088
        %v1597 = vmul.f32 %v1581, %v1596
        %v1598 = vadd.f32 %v1597, 0.112945676
        %v1599 = vmul.f32 %v1581, %v1598
        %v1600 = vadd.f32 %v1599, 0.4994258
        %v1601 = vmul.f32 %v1581, %v1600
        %v1602 = vadd.f32 %v1601, 1.0
        %v1603 = vrcp.pop %v1602
        %v1604 = vmul.f32 %v1602, %v1603
        %v1605 = vsub.f32 1.0, %v1604
        %v1606 = vmul.f32 %v1603, %v1605
        %v1607 = vadd.f32 %v1603, %v1606
        %vm1608 = vweird.f32 %v1602
        %vm1609 = vweird.f32 %v1603
        %vm1610 = vmor %vm1608, %vm1609
        %v1611 = vsel %vm1610, %v1603, %v1607
        %v1612 = vand.u32 2147483647, %v1602
        %vm1613 = vcmp.eq.f32.partialorder %v1612, 8.507059e+37
        %v1614 = vand.u32 %v1602, 2147483648
        %v1615 = vor.u32 1.1754944e-38, %v1614
        %v1616 = vsel %vm1613, %v1615, %v1611
        %v1617 = vmul.f32 %v1592, %v1616
        %v1618 = vmin.f32 %v1617, 1.0
        %v1619 = vmax.f32 %v1618, -1.0
        %v1620 = vadd.f32 %v1619, 1.0
        %v1621 = vmul.f32 %v1578, %v1620
        %v1622 = vpack.c.bf16 %v1621, %v1621
        %v1623 = vld [vmem:[%s16] sm:$0xf]
        %v1624 = vld [vmem:[%s16 + $0x4] sm:$0xf]
        %v1625 = vld [vmem:[%s16 + $0x8] sm:$0xf]
        %v1626 = vld [vmem:[%s16 + $0xc] sm:$0xf]
        %v1627 = vld [vmem:[%s16 + $0x10] sm:$0xf]
        %v1628 = vld [vmem:[%s16 + $0x14] sm:$0xf]
        %v1629 = vld [vmem:[%s16 + $0x18] sm:$0xf]
        %v1630 = vld [vmem:[%s16 + $0x1c] sm:$0xf]
        %v1631 = vld [vmem:[%s17] sm:$0x1]
        %v1633 = vperm.slane %v1631, 0
        %v1643 = vunpack.c.l.b16 %v1623
        %v1644 = vunpack.c.l.b16 %v1624
        %v1645 = vunpack.c.l.b16 %v1625
        %v1646 = vunpack.c.l.b16 %v1626
        %v1647 = vunpack.c.l.b16 %v1627
        %v1648 = vunpack.c.l.b16 %v1628
        %v1649 = vunpack.c.l.b16 %v1629
        %v1650 = vunpack.c.l.b16 %v1630
        %v1651 = vpack.c.b16 %v1644, %v1643
        %v1652 = vpack.c.b16 %v1646, %v1645
        %v1653 = vpack.c.b16 %v1648, %v1647
        %v1654 = vpack.c.b16 %v1650, %v1649
        %vm1659 = vcmask 523264
        %v1661 = vsel %vm1659, %v1622, 0
        %1663 = vmatpush.bf16.msra.mxu0 0
        %1664 = vmatpush.bf16.msra.mxu0 0
        %1665 = vmatpush.bf16.msra.mxu0 0
        %1666 = vmatpush.bf16.msra.mxu0 0
        %1667 = vmatpush.bf16.msra.mxu0 %v1654
        %1668 = vmatpush.bf16.msra.mxu0 %v1653
        %1669 = vmatpush.bf16.msra.mxu0 %v1652
        %1670 = vmatpush.bf16.msra.mxu0 %v1651
        %1671 = vmatmul.bf16.gmra.mxu0 %v1661
        %v1672 = vpop.f32.mrf.mxu0
        %v1673 = vadd.f32 %v1633, %v1672
        %v1674 = vpop.f32.mrf.mxu0
        %1675 = vdwg.mxu0
        %v1676 = vadd.f32 %v1673, %v1540
        %v1677 = vld [vmem:[%s18] sm:$0x1]
        %v1678 = vld [vmem:[%s19] sm:$0x1]
        %v1679 = vsel %vm750, %v1676, 0.0
        %1680 = vadd.xlane.f32.xlu0 %v1679
        %v1681 = vpop.xlane.xlu0 %1680
        %v1682 = vmul.f32 %v1681, %v760
        %v1683 = vsub.f32 %v1676, %v1682
        %v1684 = vmul.f32 %v1683, %v1683
        %v1685 = vsel %vm750, %v1684, 0.0
        %1686 = vadd.xlane.f32.xlu0 %v1685
        %v1687 = vpop.xlane.xlu0 %1686
        %v1688 = vmul.f32 %v1687, %v760
        %v1689 = vadd.f32 %v1688, 1e-12
        %v1690 = vrsqrt.pop %v1689
        %v1691 = vmul.f32 %v1690, %v1689
        %v1692 = vmul.f32 %v1691, %v1690
        %v1693 = vmul.f32 0.5, %v1692
        %v1694 = vsub.f32 1.5, %v1693
        %v1695 = vmul.f32 %v1690, %v1694
        %vm1696 = vweird.f32 %v1689
        %vm1697 = vweird.f32 %v1690
        %vm1698 = vmor %vm1696, %vm1697
        %v1699 = vsel %vm1698, %v1690, %v1695
        %v1700 = vmul.f32 %v1683, %v1699
        %v1702 = vperm.slane %v1677, 0
        %v1704 = vmul.f32 %v1700, %v1702
        %v1706 = vperm.slane %v1678, 0
        %v1708 = vadd.f32 %v1704, %v1706
        %v1709 = vpack.c.bf16 %v1708, %v1708
        %s1710 = scalar_lea.vmem %s4, 64
        %v1711 = vld [vmem:[%s1710] sm:$0xf]
        %v1712 = vld [vmem:[%s1710 + $0x4] sm:$0xf]
        %v1713 = vld [vmem:[%s1710 + $0x8] sm:$0xf]
        %v1714 = vld [vmem:[%s1710 + $0xc] sm:$0xf]
        %v1715 = vld [vmem:[%s1710 + $0x10] sm:$0xf]
        %v1716 = vld [vmem:[%s1710 + $0x14] sm:$0xf]
        %v1717 = vld [vmem:[%s1710 + $0x18] sm:$0xf]
        %v1718 = vld [vmem:[%s1710 + $0x1c] sm:$0xf]
        %v1719 = vld [vmem:[%s1710 + $0x20] sm:$0xf]
        %v1720 = vld [vmem:[%s1710 + $0x24] sm:$0xf]
        %v1721 = vld [vmem:[%s1710 + $0x28] sm:$0xf]
        %v1722 = vld [vmem:[%s1710 + $0x2c] sm:$0xf]
        %v1723 = vld [vmem:[%s1710 + $0x30] sm:$0xf]
        %v1724 = vld [vmem:[%s1710 + $0x34] sm:$0xf]
        %v1725 = vld [vmem:[%s1710 + $0x38] sm:$0xf]
        %v1726 = vld [vmem:[%s1710 + $0x3c] sm:$0xf]
        %s1727 = scalar_lea.vmem %s5, 4
        %v1728 = vld [vmem:[%s1727] sm:$0x1]
        %v1729 = vld [vmem:[%s1727 + $0x1] sm:$0x1]
        %v1730 = vld [vmem:[%s1727 + $0x2] sm:$0x1]
        %v1731 = vld [vmem:[%s1727 + $0x3] sm:$0x1]
        %v1736 = vperm.slane %v1728, 0
        %v1737 = vperm.slane %v1729, 0
        %v1738 = vperm.slane %v1730, 0
        %v1739 = vperm.slane %v1731, 0
        %v1748 = vunpack.c.l.b16 %v1711
        %v1749 = vunpack.c.l.b16 %v1712
        %v1750 = vunpack.c.l.b16 %v1713
        %v1751 = vunpack.c.l.b16 %v1714
        %v1752 = vpack.c.b16 %v1749, %v1748
        %v1753 = vpack.c.b16 %v1751, %v1750
        %v1757 = vsel %vm750, %v1709, 0
        %1759 = vmatpush.bf16.msra.mxu0 0
        %1760 = vmatpush.bf16.msra.mxu0 0
        %1761 = vmatpush.bf16.msra.mxu0 0
        %1762 = vmatpush.bf16.msra.mxu0 0
        %1763 = vmatpush.bf16.msra.mxu0 0
        %1764 = vmatpush.bf16.msra.mxu0 0
        %1765 = vmatpush.bf16.msra.mxu0 %v1753
        %1766 = vmatpush.bf16.msra.mxu0 %v1752
        %1767 = vmatmul.bf16.gmra.mxu0 %v1757
        %v1768 = vpop.f32.mrf.mxu0
        %v1769 = vadd.f32 %v1736, %v1768
        %v1770 = vpop.f32.mrf.mxu0
        %1771 = vdwg.mxu0
        %v1776 = vunpack.c.l.b16 %v1715
        %v1777 = vunpack.c.l.b16 %v1716
        %v1778 = vunpack.c.l.b16 %v1717
        %v1779 = vunpack.c.l.b16 %v1718
        %v1780 = vpack.c.b16 %v1777, %v1776
        %v1781 = vpack.c.b16 %v1779, %v1778
        %1784 = vmatpush.bf16.msra.mxu0 0
        %1785 = vmatpush.bf16.msra.mxu0 0
        %1786 = vmatpush.bf16.msra.mxu0 0
        %1787 = vmatpush.bf16.msra.mxu0 0
        %1788 = vmatpush.bf16.msra.mxu0 0
        %1789 = vmatpush.bf16.msra.mxu0 0
        %1790 = vmatpush.bf16.msra.mxu0 %v1781
        %1791 = vmatpush.bf16.msra.mxu0 %v1780
        %1792 = vmatmul.bf16.gmra.mxu0 %v1757
        %v1793 = vpop.f32.mrf.mxu0
        %v1794 = vadd.f32 %v1737, %v1793
        %v1795 = vpop.f32.mrf.mxu0
        %1796 = vdwg.mxu0
        %v1801 = vunpack.c.l.b16 %v1719
        %v1802 = vunpack.c.l.b16 %v1720
        %v1803 = vunpack.c.l.b16 %v1721
        %v1804 = vunpack.c.l.b16 %v1722
        %v1805 = vpack.c.b16 %v1802, %v1801
        %v1806 = vpack.c.b16 %v1804, %v1803
        %1809 = vmatpush.bf16.msra.mxu0 0
        %1810 = vmatpush.bf16.msra.mxu0 0
        %1811 = vmatpush.bf16.msra.mxu0 0
        %1812 = vmatpush.bf16.msra.mxu0 0
        %1813 = vmatpush.bf16.msra.mxu0 0
        %1814 = vmatpush.bf16.msra.mxu0 0
        %1815 = vmatpush.bf16.msra.mxu0 %v1806
        %1816 = vmatpush.bf16.msra.mxu0 %v1805
        %1817 = vmatmul.bf16.gmra.mxu0 %v1757
        %v1818 = vpop.f32.mrf.mxu0
        %v1819 = vadd.f32 %v1738, %v1818
        %v1820 = vpop.f32.mrf.mxu0
        %1821 = vdwg.mxu0
        %v1826 = vunpack.c.l.b16 %v1723
        %v1827 = vunpack.c.l.b16 %v1724
        %v1828 = vunpack.c.l.b16 %v1725
        %v1829 = vunpack.c.l.b16 %v1726
        %v1830 = vpack.c.b16 %v1827, %v1826
        %v1831 = vpack.c.b16 %v1829, %v1828
        %1834 = vmatpush.bf16.msra.mxu0 0
        %1835 = vmatpush.bf16.msra.mxu0 0
        %1836 = vmatpush.bf16.msra.mxu0 0
        %1837 = vmatpush.bf16.msra.mxu0 0
        %1838 = vmatpush.bf16.msra.mxu0 0
        %1839 = vmatpush.bf16.msra.mxu0 0
        %1840 = vmatpush.bf16.msra.mxu0 %v1831
        %1841 = vmatpush.bf16.msra.mxu0 %v1830
        %1842 = vmatmul.bf16.gmra.mxu0 %v1757
        %v1843 = vpop.f32.mrf.mxu0
        %v1844 = vadd.f32 %v1739, %v1843
        %v1845 = vpop.f32.mrf.mxu0
        %1846 = vdwg.mxu0
        %v1847 = vpack.c.bf16 %v1769, %v1769
        %v1848 = vpack.c.bf16 %v1794, %v1794
        %v1849 = vpack.c.bf16 %v1819, %v1819
        %v1850 = vpack.c.bf16 %v1844, %v1844
        %s1851 = scalar_lea.vmem %s6, 64
        %v1852 = vld [vmem:[%s1851] sm:$0xf]
        %v1853 = vld [vmem:[%s1851 + $0x4] sm:$0xf]
        %v1854 = vld [vmem:[%s1851 + $0x8] sm:$0xf]
        %v1855 = vld [vmem:[%s1851 + $0xc] sm:$0xf]
        %v1856 = vld [vmem:[%s1851 + $0x10] sm:$0xf]
        %v1857 = vld [vmem:[%s1851 + $0x14] sm:$0xf]
        %v1858 = vld [vmem:[%s1851 + $0x18] sm:$0xf]
        %v1859 = vld [vmem:[%s1851 + $0x1c] sm:$0xf]
        %v1860 = vld [vmem:[%s1851 + $0x20] sm:$0xf]
        %v1861 = vld [vmem:[%s1851 + $0x24] sm:$0xf]
        %v1862 = vld [vmem:[%s1851 + $0x28] sm:$0xf]
        %v1863 = vld [vmem:[%s1851 + $0x2c] sm:$0xf]
        %v1864 = vld [vmem:[%s1851 + $0x30] sm:$0xf]
        %v1865 = vld [vmem:[%s1851 + $0x34] sm:$0xf]
        %v1866 = vld [vmem:[%s1851 + $0x38] sm:$0xf]
        %v1867 = vld [vmem:[%s1851 + $0x3c] sm:$0xf]
        %s1868 = scalar_lea.vmem %s7, 4
        %v1869 = vld [vmem:[%s1868] sm:$0x1]
        %v1870 = vld [vmem:[%s1868 + $0x1] sm:$0x1]
        %v1871 = vld [vmem:[%s1868 + $0x2] sm:$0x1]
        %v1872 = vld [vmem:[%s1868 + $0x3] sm:$0x1]
        %v1877 = vperm.slane %v1869, 0
        %v1878 = vperm.slane %v1870, 0
        %v1879 = vperm.slane %v1871, 0
        %v1880 = vperm.slane %v1872, 0
        %v1889 = vunpack.c.l.b16 %v1852
        %v1890 = vunpack.c.l.b16 %v1853
        %v1891 = vunpack.c.l.b16 %v1854
        %v1892 = vunpack.c.l.b16 %v1855
        %v1893 = vpack.c.b16 %v1890, %v1889
        %v1894 = vpack.c.b16 %v1892, %v1891
        %1897 = vmatpush.bf16.msra.mxu0 0
        %1898 = vmatpush.bf16.msra.mxu0 0
        %1899 = vmatpush.bf16.msra.mxu0 0
        %1900 = vmatpush.bf16.msra.mxu0 0
        %1901 = vmatpush.bf16.msra.mxu0 0
        %1902 = vmatpush.bf16.msra.mxu0 0
        %1903 = vmatpush.bf16.msra.mxu0 %v1894
        %1904 = vmatpush.bf16.msra.mxu0 %v1893
        %1905 = vmatmul.bf16.gmra.mxu0 %v1757
        %v1906 = vpop.f32.mrf.mxu0
        %v1907 = vadd.f32 %v1877, %v1906
        %v1908 = vpop.f32.mrf.mxu0
        %1909 = vdwg.mxu0
        %v1914 = vunpack.c.l.b16 %v1856
        %v1915 = vunpack.c.l.b16 %v1857
        %v1916 = vunpack.c.l.b16 %v1858
        %v1917 = vunpack.c.l.b16 %v1859
        %v1918 = vpack.c.b16 %v1915, %v1914
        %v1919 = vpack.c.b16 %v1917, %v1916
        %1922 = vmatpush.bf16.msra.mxu0 0
        %1923 = vmatpush.bf16.msra.mxu0 0
        %1924 = vmatpush.bf16.msra.mxu0 0
        %1925 = vmatpush.bf16.msra.mxu0 0
        %1926 = vmatpush.bf16.msra.mxu0 0
        %1927 = vmatpush.bf16.msra.mxu0 0
        %1928 = vmatpush.bf16.msra.mxu0 %v1919
        %1929 = vmatpush.bf16.msra.mxu0 %v1918
        %1930 = vmatmul.bf16.gmra.mxu0 %v1757
        %v1931 = vpop.f32.mrf.mxu0
        %v1932 = vadd.f32 %v1878, %v1931
        %v1933 = vpop.f32.mrf.mxu0
        %1934 = vdwg.mxu0
        %v1939 = vunpack.c.l.b16 %v1860
        %v1940 = vunpack.c.l.b16 %v1861
        %v1941 = vunpack.c.l.b16 %v1862
        %v1942 = vunpack.c.l.b16 %v1863
        %v1943 = vpack.c.b16 %v1940, %v1939
        %v1944 = vpack.c.b16 %v1942, %v1941
        %1947 = vmatpush.bf16.msra.mxu0 0
        %1948 = vmatpush.bf16.msra.mxu0 0
        %1949 = vmatpush.bf16.msra.mxu0 0
        %1950 = vmatpush.bf16.msra.mxu0 0
        %1951 = vmatpush.bf16.msra.mxu0 0
        %1952 = vmatpush.bf16.msra.mxu0 0
        %1953 = vmatpush.bf16.msra.mxu0 %v1944
        %1954 = vmatpush.bf16.msra.mxu0 %v1943
        %1955 = vmatmul.bf16.gmra.mxu0 %v1757
        %v1956 = vpop.f32.mrf.mxu0
        %v1957 = vadd.f32 %v1879, %v1956
        %v1958 = vpop.f32.mrf.mxu0
        %1959 = vdwg.mxu0
        %v1964 = vunpack.c.l.b16 %v1864
        %v1965 = vunpack.c.l.b16 %v1865
        %v1966 = vunpack.c.l.b16 %v1866
        %v1967 = vunpack.c.l.b16 %v1867
        %v1968 = vpack.c.b16 %v1965, %v1964
        %v1969 = vpack.c.b16 %v1967, %v1966
        %1972 = vmatpush.bf16.msra.mxu0 0
        %1973 = vmatpush.bf16.msra.mxu0 0
        %1974 = vmatpush.bf16.msra.mxu0 0
        %1975 = vmatpush.bf16.msra.mxu0 0
        %1976 = vmatpush.bf16.msra.mxu0 0
        %1977 = vmatpush.bf16.msra.mxu0 0
        %1978 = vmatpush.bf16.msra.mxu0 %v1969
        %1979 = vmatpush.bf16.msra.mxu0 %v1968
        %1980 = vmatmul.bf16.gmra.mxu0 %v1757
        %v1981 = vpop.f32.mrf.mxu0
        %v1982 = vadd.f32 %v1880, %v1981
        %v1983 = vpop.f32.mrf.mxu0
        %1984 = vdwg.mxu0
        %v1985 = vpack.c.bf16 %v1907, %v1907
        %v1986 = vpack.c.bf16 %v1932, %v1932
        %v1987 = vpack.c.bf16 %v1957, %v1957
        %v1988 = vpack.c.bf16 %v1982, %v1982
        %s1989 = scalar_lea.vmem %s8, 64
        %v1990 = vld [vmem:[%s1989] sm:$0xf]
        %v1991 = vld [vmem:[%s1989 + $0x4] sm:$0xf]
        %v1992 = vld [vmem:[%s1989 + $0x8] sm:$0xf]
        %v1993 = vld [vmem:[%s1989 + $0xc] sm:$0xf]
        %v1994 = vld [vmem:[%s1989 + $0x10] sm:$0xf]
        %v1995 = vld [vmem:[%s1989 + $0x14] sm:$0xf]
        %v1996 = vld [vmem:[%s1989 + $0x18] sm:$0xf]
        %v1997 = vld [vmem:[%s1989 + $0x1c] sm:$0xf]
        %v1998 = vld [vmem:[%s1989 + $0x20] sm:$0xf]
        %v1999 = vld [vmem:[%s1989 + $0x24] sm:$0xf]
        %v2000 = vld [vmem:[%s1989 + $0x28] sm:$0xf]
        %v2001 = vld [vmem:[%s1989 + $0x2c] sm:$0xf]
        %v2002 = vld [vmem:[%s1989 + $0x30] sm:$0xf]
        %v2003 = vld [vmem:[%s1989 + $0x34] sm:$0xf]
        %v2004 = vld [vmem:[%s1989 + $0x38] sm:$0xf]
        %v2005 = vld [vmem:[%s1989 + $0x3c] sm:$0xf]
        %s2006 = scalar_lea.vmem %s9, 4
        %v2007 = vld [vmem:[%s2006] sm:$0x1]
        %v2008 = vld [vmem:[%s2006 + $0x1] sm:$0x1]
        %v2009 = vld [vmem:[%s2006 + $0x2] sm:$0x1]
        %v2010 = vld [vmem:[%s2006 + $0x3] sm:$0x1]
        %v2015 = vperm.slane %v2007, 0
        %v2016 = vperm.slane %v2008, 0
        %v2017 = vperm.slane %v2009, 0
        %v2018 = vperm.slane %v2010, 0
        %v2027 = vunpack.c.l.b16 %v1990
        %v2028 = vunpack.c.l.b16 %v1991
        %v2029 = vunpack.c.l.b16 %v1992
        %v2030 = vunpack.c.l.b16 %v1993
        %v2031 = vpack.c.b16 %v2028, %v2027
        %v2032 = vpack.c.b16 %v2030, %v2029
        %2035 = vmatpush.bf16.msra.mxu0 0
        %2036 = vmatpush.bf16.msra.mxu0 0
        %2037 = vmatpush.bf16.msra.mxu0 0
        %2038 = vmatpush.bf16.msra.mxu0 0
        %2039 = vmatpush.bf16.msra.mxu0 0
        %2040 = vmatpush.bf16.msra.mxu0 0
        %2041 = vmatpush.bf16.msra.mxu0 %v2032
        %2042 = vmatpush.bf16.msra.mxu0 %v2031
        %2043 = vmatmul.bf16.gmra.mxu0 %v1757
        %v2044 = vpop.f32.mrf.mxu0
        %v2045 = vadd.f32 %v2015, %v2044
        %v2046 = vpop.f32.mrf.mxu0
        %2047 = vdwg.mxu0
        %v2052 = vunpack.c.l.b16 %v1994
        %v2053 = vunpack.c.l.b16 %v1995
        %v2054 = vunpack.c.l.b16 %v1996
        %v2055 = vunpack.c.l.b16 %v1997
        %v2056 = vpack.c.b16 %v2053, %v2052
        %v2057 = vpack.c.b16 %v2055, %v2054
        %2060 = vmatpush.bf16.msra.mxu0 0
        %2061 = vmatpush.bf16.msra.mxu0 0
        %2062 = vmatpush.bf16.msra.mxu0 0
        %2063 = vmatpush.bf16.msra.mxu0 0
        %2064 = vmatpush.bf16.msra.mxu0 0
        %2065 = vmatpush.bf16.msra.mxu0 0
        %2066 = vmatpush.bf16.msra.mxu0 %v2057
        %2067 = vmatpush.bf16.msra.mxu0 %v2056
        %2068 = vmatmul.bf16.gmra.mxu0 %v1757
        %v2069 = vpop.f32.mrf.mxu0
        %v2070 = vadd.f32 %v2016, %v2069
        %v2071 = vpop.f32.mrf.mxu0
        %2072 = vdwg.mxu0
        %v2077 = vunpack.c.l.b16 %v1998
        %v2078 = vunpack.c.l.b16 %v1999
        %v2079 = vunpack.c.l.b16 %v2000
        %v2080 = vunpack.c.l.b16 %v2001
        %v2081 = vpack.c.b16 %v2078, %v2077
        %v2082 = vpack.c.b16 %v2080, %v2079
        %2085 = vmatpush.bf16.msra.mxu0 0
        %2086 = vmatpush.bf16.msra.mxu0 0
        %2087 = vmatpush.bf16.msra.mxu0 0
        %2088 = vmatpush.bf16.msra.mxu0 0
        %2089 = vmatpush.bf16.msra.mxu0 0
        %2090 = vmatpush.bf16.msra.mxu0 0
        %2091 = vmatpush.bf16.msra.mxu0 %v2082
        %2092 = vmatpush.bf16.msra.mxu0 %v2081
        %2093 = vmatmul.bf16.gmra.mxu0 %v1757
        %v2094 = vpop.f32.mrf.mxu0
        %v2095 = vadd.f32 %v2017, %v2094
        %v2096 = vpop.f32.mrf.mxu0
        %2097 = vdwg.mxu0
        %v2102 = vunpack.c.l.b16 %v2002
        %v2103 = vunpack.c.l.b16 %v2003
        %v2104 = vunpack.c.l.b16 %v2004
        %v2105 = vunpack.c.l.b16 %v2005
        %v2106 = vpack.c.b16 %v2103, %v2102
        %v2107 = vpack.c.b16 %v2105, %v2104
        %2110 = vmatpush.bf16.msra.mxu0 0
        %2111 = vmatpush.bf16.msra.mxu0 0
        %2112 = vmatpush.bf16.msra.mxu0 0
        %2113 = vmatpush.bf16.msra.mxu0 0
        %2114 = vmatpush.bf16.msra.mxu0 0
        %2115 = vmatpush.bf16.msra.mxu0 0
        %2116 = vmatpush.bf16.msra.mxu0 %v2107
        %2117 = vmatpush.bf16.msra.mxu0 %v2106
        %2118 = vmatmul.bf16.gmra.mxu0 %v1757
        %v2119 = vpop.f32.mrf.mxu0
        %v2120 = vadd.f32 %v2018, %v2119
        %v2121 = vpop.f32.mrf.mxu0
        %2122 = vdwg.mxu0
        %v2123 = vpack.c.bf16 %v2045, %v2045
        %v2124 = vpack.c.bf16 %v2070, %v2070
        %v2125 = vpack.c.bf16 %v2095, %v2095
        %v2126 = vpack.c.bf16 %v2120, %v2120
        %v2127 = vld [vmem:[%s745] sm:$0x1]
        %v2128 = vsub.f32 1.0, %v2127
        %v2129 = vmul.f32 %v2128, -10000.0
        %v2131 = vsel %vm1203, %v1847, 0
        %v2134 = vsel %vm1203, %v1985, 0
        %2136 = vmatpush.bf16.xpose.msra.mxu0 0
        %2137 = vmatpush.bf16.xpose.msra.mxu0 0
        %2138 = vmatpush.bf16.xpose.msra.mxu0 0
        %2139 = vmatpush.bf16.xpose.msra.mxu0 0
        %2140 = vmatpush.bf16.xpose.msra.mxu0 0
        %2141 = vmatpush.bf16.xpose.msra.mxu0 0
        %2142 = vmatpush.bf16.xpose.msra.mxu0 0
        %2143 = vmatpush.bf16.xpose.msra.mxu0 %v2134
        %2144 = vmatmul.bf16.gmra.mxu0 %v2131
        %v2145 = vpop.f32.mrf.mxu0
        %v2146 = vadd.f32 0.0, %v2145
        %v2147 = vpop.f32.mrf.mxu0
        %2148 = vdwg.mxu0
        %v2150 = vsel %vm1203, %v1848, 0
        %v2153 = vsel %vm1203, %v1986, 0
        %2155 = vmatpush.bf16.xpose.msra.mxu0 0
        %2156 = vmatpush.bf16.xpose.msra.mxu0 0
        %2157 = vmatpush.bf16.xpose.msra.mxu0 0
        %2158 = vmatpush.bf16.xpose.msra.mxu0 0
        %2159 = vmatpush.bf16.xpose.msra.mxu0 0
        %2160 = vmatpush.bf16.xpose.msra.mxu0 0
        %2161 = vmatpush.bf16.xpose.msra.mxu0 0
        %2162 = vmatpush.bf16.xpose.msra.mxu0 %v2153
        %2163 = vmatmul.bf16.gmra.mxu0 %v2150
        %v2164 = vpop.f32.mrf.mxu0
        %v2165 = vadd.f32 0.0, %v2164
        %v2166 = vpop.f32.mrf.mxu0
        %2167 = vdwg.mxu0
        %v2169 = vsel %vm1203, %v1849, 0
        %v2172 = vsel %vm1203, %v1987, 0
        %2174 = vmatpush.bf16.xpose.msra.mxu0 0
        %2175 = vmatpush.bf16.xpose.msra.mxu0 0
        %2176 = vmatpush.bf16.xpose.msra.mxu0 0
        %2177 = vmatpush.bf16.xpose.msra.mxu0 0
        %2178 = vmatpush.bf16.xpose.msra.mxu0 0
        %2179 = vmatpush.bf16.xpose.msra.mxu0 0
        %2180 = vmatpush.bf16.xpose.msra.mxu0 0
        %2181 = vmatpush.bf16.xpose.msra.mxu0 %v2172
        %2182 = vmatmul.bf16.gmra.mxu0 %v2169
        %v2183 = vpop.f32.mrf.mxu0
        %v2184 = vadd.f32 0.0, %v2183
        %v2185 = vpop.f32.mrf.mxu0
        %2186 = vdwg.mxu0
        %v2188 = vsel %vm1203, %v1850, 0
        %v2191 = vsel %vm1203, %v1988, 0
        %2193 = vmatpush.bf16.xpose.msra.mxu0 0
        %2194 = vmatpush.bf16.xpose.msra.mxu0 0
        %2195 = vmatpush.bf16.xpose.msra.mxu0 0
        %2196 = vmatpush.bf16.xpose.msra.mxu0 0
        %2197 = vmatpush.bf16.xpose.msra.mxu0 0
        %2198 = vmatpush.bf16.xpose.msra.mxu0 0
        %2199 = vmatpush.bf16.xpose.msra.mxu0 0
        %2200 = vmatpush.bf16.xpose.msra.mxu0 %v2191
        %2201 = vmatmul.bf16.gmra.mxu0 %v2188
        %v2202 = vpop.f32.mrf.mxu0
        %v2203 = vadd.f32 0.0, %v2202
        %v2204 = vpop.f32.mrf.mxu0
        %2205 = vdwg.mxu0
        %v2206 = vmul.f32 %v2146, 0.35355338
        %v2207 = vmul.f32 %v2165, 0.35355338
        %v2208 = vmul.f32 %v2184, 0.35355338
        %v2209 = vmul.f32 %v2203, 0.35355338
        %v2211 = vperm.slane %v2129, 0
        %v2213 = vadd.f32 %v2206, %v2211
        %v2214 = vadd.f32 %v2207, %v2211
        %v2215 = vadd.f32 %v2208, %v2211
        %v2216 = vadd.f32 %v2209, %v2211
        %v2217 = vsel %vm1203, %v2213, -inf
        %2218 = vmax.xlane.f32.xlu0 %v2217
        %v2219 = vpop.xlane.xlu0 %2218
        %v2220 = vsel %vm1203, %v2214, -inf
        %2221 = vmax.xlane.f32.xlu0 %v2220
        %v2222 = vpop.xlane.xlu0 %2221
        %v2223 = vsel %vm1203, %v2215, -inf
        %2224 = vmax.xlane.f32.xlu0 %v2223
        %v2225 = vpop.xlane.xlu0 %2224
        %v2226 = vsel %vm1203, %v2216, -inf
        %2227 = vmax.xlane.f32.xlu0 %v2226
        %v2228 = vpop.xlane.xlu0 %2227
        %v2229 = vsub.f32 %v2213, %v2219
        %v2230 = vsub.f32 %v2214, %v2222
        %v2231 = vsub.f32 %v2215, %v2225
        %v2232 = vsub.f32 %v2216, %v2228
        %v2233 = vmul.f32 %v2229, 1.442695
        %v2234 = vpow.pop %v2233
        %v2235 = vmul.f32 %v2230, 1.442695
        %v2236 = vpow.pop %v2235
        %v2237 = vmul.f32 %v2231, 1.442695
        %v2238 = vpow.pop %v2237
        %v2239 = vmul.f32 %v2232, 1.442695
        %v2240 = vpow.pop %v2239
        %v2241 = vsel %vm1203, %v2234, 0.0
        %2242 = vadd.xlane.f32.xlu0 %v2241
        %v2243 = vpop.xlane.xlu0 %2242
        %v2244 = vsel %vm1203, %v2236, 0.0
        %2245 = vadd.xlane.f32.xlu0 %v2244
        %v2246 = vpop.xlane.xlu0 %2245
        %v2247 = vsel %vm1203, %v2238, 0.0
        %2248 = vadd.xlane.f32.xlu0 %v2247
        %v2249 = vpop.xlane.xlu0 %2248
        %v2250 = vsel %vm1203, %v2240, 0.0
        %2251 = vadd.xlane.f32.xlu0 %v2250
        %v2252 = vpop.xlane.xlu0 %2251
        %v2253 = vrcp.pop %v2243
        %v2254 = vrcp.pop %v2246
        %v2255 = vrcp.pop %v2249
        %v2256 = vrcp.pop %v2252
        %v2257 = vmul.f32 %v2234, %v2253
        %v2258 = vmul.f32 %v2236, %v2254
        %v2259 = vmul.f32 %v2238, %v2255
        %v2260 = vmul.f32 %v2240, %v2256
        %v2261 = vpack.c.bf16 %v2257, %v2257
        %v2262 = vpack.c.bf16 %v2258, %v2258
        %v2263 = vpack.c.bf16 %v2259, %v2259
        %v2264 = vpack.c.bf16 %v2260, %v2260
        %v2266 = vsel %vm1203, %v2261, 0
        %v2269 = vsel %vm1342, %v2123, 0
        %2271 = vmatpush.bf16.msra.mxu0 0
        %2272 = vmatpush.bf16.msra.mxu0 0
        %2273 = vmatpush.bf16.msra.mxu0 0
        %2274 = vmatpush.bf16.msra.mxu0 0
        %2275 = vmatpush.bf16.msra.mxu0 0
        %2276 = vmatpush.bf16.msra.mxu0 0
        %2277 = vmatpush.bf16.msra.mxu0 0
        %2278 = vmatpush.bf16.msra.mxu0 %v2269
        %2279 = vmatmul.bf16.gmra.mxu0 %v2266
        %v2280 = vpop.f32.mrf.mxu0
        %v2281 = vadd.f32 0.0, %v2280
        %v2282 = vpop.f32.mrf.mxu0
        %2283 = vdwg.mxu0
        %v2285 = vsel %vm1203, %v2262, 0
        %v2288 = vsel %vm1342, %v2124, 0
        %2290 = vmatpush.bf16.msra.mxu0 0
        %2291 = vmatpush.bf16.msra.mxu0 0
        %2292 = vmatpush.bf16.msra.mxu0 0
        %2293 = vmatpush.bf16.msra.mxu0 0
        %2294 = vmatpush.bf16.msra.mxu0 0
        %2295 = vmatpush.bf16.msra.mxu0 0
        %2296 = vmatpush.bf16.msra.mxu0 0
        %2297 = vmatpush.bf16.msra.mxu0 %v2288
        %2298 = vmatmul.bf16.gmra.mxu0 %v2285
        %v2299 = vpop.f32.mrf.mxu0
        %v2300 = vadd.f32 0.0, %v2299
        %v2301 = vpop.f32.mrf.mxu0
        %2302 = vdwg.mxu0
        %v2304 = vsel %vm1203, %v2263, 0
        %v2307 = vsel %vm1342, %v2125, 0
        %2309 = vmatpush.bf16.msra.mxu0 0
        %2310 = vmatpush.bf16.msra.mxu0 0
        %2311 = vmatpush.bf16.msra.mxu0 0
        %2312 = vmatpush.bf16.msra.mxu0 0
        %2313 = vmatpush.bf16.msra.mxu0 0
        %2314 = vmatpush.bf16.msra.mxu0 0
        %2315 = vmatpush.bf16.msra.mxu0 0
        %2316 = vmatpush.bf16.msra.mxu0 %v2307
        %2317 = vmatmul.bf16.gmra.mxu0 %v2304
        %v2318 = vpop.f32.mrf.mxu0
        %v2319 = vadd.f32 0.0, %v2318
        %v2320 = vpop.f32.mrf.mxu0
        %2321 = vdwg.mxu0
        %v2323 = vsel %vm1203, %v2264, 0
        %v2326 = vsel %vm1342, %v2126, 0
        %2328 = vmatpush.bf16.msra.mxu0 0
        %2329 = vmatpush.bf16.msra.mxu0 0
        %2330 = vmatpush.bf16.msra.mxu0 0
        %2331 = vmatpush.bf16.msra.mxu0 0
        %2332 = vmatpush.bf16.msra.mxu0 0
        %2333 = vmatpush.bf16.msra.mxu0 0
        %2334 = vmatpush.bf16.msra.mxu0 0
        %2335 = vmatpush.bf16.msra.mxu0 %v2326
        %2336 = vmatmul.bf16.gmra.mxu0 %v2323
        %v2337 = vpop.f32.mrf.mxu0
        %v2338 = vadd.f32 0.0, %v2337
        %v2339 = vpop.f32.mrf.mxu0
        %2340 = vdwg.mxu0
        %v2341 = vpack.c.bf16 %v2281, %v2281
        %v2342 = vpack.c.bf16 %v2300, %v2300
        %v2343 = vpack.c.bf16 %v2319, %v2319
        %v2344 = vpack.c.bf16 %v2338, %v2338
        %s2345 = scalar_lea.vmem %s10, 16
        %v2346 = vld [vmem:[%s2345] sm:$0xf]
        %v2347 = vld [vmem:[%s2345 + $0x4] sm:$0xf]
        %v2348 = vld [vmem:[%s2345 + $0x8] sm:$0xf]
        %v2349 = vld [vmem:[%s2345 + $0xc] sm:$0xf]
        %v2351 = vsel %vm1203, %v2341, 0
        %v2354 = vsel %vm1342, %v2346, 0
        %2356 = vmatpush.bf16.msra.mxu0 0
        %2357 = vmatpush.bf16.msra.mxu0 0
        %2358 = vmatpush.bf16.msra.mxu0 0
        %2359 = vmatpush.bf16.msra.mxu0 0
        %2360 = vmatpush.bf16.msra.mxu0 0
        %2361 = vmatpush.bf16.msra.mxu0 0
        %2362 = vmatpush.bf16.msra.mxu0 0
        %2363 = vmatpush.bf16.msra.mxu0 %v2354
        %2364 = vmatmul.bf16.gmra.mxu0 %v2351
        %v2365 = vpop.f32.mrf.mxu0
        %v2366 = vadd.f32 0.0, %v2365
        %v2367 = vpop.f32.mrf.mxu0
        %2368 = vdwg.mxu0
        %v2370 = vsel %vm1203, %v2342, 0
        %v2373 = vsel %vm1342, %v2347, 0
        %2375 = vmatpush.bf16.msra.mxu0 0
        %2376 = vmatpush.bf16.msra.mxu0 0
        %2377 = vmatpush.bf16.msra.mxu0 0
        %2378 = vmatpush.bf16.msra.mxu0 0
        %2379 = vmatpush.bf16.msra.mxu0 0
        %2380 = vmatpush.bf16.msra.mxu0 0
        %2381 = vmatpush.bf16.msra.mxu0 0
        %2382 = vmatpush.bf16.msra.mxu0 %v2373
        %2383 = vmatmul.bf16.gmra.mxu0 %v2370
        %v2384 = vpop.f32.mrf.mxu0
        %v2385 = vadd.f32 0.0, %v2384
        %v2386 = vpop.f32.mrf.mxu0
        %2387 = vdwg.mxu0
        %v2389 = vsel %vm1203, %v2343, 0
        %v2392 = vsel %vm1342, %v2348, 0
        %2394 = vmatpush.bf16.msra.mxu0 0
        %2395 = vmatpush.bf16.msra.mxu0 0
        %2396 = vmatpush.bf16.msra.mxu0 0
        %2397 = vmatpush.bf16.msra.mxu0 0
        %2398 = vmatpush.bf16.msra.mxu0 0
        %2399 = vmatpush.bf16.msra.mxu0 0
        %2400 = vmatpush.bf16.msra.mxu0 0
        %2401 = vmatpush.bf16.msra.mxu0 %v2392
        %2402 = vmatmul.bf16.gmra.mxu0 %v2389
        %v2403 = vpop.f32.mrf.mxu0
        %v2404 = vadd.f32 0.0, %v2403
        %v2405 = vpop.f32.mrf.mxu0
        %2406 = vdwg.mxu0
        %v2408 = vsel %vm1203, %v2344, 0
        %v2411 = vsel %vm1342, %v2349, 0
        %2413 = vmatpush.bf16.msra.mxu0 0
        %2414 = vmatpush.bf16.msra.mxu0 0
        %2415 = vmatpush.bf16.msra.mxu0 0
        %2416 = vmatpush.bf16.msra.mxu0 0
        %2417 = vmatpush.bf16.msra.mxu0 0
        %2418 = vmatpush.bf16.msra.mxu0 0
        %2419 = vmatpush.bf16.msra.mxu0 0
        %2420 = vmatpush.bf16.msra.mxu0 %v2411
        %2421 = vmatmul.bf16.gmra.mxu0 %v2408
        %v2422 = vpop.f32.mrf.mxu0
        %v2423 = vadd.f32 0.0, %v2422
        %v2424 = vpop.f32.mrf.mxu0
        %2425 = vdwg.mxu0
        %v2426 = vadd.f32 %v2366, %v2385
        %v2427 = vadd.f32 %v2426, %v2404
        %v2428 = vadd.f32 %v2427, %v2423
        %s2429 = scalar_lea.vmem %s11, 1
        %v2430 = vld [vmem:[%s2429] sm:$0x1]
        %v2432 = vperm.slane %v2430, 0
        %v2434 = vadd.f32 %v2428, %v2432
        %v2435 = vadd.f32 %v2434, %v1708
        %s2436 = scalar_lea.vmem %s12, 1
        %v2437 = vld [vmem:[%s2436] sm:$0x1]
        %s2438 = scalar_lea.vmem %s13, 1
        %v2439 = vld [vmem:[%s2438] sm:$0x1]
        %v2440 = vsel %vm750, %v2435, 0.0
        %2441 = vadd.xlane.f32.xlu0 %v2440
        %v2442 = vpop.xlane.xlu0 %2441
        %v2443 = vmul.f32 %v2442, %v760
        %v2444 = vsub.f32 %v2435, %v2443
        %v2445 = vmul.f32 %v2444, %v2444
        %v2446 = vsel %vm750, %v2445, 0.0
        %2447 = vadd.xlane.f32.xlu0 %v2446
        %v2448 = vpop.xlane.xlu0 %2447
        %v2449 = vmul.f32 %v2448, %v760
        %v2450 = vadd.f32 %v2449, 1e-12
        %v2451 = vrsqrt.pop %v2450
        %v2452 = vmul.f32 %v2451, %v2450
        %v2453 = vmul.f32 %v2452, %v2451
        %v2454 = vmul.f32 0.5, %v2453
        %v2455 = vsub.f32 1.5, %v2454
        %v2456 = vmul.f32 %v2451, %v2455
        %vm2457 = vweird.f32 %v2450
        %vm2458 = vweird.f32 %v2451
        %vm2459 = vmor %vm2457, %vm2458
        %v2460 = vsel %vm2459, %v2451, %v2456
        %v2461 = vmul.f32 %v2444, %v2460
        %v2463 = vperm.slane %v2437, 0
        %v2465 = vmul.f32 %v2461, %v2463
        %v2467 = vperm.slane %v2439, 0
        %v2469 = vadd.f32 %v2465, %v2467
        %v2470 = vpack.c.bf16 %v2469, %v2469
        %s2471 = scalar_lea.vmem %s14, 16
        %v2472 = vld [vmem:[%s2471] sm:$0xf]
        %v2473 = vld [vmem:[%s2471 + $0x4] sm:$0xf]
        %v2474 = vld [vmem:[%s2471 + $0x8] sm:$0xf]
        %v2475 = vld [vmem:[%s2471 + $0xc] sm:$0xf]
        %s2476 = scalar_lea.vmem %s15, 1
        %v2477 = vld [vmem:[%s2476] sm:$0x1]
        %v2479 = vperm.slane %v2477, 0
        %v2485 = vunpack.c.l.b16 %v2472
        %v2486 = vunpack.c.l.b16 %v2473
        %v2487 = vunpack.c.l.b16 %v2474
        %v2488 = vunpack.c.l.b16 %v2475
        %v2489 = vpack.c.b16 %v2486, %v2485
        %v2490 = vpack.c.b16 %v2488, %v2487
        %v2494 = vsel %vm750, %v2470, 0
        %2496 = vmatpush.bf16.msra.mxu0 0
        %2497 = vmatpush.bf16.msra.mxu0 0
        %2498 = vmatpush.bf16.msra.mxu0 0
        %2499 = vmatpush.bf16.msra.mxu0 0
        %2500 = vmatpush.bf16.msra.mxu0 0
        %2501 = vmatpush.bf16.msra.mxu0 0
        %2502 = vmatpush.bf16.msra.mxu0 %v2490
        %2503 = vmatpush.bf16.msra.mxu0 %v2489
        %2504 = vmatmul.bf16.gmra.mxu0 %v2494
        %v2505 = vpop.f32.mrf.mxu0
        %v2506 = vadd.f32 %v2479, %v2505
        %v2507 = vpop.f32.mrf.mxu0
        %2508 = vdwg.mxu0
        %v2509 = vmul.f32 %v2506, 0.5
        %v2510 = vmul.f32 %v2506, 0.70710677
        %v2511 = vmul.f32 %v2510, %v2510
        %v2512 = vmin.f32 16.0, %v2511
        %v2513 = vmul.f32 %v2512, 2.1237322e-06
        %v2514 = vadd.f32 %v2513, 0.00028619796
        %v2515 = vmul.f32 %v2512, %v2514
        %v2516 = vadd.f32 %v2515, 0.0036580483
        %v2517 = vmul.f32 %v2512, %v2516
        %v2518 = vadd.f32 %v2517, 0.05243302
        %v2519 = vmul.f32 %v2512, %v2518
        %v2520 = vadd.f32 %v2519, 0.18741608
        %v2521 = vmul.f32 %v2512, %v2520
        %v2522 = vadd.f32 %v2521, 1.1283791
        %v2523 = vmul.f32 %v2510, %v2522
        %v2524 = vmul.f32 %v2512, 3.8918573e-05
        %v2525 = vadd.f32 %v2524, 0.001143296
        %v2526 = vmul.f32 %v2512, %v2525
        %v2527 = vadd.f32 %v2526, 0.014752088
        %v2528 = vmul.f32 %v2512, %v2527
        %v2529 = vadd.f32 %v2528, 0.112945676
        %v2530 = vmul.f32 %v2512, %v2529
        %v2531 = vadd.f32 %v2530, 0.4994258
        %v2532 = vmul.f32 %v2512, %v2531
        %v2533 = vadd.f32 %v2532, 1.0
        %v2534 = vrcp.pop %v2533
        %v2535 = vmul.f32 %v2533, %v2534
        %v2536 = vsub.f32 1.0, %v2535
        %v2537 = vmul.f32 %v2534, %v2536
        %v2538 = vadd.f32 %v2534, %v2537
        %vm2539 = vweird.f32 %v2533
        %vm2540 = vweird.f32 %v2534
        %vm2541 = vmor %vm2539, %vm2540
        %v2542 = vsel %vm2541, %v2534, %v2538
        %v2543 = vand.u32 2147483647, %v2533
        %vm2544 = vcmp.eq.f32.partialorder %v2543, 8.507059e+37
        %v2545 = vand.u32 %v2533, 2147483648
        %v2546 = vor.u32 1.1754944e-38, %v2545
        %v2547 = vsel %vm2544, %v2546, %v2542
        %v2548 = vmul.f32 %v2523, %v2547
        %v2549 = vmin.f32 %v2548, 1.0
        %v2550 = vmax.f32 %v2549, -1.0
        %v2551 = vadd.f32 %v2550, 1.0
        %v2552 = vmul.f32 %v2509, %v2551
        %v2553 = vpack.c.bf16 %v2552, %v2552
        %s2554 = scalar_lea.vmem %s16, 32
        %v2555 = vld [vmem:[%s2554] sm:$0xf]
        %v2556 = vld [vmem:[%s2554 + $0x4] sm:$0xf]
        %v2557 = vld [vmem:[%s2554 + $0x8] sm:$0xf]
        %v2558 = vld [vmem:[%s2554 + $0xc] sm:$0xf]
        %v2559 = vld [vmem:[%s2554 + $0x10] sm:$0xf]
        %v2560 = vld [vmem:[%s2554 + $0x14] sm:$0xf]
        %v2561 = vld [vmem:[%s2554 + $0x18] sm:$0xf]
        %v2562 = vld [vmem:[%s2554 + $0x1c] sm:$0xf]
        %s2563 = scalar_lea.vmem %s17, 1
        %v2564 = vld [vmem:[%s2563] sm:$0x1]
        %v2566 = vperm.slane %v2564, 0
        %v2576 = vunpack.c.l.b16 %v2555
        %v2577 = vunpack.c.l.b16 %v2556
        %v2578 = vunpack.c.l.b16 %v2557
        %v2579 = vunpack.c.l.b16 %v2558
        %v2580 = vunpack.c.l.b16 %v2559
        %v2581 = vunpack.c.l.b16 %v2560
        %v2582 = vunpack.c.l.b16 %v2561
        %v2583 = vunpack.c.l.b16 %v2562
        %v2584 = vpack.c.b16 %v2577, %v2576
        %v2585 = vpack.c.b16 %v2579, %v2578
        %v2586 = vpack.c.b16 %v2581, %v2580
        %v2587 = vpack.c.b16 %v2583, %v2582
        %v2593 = vsel %vm1659, %v2553, 0
        %2595 = vmatpush.bf16.msra.mxu0 0
        %2596 = vmatpush.bf16.msra.mxu0 0
        %2597 = vmatpush.bf16.msra.mxu0 0
        %2598 = vmatpush.bf16.msra.mxu0 0
        %2599 = vmatpush.bf16.msra.mxu0 %v2587
        %2600 = vmatpush.bf16.msra.mxu0 %v2586
        %2601 = vmatpush.bf16.msra.mxu0 %v2585
        %2602 = vmatpush.bf16.msra.mxu0 %v2584
        %2603 = vmatmul.bf16.gmra.mxu0 %v2593
        %v2604 = vpop.f32.mrf.mxu0
        %v2605 = vadd.f32 %v2566, %v2604
        %v2606 = vpop.f32.mrf.mxu0
        %2607 = vdwg.mxu0
        %v2608 = vadd.f32 %v2605, %v2469
        %s2609 = scalar_lea.vmem %s18, 1
        %v2610 = vld [vmem:[%s2609] sm:$0x1]
        %s2611 = scalar_lea.vmem %s19, 1
        %v2612 = vld [vmem:[%s2611] sm:$0x1]
        %v2613 = vsel %vm750, %v2608, 0.0
        %2614 = vadd.xlane.f32.xlu0 %v2613
        %v2615 = vpop.xlane.xlu0 %2614
        %v2616 = vmul.f32 %v2615, %v760
        %v2617 = vsub.f32 %v2608, %v2616
        %v2618 = vmul.f32 %v2617, %v2617
        %v2619 = vsel %vm750, %v2618, 0.0
        %2620 = vadd.xlane.f32.xlu0 %v2619
        %v2621 = vpop.xlane.xlu0 %2620
        %v2622 = vmul.f32 %v2621, %v760
        %v2623 = vadd.f32 %v2622, 1e-12
        %v2624 = vrsqrt.pop %v2623
        %v2625 = vmul.f32 %v2624, %v2623
        %v2626 = vmul.f32 %v2625, %v2624
        %v2627 = vmul.f32 0.5, %v2626
        %v2628 = vsub.f32 1.5, %v2627
        %v2629 = vmul.f32 %v2624, %v2628
        %vm2630 = vweird.f32 %v2623
        %vm2631 = vweird.f32 %v2624
        %vm2632 = vmor %vm2630, %vm2631
        %v2633 = vsel %vm2632, %v2624, %v2629
        %v2634 = vmul.f32 %v2617, %v2633
        %v2636 = vperm.slane %v2610, 0
        %v2638 = vmul.f32 %v2634, %v2636
        %v2640 = vperm.slane %v2612, 0
        %v2642 = vadd.f32 %v2638, %v2640
        %v2643 = vld [vmem:[%s20] sm:$0xff]
        %v2644 = vld [vmem:[%s20 + $0x8] sm:$0xff]
        %v2645 = vld [vmem:[%s20 + $0x10] sm:$0xff]
        %v2646 = vld [vmem:[%s20 + $0x18] sm:$0xff]
        %v2647 = vld [vmem:[%s21] sm:$0x1]
        %v2649 = vsel %vm750, %v2642, 0
        %2651 = vmatpush.msra.mxu0 0.0
        %2652 = vmatpush.msra.mxu0 0.0
        %2653 = vmatpush.msra.mxu0 0.0
        %2654 = vmatpush.msra.mxu0 0.0
        %2655 = vmatpush.msra.mxu0 0.0
        %2656 = vmatpush.msra.mxu0 0.0
        %2657 = vmatpush.msra.mxu0 0.0
        %2658 = vmatpush.msra.mxu0 0.0
        %2659 = vmatpush.msra.mxu0 0.0
        %2660 = vmatpush.msra.mxu0 0.0
        %2661 = vmatpush.msra.mxu0 0.0
        %2662 = vmatpush.msra.mxu0 0.0
        %2663 = vmatpush.msra.mxu0 %v2646
        %2664 = vmatpush.msra.mxu0 %v2645
        %2665 = vmatpush.msra.mxu0 %v2644
        %2666 = vmatpush.msra.mxu0 %v2643
        %2667 = vmatmul.f32.gmra.mxu0 %v2649
        %v2668 = vpop.f32.mrf.mxu0
        %v2669 = vadd.f32 %v2647, %v2668
        %2670 = vdwg.mxu0
        %v2671 = vtanh.pop %v2669
        %v2672 = vld [vmem:[%s22] sm:$0xff]
        %v2673 = vld [vmem:[%s22 + $0x8] sm:$0xff]
        %v2674 = vld [vmem:[%s22 + $0x10] sm:$0xff]
        %v2675 = vld [vmem:[%s22 + $0x18] sm:$0xff]
        %v2676 = vld [vmem:[%s23] sm:$0x1]
        %v2678 = vsel %vm750, %v2671, 0
        %2680 = vmatpush.msra.mxu0 0.0
        %2681 = vmatpush.msra.mxu0 0.0
        %2682 = vmatpush.msra.mxu0 0.0
        %2683 = vmatpush.msra.mxu0 0.0
        %2684 = vmatpush.msra.mxu0 0.0
        %2685 = vmatpush.msra.mxu0 0.0
        %2686 = vmatpush.msra.mxu0 0.0
        %2687 = vmatpush.msra.mxu0 0.0
        %2688 = vmatpush.msra.mxu0 0.0
        %2689 = vmatpush.msra.mxu0 0.0
        %2690 = vmatpush.msra.mxu0 0.0
        %2691 = vmatpush.msra.mxu0 0.0
        %2692 = vmatpush.msra.mxu0 %v2675
        %2693 = vmatpush.msra.mxu0 %v2674
        %2694 = vmatpush.msra.mxu0 %v2673
        %2695 = vmatpush.msra.mxu0 %v2672
        %2696 = vmatmul.f32.gmra.mxu0 %v2678
        %v2697 = vpop.f32.mrf.mxu0
        %v2698 = vadd.f32 %v2676, %v2697
        %2699 = vdwg.mxu0
        %2700 = vst [vmem:[%s738] sm:$0x1] %v2698
        %s2701 = sand.u32 %s560, 1
        %s2702 = scalar_lea.sflag [#allocation3], %s2701
        %s2703 = sand.u32 %s560, 1
        %s2704 = scalar_lea.vmem [#allocation2], %s2703
        // Predicated region
        $region117: #{bert_binary_classifier_forward.1} parent=115 // pred_check
          %p2705 = pneg %p570
        $region118: #{bert_binary_classifier_forward.1} parent=115 // pred_check_branch
          %2707 = sbr.rel (%p2705) target = $region120
        $region119: #{bert_binary_classifier_forward.1} parent=115 // pred_region
          %2709 = vsyncadd %s2702, 0
          %s2710 = scalar_lea.hbm %s24, %s38
          %s2712 = sshll.u32 %s2704, 4
          %s2713 = int_to_ptr.vmem [resolvable:$true] %s2712
          %s2714 = sshll.u32 %s2710, 4
          %s2715 = int_to_ptr.hbm [resolvable:$true] %s2714
          %2717 = dma.vmem_to_hbm [thread:$0]  %s2713, 16, %s2715, %s2702
        $region120: #{bert_binary_classifier_forward.1} parent=115 // pred_fallthru
          _
      $region116: #{bert_binary_classifier_forward.1} parent=5 // pred_fallthru
        _
      %p2718 = scmp.le.s32.totalorder 2, %s33
      // Predicated region
      $region121: #{bert_binary_classifier_forward.1} parent=5 // pred_check
        %p2719 = pneg %p2718
      $region122: #{bert_binary_classifier_forward.1} parent=5 // pred_check_branch
        %2721 = sbr.rel (%p2719) target = $region124
      $region123: #{bert_binary_classifier_forward.1} parent=5 // pred_region
        %s2722 = ssub.s32 %s33, 2
        // Predicated region
        $region125: #{bert_binary_classifier_forward.1} parent=123 // pred_check
          %p2723 = pneg %p576
        $region126: #{bert_binary_classifier_forward.1} parent=123 // pred_check_branch
          %2725 = sbr.rel (%p2723) target = $region128
        $region127: #{bert_binary_classifier_forward.1} parent=123 // pred_region
          %s2726 = sand.u32 %s561, 1
          %s2727 = scalar_lea.sflag [#allocation3], %s2726
          %s2728 = sand.u32 %s561, 1
          %s2729 = scalar_lea.vmem [#allocation2], %s2728
          %2731 = dma.done %s2727, 16
        $region128: #{bert_binary_classifier_forward.1} parent=123 // pred_fallthru
          _
      $region124: #{bert_binary_classifier_forward.1} parent=5 // pred_fallthru
        _
    $region6: #{bert_binary_classifier_forward.1} parent=1 // loop_footer
      %s37 = sadd.s32 1, %s33
    $region7: #{bert_binary_classifier_forward.1} parent=1 // loop_footer_branch
      %32 = sbr.rel target = $region3
    $region8: #{bert_binary_classifier_forward.1} parent=1 // loop_exit
      _
    %2732 = vsyncpa [#allocation3], 1
    %s2733 = scalar_lea.sflag [#allocation3], 1
    %2734 = vsyncpa %s2733, 1

</llo_original>
